<compile_context>
chip_gen: v7x
topology: tpu7x:2x2x1
jax: 0.10.0
libtpu: 0.0.40
codegen_flags: <defaults>
</compile_context>

<pallas_src>
import numpy as np
import jax
import jax.numpy as jnp
from jax.experimental import pallas as pl
from jax.experimental.pallas import tpu as pltpu


def _hash_bits_f32(x_u32):
    """lowbias32-style uint32 mix -> low 23 bits as float32 in [0, 2^23)."""
    x = x_u32
    x = x ^ (x >> 16)
    x = x * jnp.uint32(0x7FEB352D)
    x = x ^ (x >> 15)
    x = x * jnp.uint32(0x846CA68B)
    x = x ^ (x >> 16)
    # keep 23 mantissa bits; go through int32 for a safe int->f32 conversion
    return (x & jnp.uint32(0x7FFFFF)).astype(jnp.int32).astype(jnp.float32)


def make_sine_gen_kernel(samp_rate, sine_amp, noise_std, voiced_threshold):
    two_pi = float(2.0 * np.pi)
    inv_sr = float(1.0 / samp_rate)
    inv_2p23 = float(1.0 / (1 << 23))

    def kernel(f0_ref, ph_ref, cri_ref, sri_ref, seed_ref, out_ref):
        # f0_ref, ph_ref : (1, tT, 1)  VMEM  per-frame f0 [Hz] / phase offset [turns]
        # cri_ref/sri_ref: (dim,)      SMEM  cos / sin(2*pi*rand_ini) per harmonic
        # seed_ref       : (1,)        SMEM  int32 base seed
        # out_ref        : (1, dim, tT, upp) VMEM  (lane axis = upp -> dense stores)
        _, dim, tT, upp = out_ref.shape

        f0 = f0_ref[0]                                    # (tT, 1)
        ph = ph_ref[0]                                    # (tT, 1)

        # j = 1..upp along the lane axis.
        j = (jax.lax.broadcasted_iota(jnp.int32, (1, upp), 1) + 1).astype(jnp.float32)

        # Fundamental phase in "turns"; reduce mod 1 before sin for f32 accuracy
        # (sin is 2*pi periodic, so this is mathematically identical to the ref).
        x = f0 * inv_sr * j + ph                          # (tT, upp)
        x = x - jnp.floor(x)
        theta = two_pi * x
        s1 = jnp.sin(theta)
        c1 = jnp.cos(theta)

        # Voiced/unvoiced gate; nearest-neighbour upsample == broadcast over upp.
        uv = (f0 > voiced_threshold).astype(jnp.float32)  # (tT, 1)
        noise_amp = uv * noise_std + (1.0 - uv) * (sine_amp / 3.0)
        sine_amp_uv = uv * sine_amp

        # ----- counter-based in-kernel RNG (no pltpu.prng_*, no HBM noise) -----
        frame = jax.lax.broadcasted_iota(jnp.int32, (tT, upp), 0)
        lane = jax.lax.broadcasted_iota(jnp.int32, (tT, upp), 1)
        gframe = pl.program_id(1) * tT + frame            # global frame index
        total_t = pl.num_programs(1) * tT
        eid = (pl.program_id(0) * total_t + gframe) * upp + lane
        draws = 2 * ((dim + 1) // 2)                      # uniforms/element, all harmonics
        base = (eid.astype(jnp.uint32) * jnp.uint32(draws)
                + seed_ref[0].astype(jnp.uint32))         # (tT, upp) uint32 counters

        sk, ck = s1, c1          # sin/cos((k+1)*theta), starting at k = 0
        z_next = None            # second output of the previous Box-Muller pair
        for k in range(dim):     # static unroll over harmonics (dim is small)
            if k > 0:            # VPU angle-addition recurrence (no extra EUP work)
                sk, ck = sk * c1 + ck * s1, ck * c1 - sk * s1
            # Fold random initial phase: sin(a + r) = sin(a)cos(r) + cos(a)sin(r).
            sine_k = sk * cri_ref[k] + ck * sri_ref[k]

            # Box-Muller: one (u1, u2) pair yields two independent N(0,1) draws.
            if z_next is None:
                c_a = base + jnp.uint32(2 * (k // 2))
                c_b = base + jnp.uint32(2 * (k // 2) + 1)
                u1 = (_hash_bits_f32(c_a) + 1.0) * inv_2p23   # (0, 1]
                u2 = _hash_bits_f32(c_b) * inv_2p23           # [0, 1)
                r = jnp.sqrt(-2.0 * jnp.log(u1))
                ang = two_pi * u2
                z = r * jnp.cos(ang)
                z_next = r * jnp.sin(ang)
            else:
                z, z_next = z_next, None

            out_ref[0, k] = (sine_amp_uv * sine_k + noise_amp * z).astype(out_ref.dtype)

    return kernel


def _pick_tile_T(T, upp, dim, target_bytes=1 << 20):
    """Frames per tile: keep the (dim, tT, upp) f32 output tile around ~1 MiB
    (sized so double-buffered tiles + temps fit v7x's smaller VMEM too)."""
    bytes_per_frame = dim * upp * 4
    cap = max(1, target_bytes // bytes_per_frame)
    if T <= cap:
        return T                            # whole-T block (== full array dim, legal)
    start = max(8, (min(cap, T) // 8) * 8)
    for tT in range(start, 0, -8):          # prefer a multiple of 8 that divides T
        if T % tT == 0:
            return tT
    return start                            # partial last block; Pallas masks stores


def sine_gen_forward(f0, upp, *, samp_rate, harmonic_num=0, sine_amp=0.1,
                     noise_std=0.003, voiced_threshold=0.0, key,
                     rand_ini=None, out_dtype=jnp.float32):
    """Pallas implementation of SineGen.forward(f0, upp) -> (B, T*upp, dim)."""
    B, T = f0.shape
    dim = harmonic_num + 1
    f0 = f0.astype(jnp.float32)
    upp = int(upp)

    # ---- plain-JAX glue: cumulative phase correction across frames -------------
    # matches _f02sine: fmod_in / rad2 / cumsum / frac / pad.  .int() truncates
    # toward zero, which jnp.trunc reproduces for both signs.
    fmod_in = f0[:, :-1] * (float(upp) / float(samp_rate)) + 0.5        # (B, T-1)
    rad2 = fmod_in - jnp.trunc(fmod_in) - 0.5
    rad_acc = jnp.cumsum(rad2, axis=1)
    rad_acc = rad_acc - jnp.trunc(rad_acc)
    phase_off = jnp.pad(rad_acc, ((0, 0), (1, 0)))                      # (B, T)

    # ---- plain-JAX glue: per-harmonic random initial phase + kernel RNG seed ---
    if rand_ini is None:
        key, k_ri = jax.random.split(key)
        rand_ini = jax.random.uniform(k_ri, (dim,), dtype=jnp.float32).at[0].set(0.0)
    rand_ini = jnp.asarray(rand_ini, jnp.float32)
    cri = jnp.cos(2.0 * np.pi * rand_ini)              # tiny SMEM tables
    sri = jnp.sin(2.0 * np.pi * rand_ini)
    seed = jax.random.randint(key, (1,), 0, 2**31 - 1, dtype=jnp.int32)

    f0_3d = f0.reshape(B, T, 1)
    ph_3d = phase_off.reshape(B, T, 1).astype(jnp.float32)

    tT = _pick_tile_T(T, upp, dim)
    grid = (B, pl.cdiv(T, tT))

    kernel = make_sine_gen_kernel(float(samp_rate), float(sine_amp),
                                  float(noise_std), float(voiced_threshold))

    out = pl.pallas_call(
        kernel,
        out_shape=jax.ShapeDtypeStruct((B, dim, T, upp), out_dtype),
        grid_spec=pltpu.PrefetchScalarGridSpec(
            num_scalar_prefetch=0,
            grid=grid,
            in_specs=[
                pl.BlockSpec((1, tT, 1), lambda b, t: (b, t, 0)),          # f0 (Hz)
                pl.BlockSpec((1, tT, 1), lambda b, t: (b, t, 0)),          # phase (turns)
                pl.BlockSpec(memory_space=pltpu.MemorySpace.SMEM),         # cos(2*pi*ri)
                pl.BlockSpec(memory_space=pltpu.MemorySpace.SMEM),         # sin(2*pi*ri)
                pl.BlockSpec(memory_space=pltpu.MemorySpace.SMEM),         # seed
            ],
            out_specs=pl.BlockSpec((1, dim, tT, upp), lambda b, t: (b, 0, t, 0)),
        ),
        compiler_params=pltpu.CompilerParams(
            dimension_semantics=("parallel", "parallel"),
            vmem_limit_bytes=32 * 1024 * 1024,
        ),
    )(f0_3d, ph_3d, cri, sri, seed)

    # layout plumbing back to the PyTorch output shape (B, T*upp, dim)
    return jnp.transpose(out, (0, 2, 3, 1)).reshape(B, T * upp, dim)


def _reference_sine_part(f0, upp, sr, dim, sine_amp, voiced_threshold, rand_ini):
    """Pure-JAX mirror of the deterministic part of SineGen (for validation)."""
    B, T = f0.shape
    a = jnp.arange(1, upp + 1, dtype=jnp.float32)
    rad = f0[:, :, None] / sr * a[None, None, :]                 # (B, T, upp)
    fmod_in = rad[:, :-1, -1] + 0.5
    rad2 = fmod_in - jnp.trunc(fmod_in) - 0.5
    rad_acc = jnp.cumsum(rad2, axis=1)
    rad_acc = rad_acc - jnp.trunc(rad_acc)
    rad = rad + jnp.pad(rad_acc, ((0, 0), (1, 0)))[:, :, None]
    rad = rad.reshape(B, T * upp, 1)
    b = jnp.arange(1, dim + 1, dtype=jnp.float32)[None, None, :]
    rad = rad * b + rand_ini[None, None, :]
    sines = jnp.sin(2.0 * np.pi * rad)
    uv = (f0 > voiced_threshold).astype(jnp.float32)             # (B, T)
    uv_up = jnp.repeat(uv, upp, axis=1)[:, :, None]              # (B, T*upp, 1)
    return sines * sine_amp * uv_up, uv_up


if __name__ == "__main__":
    key = jax.random.PRNGKey(0)
    k_f0, k_voiced, k_gen = jax.random.split(key, 3)

    B, T, upp = 2, 16, 16
    harmonic_num = 8            # dim = 9
    dim = harmonic_num + 1
    samp_rate = 16000
    sine_amp, noise_std, voiced_threshold = 0.1, 0.003, 0.0

    f0 = jax.random.uniform(k_f0, (B, T), minval=80.0, maxval=400.0)
    # mark ~25% of frames unvoiced (f0 = 0) to exercise the uv branch
    f0 = f0 * (jax.random.uniform(k_voiced, (B, T)) > 0.25).astype(jnp.float32)

    k_ri, k_noise = jax.random.split(k_gen)
    rand_ini = jax.random.uniform(k_ri, (dim,), dtype=jnp.float32).at[0].set(0.0)

    out = sine_gen_forward(
        f0, upp,
        samp_rate=samp_rate, harmonic_num=harmonic_num,
        sine_amp=sine_amp, noise_std=noise_std,
        voiced_threshold=voiced_threshold,
        key=k_noise, rand_ini=rand_ini,
    )
    out = jax.block_until_ready(out)

    assert out.shape == (B, T * upp, dim), out.shape
    assert out.dtype == jnp.float32
    assert bool(jnp.all(jnp.isfinite(out)))

    # Validate the deterministic sine path within the (hard-bounded) noise
    # envelope: Box-Muller with 23-bit uniforms gives |z| <= sqrt(-2 ln 2^-23)
    # ~= 5.66, noise amp <= sine_amp/3 (unvoiced) and noise_std (voiced).
    sine_part, uv_up = _reference_sine_part(
        f0, upp, float(samp_rate), dim, sine_amp, voiced_threshold, rand_ini)
    err = jnp.abs(out - sine_part)
    assert float(jnp.max(err)) < 0.2
    assert float(jnp.max(err * (uv_up > 0))) < 0.03

    print("KERNEL_OK")
</pallas_src>

<mosaic_0001>
module attributes {stable_mosaic.version = 11 : i64} {
  func.func @kernel(%arg0: i32, %arg1: i32, %arg2: memref<1x16x1xf32, #tpu.memory_space<vmem>>, %arg3: memref<1x16x1xf32, #tpu.memory_space<vmem>>, %arg4: memref<9xf32, #tpu.memory_space<smem>>, %arg5: memref<9xf32, #tpu.memory_space<smem>>, %arg6: memref<1xi32, #tpu.memory_space<smem>>, %arg7: memref<1x9x16x16xf32, #tpu.memory_space<vmem>>) attributes {dimension_semantics = [#tpu.dimension_semantics<parallel>, #tpu.dimension_semantics<parallel>], iteration_bounds = array<i64: 2, 1>, scalar_prefetch = 0 : i64, scratch_operands = 0 : i64, tpu.core_type = #tpu.core_type<tc>, window_params = [{transform_indices = @transform_0, window_bounds = array<i64: 1, 16, 1>}, {transform_indices = @transform_1, window_bounds = array<i64: 1, 16, 1>}, {transform_indices = @transform_2, window_bounds = array<i64: 9>}, {transform_indices = @transform_3, window_bounds = array<i64: 9>}, {transform_indices = @transform_4, window_bounds = array<i64: 1>}, {transform_indices = @transform_5, window_bounds = array<i64: 1, 9, 16, 16>}]} {
    %c0 = arith.constant 0 : index
    %c0_0 = arith.constant 0 : index
    %c0_1 = arith.constant 0 : index
    %0 = vector.load %arg2[%c0, %c0_0, %c0_1] : memref<1x16x1xf32, #tpu.memory_space<vmem>>, vector<1x16x1xf32>
    %1 = vector.shape_cast %0 : vector<1x16x1xf32> to vector<16x1xf32>
    %c0_2 = arith.constant 0 : index
    %c0_3 = arith.constant 0 : index
    %c0_4 = arith.constant 0 : index
    %2 = vector.load %arg3[%c0_2, %c0_3, %c0_4] : memref<1x16x1xf32, #tpu.memory_space<vmem>>, vector<1x16x1xf32>
    %3 = vector.shape_cast %2 : vector<1x16x1xf32> to vector<16x1xf32>
    %4 = tpu.iota {dimensions = array<i32: 1>} : vector<1x16xi32>
    %c1_i32 = arith.constant 1 : i32
    %5 = vector.broadcast %c1_i32 : i32 to vector<1x16xi32>
    %6 = arith.addi %4, %5 : vector<1x16xi32>
    %7 = arith.sitofp %6 : vector<1x16xi32> to vector<1x16xf32>
    %cst = arith.constant 6.250000e-05 : f32
    %8 = vector.broadcast %cst : f32 to vector<16x1xf32>
    %9 = arith.mulf %1, %8 : vector<16x1xf32>
    %10 = vector.broadcast %9 : vector<16x1xf32> to vector<16x16xf32>
    %11 = vector.broadcast %7 : vector<1x16xf32> to vector<16x16xf32>
    %12 = arith.mulf %10, %11 : vector<16x16xf32>
    %13 = vector.broadcast %3 : vector<16x1xf32> to vector<16x16xf32>
    %14 = arith.addf %12, %13 : vector<16x16xf32>
    %15 = math.floor %14 : vector<16x16xf32>
    %16 = arith.subf %14, %15 : vector<16x16xf32>
    %cst_5 = arith.constant 6.28318548 : f32
    %17 = vector.broadcast %cst_5 : f32 to vector<16x16xf32>
    %18 = arith.mulf %17, %16 : vector<16x16xf32>
    %19 = math.sin %18 : vector<16x16xf32>
    %20 = math.cos %18 : vector<16x16xf32>
    %cst_6 = arith.constant 0.000000e+00 : f32
    %21 = vector.broadcast %cst_6 : f32 to vector<16x1xf32>
    %22 = arith.cmpf ogt, %1, %21 : vector<16x1xf32>
    %23 = arith.extui %22 : vector<16x1xi1> to vector<16x1xi32>
    %24 = arith.sitofp %23 : vector<16x1xi32> to vector<16x1xf32>
    %cst_7 = arith.constant 3.000000e-03 : f32
    %25 = vector.broadcast %cst_7 : f32 to vector<16x1xf32>
    %26 = arith.mulf %24, %25 : vector<16x1xf32>
    %cst_8 = arith.constant 1.000000e+00 : f32
    %27 = vector.broadcast %cst_8 : f32 to vector<16x1xf32>
    %28 = arith.subf %27, %24 : vector<16x1xf32>
    %cst_9 = arith.constant 0.0333333351 : f32
    %29 = vector.broadcast %cst_9 : f32 to vector<16x1xf32>
    %30 = arith.mulf %28, %29 : vector<16x1xf32>
    %31 = arith.addf %26, %30 : vector<16x1xf32>
    %cst_10 = arith.constant 1.000000e-01 : f32
    %32 = vector.broadcast %cst_10 : f32 to vector<16x1xf32>
    %33 = arith.mulf %24, %32 : vector<16x1xf32>
    %34 = tpu.iota {dimensions = array<i32: 0>} : vector<16x16xi32>
    %35 = tpu.iota {dimensions = array<i32: 1>} : vector<16x16xi32>
    %c16_i32 = arith.constant 16 : i32
    %36 = arith.muli %arg1, %c16_i32 : i32
    %37 = vector.broadcast %36 : i32 to vector<16x16xi32>
    %38 = arith.addi %37, %34 : vector<16x16xi32>
    %c16_i32_11 = arith.constant 16 : i32
    %39 = arith.muli %arg0, %c16_i32_11 : i32
    %40 = vector.broadcast %39 : i32 to vector<16x16xi32>
    %41 = arith.addi %40, %38 : vector<16x16xi32>
    %c16_i32_12 = arith.constant 16 : i32
    %42 = vector.broadcast %c16_i32_12 : i32 to vector<16x16xi32>
    %43 = arith.muli %41, %42 : vector<16x16xi32>
    %44 = arith.addi %43, %35 : vector<16x16xi32>
    %c10_i32 = arith.constant 10 : i32
    %45 = vector.broadcast %c10_i32 : i32 to vector<16x16xi32>
    %46 = arith.muli %44, %45 : vector<16x16xi32>
    %c0_13 = arith.constant 0 : index
    %47 = memref.load %arg6[%c0_13] : memref<1xi32, #tpu.memory_space<smem>>
    %48 = vector.broadcast %47 : i32 to vector<16x16xi32>
    %49 = arith.addi %46, %48 : vector<16x16xi32>
    %c0_14 = arith.constant 0 : index
    %50 = memref.load %arg4[%c0_14] : memref<9xf32, #tpu.memory_space<smem>>
    %51 = vector.broadcast %50 : f32 to vector<16x16xf32>
    %52 = arith.mulf %19, %51 : vector<16x16xf32>
    %c0_15 = arith.constant 0 : index
    %53 = memref.load %arg5[%c0_15] : memref<9xf32, #tpu.memory_space<smem>>
    %54 = vector.broadcast %53 : f32 to vector<16x16xf32>
    %55 = arith.mulf %20, %54 : vector<16x16xf32>
    %56 = arith.addf %52, %55 : vector<16x16xf32>
    %c0_i32 = arith.constant 0 : i32
    %57 = vector.broadcast %c0_i32 : i32 to vector<16x16xi32>
    %58 = arith.addi %49, %57 : vector<16x16xi32>
    %c1_i32_16 = arith.constant 1 : i32
    %59 = vector.broadcast %c1_i32_16 : i32 to vector<16x16xi32>
    %60 = arith.addi %49, %59 : vector<16x16xi32>
    %c16_i32_17 = arith.constant 16 : i32
    %61 = vector.broadcast %c16_i32_17 : i32 to vector<16x16xi32>
    %62 = arith.shrui %58, %61 : vector<16x16xi32>
    %63 = arith.xori %58, %62 : vector<16x16xi32>
    %c2146121005_i32 = arith.constant 2146121005 : i32
    %64 = vector.broadcast %c2146121005_i32 : i32 to vector<16x16xi32>
    %65 = arith.muli %63, %64 : vector<16x16xi32>
    %c15_i32 = arith.constant 15 : i32
    %66 = vector.broadcast %c15_i32 : i32 to vector<16x16xi32>
    %67 = arith.shrui %65, %66 : vector<16x16xi32>
    %68 = arith.xori %65, %67 : vector<16x16xi32>
    %c-2073254261_i32 = arith.constant -2073254261 : i32
    %69 = vector.broadcast %c-2073254261_i32 : i32 to vector<16x16xi32>
    %70 = arith.muli %68, %69 : vector<16x16xi32>
    %c16_i32_18 = arith.constant 16 : i32
    %71 = vector.broadcast %c16_i32_18 : i32 to vector<16x16xi32>
    %72 = arith.shrui %70, %71 : vector<16x16xi32>
    %73 = arith.xori %70, %72 : vector<16x16xi32>
    %c8388607_i32 = arith.constant 8388607 : i32
    %74 = vector.broadcast %c8388607_i32 : i32 to vector<16x16xi32>
    %75 = arith.andi %73, %74 : vector<16x16xi32>
    %76 = arith.sitofp %75 : vector<16x16xi32> to vector<16x16xf32>
    %cst_19 = arith.constant 1.000000e+00 : f32
    %77 = vector.broadcast %cst_19 : f32 to vector<16x16xf32>
    %78 = arith.addf %76, %77 : vector<16x16xf32>
    %cst_20 = arith.constant 1.1920929E-7 : f32
    %79 = vector.broadcast %cst_20 : f32 to vector<16x16xf32>
    %80 = arith.mulf %78, %79 : vector<16x16xf32>
    %c16_i32_21 = arith.constant 16 : i32
    %81 = vector.broadcast %c16_i32_21 : i32 to vector<16x16xi32>
    %82 = arith.shrui %60, %81 : vector<16x16xi32>
    %83 = arith.xori %60, %82 : vector<16x16xi32>
    %c2146121005_i32_22 = arith.constant 2146121005 : i32
    %84 = vector.broadcast %c2146121005_i32_22 : i32 to vector<16x16xi32>
    %85 = arith.muli %83, %84 : vector<16x16xi32>
    %c15_i32_23 = arith.constant 15 : i32
    %86 = vector.broadcast %c15_i32_23 : i32 to vector<16x16xi32>
    %87 = arith.shrui %85, %86 : vector<16x16xi32>
    %88 = arith.xori %85, %87 : vector<16x16xi32>
    %c-2073254261_i32_24 = arith.constant -2073254261 : i32
    %89 = vector.broadcast %c-2073254261_i32_24 : i32 to vector<16x16xi32>
    %90 = arith.muli %88, %89 : vector<16x16xi32>
    %c16_i32_25 = arith.constant 16 : i32
    %91 = vector.broadcast %c16_i32_25 : i32 to vector<16x16xi32>
    %92 = arith.shrui %90, %91 : vector<16x16xi32>
    %93 = arith.xori %90, %92 : vector<16x16xi32>
    %c8388607_i32_26 = arith.constant 8388607 : i32
    %94 = vector.broadcast %c8388607_i32_26 : i32 to vector<16x16xi32>
    %95 = arith.andi %93, %94 : vector<16x16xi32>
    %96 = arith.sitofp %95 : vector<16x16xi32> to vector<16x16xf32>
    %cst_27 = arith.constant 1.1920929E-7 : f32
    %97 = vector.broadcast %cst_27 : f32 to vector<16x16xf32>
    %98 = arith.mulf %96, %97 : vector<16x16xf32>
    %99 = math.log %80 : vector<16x16xf32>
    %cst_28 = arith.constant -2.000000e+00 : f32
    %100 = vector.broadcast %cst_28 : f32 to vector<16x16xf32>
    %101 = arith.mulf %100, %99 : vector<16x16xf32>
    %102 = math.sqrt %101 : vector<16x16xf32>
    %cst_29 = arith.constant 6.28318548 : f32
    %103 = vector.broadcast %cst_29 : f32 to vector<16x16xf32>
    %104 = arith.mulf %103, %98 : vector<16x16xf32>
    %105 = math.cos %104 : vector<16x16xf32>
    %106 = arith.mulf %102, %105 : vector<16x16xf32>
    %107 = math.sin %104 : vector<16x16xf32>
    %108 = arith.mulf %102, %107 : vector<16x16xf32>
    %109 = vector.broadcast %33 : vector<16x1xf32> to vector<16x16xf32>
    %110 = arith.mulf %109, %56 : vector<16x16xf32>
    %111 = vector.broadcast %31 : vector<16x1xf32> to vector<16x16xf32>
    %112 = arith.mulf %111, %106 : vector<16x16xf32>
    %113 = arith.addf %110, %112 : vector<16x16xf32>
    %c0_30 = arith.constant 0 : index
    %c0_31 = arith.constant 0 : index
    %c0_32 = arith.constant 0 : index
    %c0_33 = arith.constant 0 : index
    %114 = vector.load %arg7[%c0_30, %c0_31, %c0_32, %c0_33] : memref<1x9x16x16xf32, #tpu.memory_space<vmem>>, vector<1x1x16x16xf32>
    %115 = vector.shape_cast %114 : vector<1x1x16x16xf32> to vector<16x16xf32>
    %116 = vector.shape_cast %113 : vector<16x16xf32> to vector<1x1x16x16xf32>
    tpu.vector_store %arg7[%c0_30, %c0_31, %c0_32, %c0_33], %116 {strides = array<i32>} : memref<1x9x16x16xf32, #tpu.memory_space<vmem>>, vector<1x1x16x16xf32>,
    %117 = arith.mulf %19, %20 : vector<16x16xf32>
    %118 = arith.mulf %20, %19 : vector<16x16xf32>
    %119 = arith.addf %117, %118 : vector<16x16xf32>
    %120 = arith.mulf %20, %20 : vector<16x16xf32>
    %121 = arith.mulf %19, %19 : vector<16x16xf32>
    %122 = arith.subf %120, %121 : vector<16x16xf32>
    %c1 = arith.constant 1 : index
    %123 = memref.load %arg4[%c1] : memref<9xf32, #tpu.memory_space<smem>>
    %124 = vector.broadcast %123 : f32 to vector<16x16xf32>
    %125 = arith.mulf %119, %124 : vector<16x16xf32>
    %c1_34 = arith.constant 1 : index
    %126 = memref.load %arg5[%c1_34] : memref<9xf32, #tpu.memory_space<smem>>
    %127 = vector.broadcast %126 : f32 to vector<16x16xf32>
    %128 = arith.mulf %122, %127 : vector<16x16xf32>
    %129 = arith.addf %125, %128 : vector<16x16xf32>
    %130 = vector.broadcast %33 : vector<16x1xf32> to vector<16x16xf32>
    %131 = arith.mulf %130, %129 : vector<16x16xf32>
    %132 = vector.broadcast %31 : vector<16x1xf32> to vector<16x16xf32>
    %133 = arith.mulf %132, %108 : vector<16x16xf32>
    %134 = arith.addf %131, %133 : vector<16x16xf32>
    %c0_35 = arith.constant 0 : index
    %c1_36 = arith.constant 1 : index
    %c0_37 = arith.constant 0 : index
    %c0_38 = arith.constant 0 : index
    %135 = vector.load %arg7[%c0_35, %c1_36, %c0_37, %c0_38] : memref<1x9x16x16xf32, #tpu.memory_space<vmem>>, vector<1x1x16x16xf32>
    %136 = vector.shape_cast %135 : vector<1x1x16x16xf32> to vector<16x16xf32>
    %137 = vector.shape_cast %134 : vector<16x16xf32> to vector<1x1x16x16xf32>
    tpu.vector_store %arg7[%c0_35, %c1_36, %c0_37, %c0_38], %137 {strides = array<i32>} : memref<1x9x16x16xf32, #tpu.memory_space<vmem>>, vector<1x1x16x16xf32>,
    %138 = arith.mulf %119, %20 : vector<16x16xf32>
    %139 = arith.mulf %122, %19 : vector<16x16xf32>
    %140 = arith.addf %138, %139 : vector<16x16xf32>
    %141 = arith.mulf %122, %20 : vector<16x16xf32>
    %142 = arith.mulf %119, %19 : vector<16x16xf32>
    %143 = arith.subf %141, %142 : vector<16x16xf32>
    %c2 = arith.constant 2 : index
    %144 = memref.load %arg4[%c2] : memref<9xf32, #tpu.memory_space<smem>>
    %145 = vector.broadcast %144 : f32 to vector<16x16xf32>
    %146 = arith.mulf %140, %145 : vector<16x16xf32>
    %c2_39 = arith.constant 2 : index
    %147 = memref.load %arg5[%c2_39] : memref<9xf32, #tpu.memory_space<smem>>
    %148 = vector.broadcast %147 : f32 to vector<16x16xf32>
    %149 = arith.mulf %143, %148 : vector<16x16xf32>
    %150 = arith.addf %146, %149 : vector<16x16xf32>
    %c2_i32 = arith.constant 2 : i32
    %151 = vector.broadcast %c2_i32 : i32 to vector<16x16xi32>
    %152 = arith.addi %49, %151 : vector<16x16xi32>
    %c3_i32 = arith.constant 3 : i32
    %153 = vector.broadcast %c3_i32 : i32 to vector<16x16xi32>
    %154 = arith.addi %49, %153 : vector<16x16xi32>
    %c16_i32_40 = arith.constant 16 : i32
    %155 = vector.broadcast %c16_i32_40 : i32 to vector<16x16xi32>
    %156 = arith.shrui %152, %155 : vector<16x16xi32>
    %157 = arith.xori %152, %156 : vector<16x16xi32>
    %c2146121005_i32_41 = arith.constant 2146121005 : i32
    %158 = vector.broadcast %c2146121005_i32_41 : i32 to vector<16x16xi32>
    %159 = arith.muli %157, %158 : vector<16x16xi32>
    %c15_i32_42 = arith.constant 15 : i32
    %160 = vector.broadcast %c15_i32_42 : i32 to vector<16x16xi32>
    %161 = arith.shrui %159, %160 : vector<16x16xi32>
    %162 = arith.xori %159, %161 : vector<16x16xi32>
    %c-2073254261_i32_43 = arith.constant -2073254261 : i32
    %163 = vector.broadcast %c-2073254261_i32_43 : i32 to vector<16x16xi32>
    %164 = arith.muli %162, %163 : vector<16x16xi32>
    %c16_i32_44 = arith.constant 16 : i32
    %165 = vector.broadcast %c16_i32_44 : i32 to vector<16x16xi32>
    %166 = arith.shrui %164, %165 : vector<16x16xi32>
    %167 = arith.xori %164, %166 : vector<16x16xi32>
    %c8388607_i32_45 = arith.constant 8388607 : i32
    %168 = vector.broadcast %c8388607_i32_45 : i32 to vector<16x16xi32>
    %169 = arith.andi %167, %168 : vector<16x16xi32>
    %170 = arith.sitofp %169 : vector<16x16xi32> to vector<16x16xf32>
    %cst_46 = arith.constant 1.000000e+00 : f32
    %171 = vector.broadcast %cst_46 : f32 to vector<16x16xf32>
    %172 = arith.addf %170, %171 : vector<16x16xf32>
    %cst_47 = arith.constant 1.1920929E-7 : f32
    %173 = vector.broadcast %cst_47 : f32 to vector<16x16xf32>
    %174 = arith.mulf %172, %173 : vector<16x16xf32>
    %c16_i32_48 = arith.constant 16 : i32
    %175 = vector.broadcast %c16_i32_48 : i32 to vector<16x16xi32>
    %176 = arith.shrui %154, %175 : vector<16x16xi32>
    %177 = arith.xori %154, %176 : vector<16x16xi32>
    %c2146121005_i32_49 = arith.constant 2146121005 : i32
    %178 = vector.broadcast %c2146121005_i32_49 : i32 to vector<16x16xi32>
    %179 = arith.muli %177, %178 : vector<16x16xi32>
    %c15_i32_50 = arith.constant 15 : i32
    %180 = vector.broadcast %c15_i32_50 : i32 to vector<16x16xi32>
    %181 = arith.shrui %179, %180 : vector<16x16xi32>
    %182 = arith.xori %179, %181 : vector<16x16xi32>
    %c-2073254261_i32_51 = arith.constant -2073254261 : i32
    %183 = vector.broadcast %c-2073254261_i32_51 : i32 to vector<16x16xi32>
    %184 = arith.muli %182, %183 : vector<16x16xi32>
    %c16_i32_52 = arith.constant 16 : i32
    %185 = vector.broadcast %c16_i32_52 : i32 to vector<16x16xi32>
    %186 = arith.shrui %184, %185 : vector<16x16xi32>
    %187 = arith.xori %184, %186 : vector<16x16xi32>
    %c8388607_i32_53 = arith.constant 8388607 : i32
    %188 = vector.broadcast %c8388607_i32_53 : i32 to vector<16x16xi32>
    %189 = arith.andi %187, %188 : vector<16x16xi32>
    %190 = arith.sitofp %189 : vector<16x16xi32> to vector<16x16xf32>
    %cst_54 = arith.constant 1.1920929E-7 : f32
    %191 = vector.broadcast %cst_54 : f32 to vector<16x16xf32>
    %192 = arith.mulf %190, %191 : vector<16x16xf32>
    %193 = math.log %174 : vector<16x16xf32>
    %cst_55 = arith.constant -2.000000e+00 : f32
    %194 = vector.broadcast %cst_55 : f32 to vector<16x16xf32>
    %195 = arith.mulf %194, %193 : vector<16x16xf32>
    %196 = math.sqrt %195 : vector<16x16xf32>
    %cst_56 = arith.constant 6.28318548 : f32
    %197 = vector.broadcast %cst_56 : f32 to vector<16x16xf32>
    %198 = arith.mulf %197, %192 : vector<16x16xf32>
    %199 = math.cos %198 : vector<16x16xf32>
    %200 = arith.mulf %196, %199 : vector<16x16xf32>
    %201 = math.sin %198 : vector<16x16xf32>
    %202 = arith.mulf %196, %201 : vector<16x16xf32>
    %203 = vector.broadcast %33 : vector<16x1xf32> to vector<16x16xf32>
    %204 = arith.mulf %203, %150 : vector<16x16xf32>
    %205 = vector.broadcast %31 : vector<16x1xf32> to vector<16x16xf32>
    %206 = arith.mulf %205, %200 : vector<16x16xf32>
    %207 = arith.addf %204, %206 : vector<16x16xf32>
    %c0_57 = arith.constant 0 : index
    %c2_58 = arith.constant 2 : index
    %c0_59 = arith.constant 0 : index
    %c0_60 = arith.constant 0 : index
    %208 = vector.load %arg7[%c0_57, %c2_58, %c0_59, %c0_60] : memref<1x9x16x16xf32, #tpu.memory_space<vmem>>, vector<1x1x16x16xf32>
    %209 = vector.shape_cast %208 : vector<1x1x16x16xf32> to vector<16x16xf32>
    %210 = vector.shape_cast %207 : vector<16x16xf32> to vector<1x1x16x16xf32>
    tpu.vector_store %arg7[%c0_57, %c2_58, %c0_59, %c0_60], %210 {strides = array<i32>} : memref<1x9x16x16xf32, #tpu.memory_space<vmem>>, vector<1x1x16x16xf32>,
    %211 = arith.mulf %140, %20 : vector<16x16xf32>
    %212 = arith.mulf %143, %19 : vector<16x16xf32>
    %213 = arith.addf %211, %212 : vector<16x16xf32>
    %214 = arith.mulf %143, %20 : vector<16x16xf32>
    %215 = arith.mulf %140, %19 : vector<16x16xf32>
    %216 = arith.subf %214, %215 : vector<16x16xf32>
    %c3 = arith.constant 3 : index
    %217 = memref.load %arg4[%c3] : memref<9xf32, #tpu.memory_space<smem>>
    %218 = vector.broadcast %217 : f32 to vector<16x16xf32>
    %219 = arith.mulf %213, %218 : vector<16x16xf32>
    %c3_61 = arith.constant 3 : index
    %220 = memref.load %arg5[%c3_61] : memref<9xf32, #tpu.memory_space<smem>>
    %221 = vector.broadcast %220 : f32 to vector<16x16xf32>
    %222 = arith.mulf %216, %221 : vector<16x16xf32>
    %223 = arith.addf %219, %222 : vector<16x16xf32>
    %224 = vector.broadcast %33 : vector<16x1xf32> to vector<16x16xf32>
    %225 = arith.mulf %224, %223 : vector<16x16xf32>
    %226 = vector.broadcast %31 : vector<16x1xf32> to vector<16x16xf32>
    %227 = arith.mulf %226, %202 : vector<16x16xf32>
    %228 = arith.addf %225, %227 : vector<16x16xf32>
    %c0_62 = arith.constant 0 : index
    %c3_63 = arith.constant 3 : index
    %c0_64 = arith.constant 0 : index
    %c0_65 = arith.constant 0 : index
    %229 = vector.load %arg7[%c0_62, %c3_63, %c0_64, %c0_65] : memref<1x9x16x16xf32, #tpu.memory_space<vmem>>, vector<1x1x16x16xf32>
    %230 = vector.shape_cast %229 : vector<1x1x16x16xf32> to vector<16x16xf32>
    %231 = vector.shape_cast %228 : vector<16x16xf32> to vector<1x1x16x16xf32>
    tpu.vector_store %arg7[%c0_62, %c3_63, %c0_64, %c0_65], %231 {strides = array<i32>} : memref<1x9x16x16xf32, #tpu.memory_space<vmem>>, vector<1x1x16x16xf32>,
    %232 = arith.mulf %213, %20 : vector<16x16xf32>
    %233 = arith.mulf %216, %19 : vector<16x16xf32>
    %234 = arith.addf %232, %233 : vector<16x16xf32>
    %235 = arith.mulf %216, %20 : vector<16x16xf32>
    %236 = arith.mulf %213, %19 : vector<16x16xf32>
    %237 = arith.subf %235, %236 : vector<16x16xf32>
    %c4 = arith.constant 4 : index
    %238 = memref.load %arg4[%c4] : memref<9xf32, #tpu.memory_space<smem>>
    %239 = vector.broadcast %238 : f32 to vector<16x16xf32>
    %240 = arith.mulf %234, %239 : vector<16x16xf32>
    %c4_66 = arith.constant 4 : index
    %241 = memref.load %arg5[%c4_66] : memref<9xf32, #tpu.memory_space<smem>>
    %242 = vector.broadcast %241 : f32 to vector<16x16xf32>
    %243 = arith.mulf %237, %242 : vector<16x16xf32>
    %244 = arith.addf %240, %243 : vector<16x16xf32>
    %c4_i32 = arith.constant 4 : i32
    %245 = vector.broadcast %c4_i32 : i32 to vector<16x16xi32>
    %246 = arith.addi %49, %245 : vector<16x16xi32>
    %c5_i32 = arith.constant 5 : i32
    %247 = vector.broadcast %c5_i32 : i32 to vector<16x16xi32>
    %248 = arith.addi %49, %247 : vector<16x16xi32>
    %c16_i32_67 = arith.constant 16 : i32
    %249 = vector.broadcast %c16_i32_67 : i32 to vector<16x16xi32>
    %250 = arith.shrui %246, %249 : vector<16x16xi32>
    %251 = arith.xori %246, %250 : vector<16x16xi32>
    %c2146121005_i32_68 = arith.constant 2146121005 : i32
    %252 = vector.broadcast %c2146121005_i32_68 : i32 to vector<16x16xi32>
    %253 = arith.muli %251, %252 : vector<16x16xi32>
    %c15_i32_69 = arith.constant 15 : i32
    %254 = vector.broadcast %c15_i32_69 : i32 to vector<16x16xi32>
    %255 = arith.shrui %253, %254 : vector<16x16xi32>
    %256 = arith.xori %253, %255 : vector<16x16xi32>
    %c-2073254261_i32_70 = arith.constant -2073254261 : i32
    %257 = vector.broadcast %c-2073254261_i32_70 : i32 to vector<16x16xi32>
    %258 = arith.muli %256, %257 : vector<16x16xi32>
    %c16_i32_71 = arith.constant 16 : i32
    %259 = vector.broadcast %c16_i32_71 : i32 to vector<16x16xi32>
    %260 = arith.shrui %258, %259 : vector<16x16xi32>
    %261 = arith.xori %258, %260 : vector<16x16xi32>
    %c8388607_i32_72 = arith.constant 8388607 : i32
    %262 = vector.broadcast %c8388607_i32_72 : i32 to vector<16x16xi32>
    %263 = arith.andi %261, %262 : vector<16x16xi32>
    %264 = arith.sitofp %263 : vector<16x16xi32> to vector<16x16xf32>
    %cst_73 = arith.constant 1.000000e+00 : f32
    %265 = vector.broadcast %cst_73 : f32 to vector<16x16xf32>
    %266 = arith.addf %264, %265 : vector<16x16xf32>
    %cst_74 = arith.constant 1.1920929E-7 : f32
    %267 = vector.broadcast %cst_74 : f32 to vector<16x16xf32>
    %268 = arith.mulf %266, %267 : vector<16x16xf32>
    %c16_i32_75 = arith.constant 16 : i32
    %269 = vector.broadcast %c16_i32_75 : i32 to vector<16x16xi32>
    %270 = arith.shrui %248, %269 : vector<16x16xi32>
    %271 = arith.xori %248, %270 : vector<16x16xi32>
    %c2146121005_i32_76 = arith.constant 2146121005 : i32
    %272 = vector.broadcast %c2146121005_i32_76 : i32 to vector<16x16xi32>
    %273 = arith.muli %271, %272 : vector<16x16xi32>
    %c15_i32_77 = arith.constant 15 : i32
    %274 = vector.broadcast %c15_i32_77 : i32 to vector<16x16xi32>
    %275 = arith.shrui %273, %274 : vector<16x16xi32>
    %276 = arith.xori %273, %275 : vector<16x16xi32>
    %c-2073254261_i32_78 = arith.constant -2073254261 : i32
    %277 = vector.broadcast %c-2073254261_i32_78 : i32 to vector<16x16xi32>
    %278 = arith.muli %276, %277 : vector<16x16xi32>
    %c16_i32_79 = arith.constant 16 : i32
    %279 = vector.broadcast %c16_i32_79 : i32 to vector<16x16xi32>
    %280 = arith.shrui %278, %279 : vector<16x16xi32>
    %281 = arith.xori %278, %280 : vector<16x16xi32>
    %c8388607_i32_80 = arith.constant 8388607 : i32
    %282 = vector.broadcast %c8388607_i32_80 : i32 to vector<16x16xi32>
    %283 = arith.andi %281, %282 : vector<16x16xi32>
    %284 = arith.sitofp %283 : vector<16x16xi32> to vector<16x16xf32>
    %cst_81 = arith.constant 1.1920929E-7 : f32
    %285 = vector.broadcast %cst_81 : f32 to vector<16x16xf32>
    %286 = arith.mulf %284, %285 : vector<16x16xf32>
    %287 = math.log %268 : vector<16x16xf32>
    %cst_82 = arith.constant -2.000000e+00 : f32
    %288 = vector.broadcast %cst_82 : f32 to vector<16x16xf32>
    %289 = arith.mulf %288, %287 : vector<16x16xf32>
    %290 = math.sqrt %289 : vector<16x16xf32>
    %cst_83 = arith.constant 6.28318548 : f32
    %291 = vector.broadcast %cst_83 : f32 to vector<16x16xf32>
    %292 = arith.mulf %291, %286 : vector<16x16xf32>
    %293 = math.cos %292 : vector<16x16xf32>
    %294 = arith.mulf %290, %293 : vector<16x16xf32>
    %295 = math.sin %292 : vector<16x16xf32>
    %296 = arith.mulf %290, %295 : vector<16x16xf32>
    %297 = vector.broadcast %33 : vector<16x1xf32> to vector<16x16xf32>
    %298 = arith.mulf %297, %244 : vector<16x16xf32>
    %299 = vector.broadcast %31 : vector<16x1xf32> to vector<16x16xf32>
    %300 = arith.mulf %299, %294 : vector<16x16xf32>
    %301 = arith.addf %298, %300 : vector<16x16xf32>
    %c0_84 = arith.constant 0 : index
    %c4_85 = arith.constant 4 : index
    %c0_86 = arith.constant 0 : index
    %c0_87 = arith.constant 0 : index
    %302 = vector.load %arg7[%c0_84, %c4_85, %c0_86, %c0_87] : memref<1x9x16x16xf32, #tpu.memory_space<vmem>>, vector<1x1x16x16xf32>
    %303 = vector.shape_cast %302 : vector<1x1x16x16xf32> to vector<16x16xf32>
    %304 = vector.shape_cast %301 : vector<16x16xf32> to vector<1x1x16x16xf32>
    tpu.vector_store %arg7[%c0_84, %c4_85, %c0_86, %c0_87], %304 {strides = array<i32>} : memref<1x9x16x16xf32, #tpu.memory_space<vmem>>, vector<1x1x16x16xf32>,
    %305 = arith.mulf %234, %20 : vector<16x16xf32>
    %306 = arith.mulf %237, %19 : vector<16x16xf32>
    %307 = arith.addf %305, %306 : vector<16x16xf32>
    %308 = arith.mulf %237, %20 : vector<16x16xf32>
    %309 = arith.mulf %234, %19 : vector<16x16xf32>
    %310 = arith.subf %308, %309 : vector<16x16xf32>
    %c5 = arith.constant 5 : index
    %311 = memref.load %arg4[%c5] : memref<9xf32, #tpu.memory_space<smem>>
    %312 = vector.broadcast %311 : f32 to vector<16x16xf32>
    %313 = arith.mulf %307, %312 : vector<16x16xf32>
    %c5_88 = arith.constant 5 : index
    %314 = memref.load %arg5[%c5_88] : memref<9xf32, #tpu.memory_space<smem>>
    %315 = vector.broadcast %314 : f32 to vector<16x16xf32>
    %316 = arith.mulf %310, %315 : vector<16x16xf32>
    %317 = arith.addf %313, %316 : vector<16x16xf32>
    %318 = vector.broadcast %33 : vector<16x1xf32> to vector<16x16xf32>
    %319 = arith.mulf %318, %317 : vector<16x16xf32>
    %320 = vector.broadcast %31 : vector<16x1xf32> to vector<16x16xf32>
    %321 = arith.mulf %320, %296 : vector<16x16xf32>
    %322 = arith.addf %319, %321 : vector<16x16xf32>
    %c0_89 = arith.constant 0 : index
    %c5_90 = arith.constant 5 : index
    %c0_91 = arith.constant 0 : index
    %c0_92 = arith.constant 0 : index
    %323 = vector.load %arg7[%c0_89, %c5_90, %c0_91, %c0_92] : memref<1x9x16x16xf32, #tpu.memory_space<vmem>>, vector<1x1x16x16xf32>
    %324 = vector.shape_cast %323 : vector<1x1x16x16xf32> to vector<16x16xf32>
    %325 = vector.shape_cast %322 : vector<16x16xf32> to vector<1x1x16x16xf32>
    tpu.vector_store %arg7[%c0_89, %c5_90, %c0_91, %c0_92], %325 {strides = array<i32>} : memref<1x9x16x16xf32, #tpu.memory_space<vmem>>, vector<1x1x16x16xf32>,
    %326 = arith.mulf %307, %20 : vector<16x16xf32>
    %327 = arith.mulf %310, %19 : vector<16x16xf32>
    %328 = arith.addf %326, %327 : vector<16x16xf32>
    %329 = arith.mulf %310, %20 : vector<16x16xf32>
    %330 = arith.mulf %307, %19 : vector<16x16xf32>
    %331 = arith.subf %329, %330 : vector<16x16xf32>
    %c6 = arith.constant 6 : index
    %332 = memref.load %arg4[%c6] : memref<9xf32, #tpu.memory_space<smem>>
    %333 = vector.broadcast %332 : f32 to vector<16x16xf32>
    %334 = arith.mulf %328, %333 : vector<16x16xf32>
    %c6_93 = arith.constant 6 : index
    %335 = memref.load %arg5[%c6_93] : memref<9xf32, #tpu.memory_space<smem>>
    %336 = vector.broadcast %335 : f32 to vector<16x16xf32>
    %337 = arith.mulf %331, %336 : vector<16x16xf32>
    %338 = arith.addf %334, %337 : vector<16x16xf32>
    %c6_i32 = arith.constant 6 : i32
    %339 = vector.broadcast %c6_i32 : i32 to vector<16x16xi32>
    %340 = arith.addi %49, %339 : vector<16x16xi32>
    %c7_i32 = arith.constant 7 : i32
    %341 = vector.broadcast %c7_i32 : i32 to vector<16x16xi32>
    %342 = arith.addi %49, %341 : vector<16x16xi32>
    %c16_i32_94 = arith.constant 16 : i32
    %343 = vector.broadcast %c16_i32_94 : i32 to vector<16x16xi32>
    %344 = arith.shrui %340, %343 : vector<16x16xi32>
    %345 = arith.xori %340, %344 : vector<16x16xi32>
    %c2146121005_i32_95 = arith.constant 2146121005 : i32
    %346 = vector.broadcast %c2146121005_i32_95 : i32 to vector<16x16xi32>
    %347 = arith.muli %345, %346 : vector<16x16xi32>
    %c15_i32_96 = arith.constant 15 : i32
    %348 = vector.broadcast %c15_i32_96 : i32 to vector<16x16xi32>
    %349 = arith.shrui %347, %348 : vector<16x16xi32>
    %350 = arith.xori %347, %349 : vector<16x16xi32>
    %c-2073254261_i32_97 = arith.constant -2073254261 : i32
    %351 = vector.broadcast %c-2073254261_i32_97 : i32 to vector<16x16xi32>
    %352 = arith.muli %350, %351 : vector<16x16xi32>
    %c16_i32_98 = arith.constant 16 : i32
    %353 = vector.broadcast %c16_i32_98 : i32 to vector<16x16xi32>
    %354 = arith.shrui %352, %353 : vector<16x16xi32>
    %355 = arith.xori %352, %354 : vector<16x16xi32>
    %c8388607_i32_99 = arith.constant 8388607 : i32
    %356 = vector.broadcast %c8388607_i32_99 : i32 to vector<16x16xi32>
    %357 = arith.andi %355, %356 : vector<16x16xi32>
    %358 = arith.sitofp %357 : vector<16x16xi32> to vector<16x16xf32>
    %cst_100 = arith.constant 1.000000e+00 : f32
    %359 = vector.broadcast %cst_100 : f32 to vector<16x16xf32>
    %360 = arith.addf %358, %359 : vector<16x16xf32>
    %cst_101 = arith.constant 1.1920929E-7 : f32
    %361 = vector.broadcast %cst_101 : f32 to vector<16x16xf32>
    %362 = arith.mulf %360, %361 : vector<16x16xf32>
    %c16_i32_102 = arith.constant 16 : i32
    %363 = vector.broadcast %c16_i32_102 : i32 to vector<16x16xi32>
    %364 = arith.shrui %342, %363 : vector<16x16xi32>
    %365 = arith.xori %342, %364 : vector<16x16xi32>
    %c2146121005_i32_103 = arith.constant 2146121005 : i32
    %366 = vector.broadcast %c2146121005_i32_103 : i32 to vector<16x16xi32>
    %367 = arith.muli %365, %366 : vector<16x16xi32>
    %c15_i32_104 = arith.constant 15 : i32
    %368 = vector.broadcast %c15_i32_104 : i32 to vector<16x16xi32>
    %369 = arith.shrui %367, %368 : vector<16x16xi32>
    %370 = arith.xori %367, %369 : vector<16x16xi32>
    %c-2073254261_i32_105 = arith.constant -2073254261 : i32
    %371 = vector.broadcast %c-2073254261_i32_105 : i32 to vector<16x16xi32>
    %372 = arith.muli %370, %371 : vector<16x16xi32>
    %c16_i32_106 = arith.constant 16 : i32
    %373 = vector.broadcast %c16_i32_106 : i32 to vector<16x16xi32>
    %374 = arith.shrui %372, %373 : vector<16x16xi32>
    %375 = arith.xori %372, %374 : vector<16x16xi32>
    %c8388607_i32_107 = arith.constant 8388607 : i32
    %376 = vector.broadcast %c8388607_i32_107 : i32 to vector<16x16xi32>
    %377 = arith.andi %375, %376 : vector<16x16xi32>
    %378 = arith.sitofp %377 : vector<16x16xi32> to vector<16x16xf32>
    %cst_108 = arith.constant 1.1920929E-7 : f32
    %379 = vector.broadcast %cst_108 : f32 to vector<16x16xf32>
    %380 = arith.mulf %378, %379 : vector<16x16xf32>
    %381 = math.log %362 : vector<16x16xf32>
    %cst_109 = arith.constant -2.000000e+00 : f32
    %382 = vector.broadcast %cst_109 : f32 to vector<16x16xf32>
    %383 = arith.mulf %382, %381 : vector<16x16xf32>
    %384 = math.sqrt %383 : vector<16x16xf32>
    %cst_110 = arith.constant 6.28318548 : f32
    %385 = vector.broadcast %cst_110 : f32 to vector<16x16xf32>
    %386 = arith.mulf %385, %380 : vector<16x16xf32>
    %387 = math.cos %386 : vector<16x16xf32>
    %388 = arith.mulf %384, %387 : vector<16x16xf32>
    %389 = math.sin %386 : vector<16x16xf32>
    %390 = arith.mulf %384, %389 : vector<16x16xf32>
    %391 = vector.broadcast %33 : vector<16x1xf32> to vector<16x16xf32>
    %392 = arith.mulf %391, %338 : vector<16x16xf32>
    %393 = vector.broadcast %31 : vector<16x1xf32> to vector<16x16xf32>
    %394 = arith.mulf %393, %388 : vector<16x16xf32>
    %395 = arith.addf %392, %394 : vector<16x16xf32>
    %c0_111 = arith.constant 0 : index
    %c6_112 = arith.constant 6 : index
    %c0_113 = arith.constant 0 : index
    %c0_114 = arith.constant 0 : index
    %396 = vector.load %arg7[%c0_111, %c6_112, %c0_113, %c0_114] : memref<1x9x16x16xf32, #tpu.memory_space<vmem>>, vector<1x1x16x16xf32>
    %397 = vector.shape_cast %396 : vector<1x1x16x16xf32> to vector<16x16xf32>
    %398 = vector.shape_cast %395 : vector<16x16xf32> to vector<1x1x16x16xf32>
    tpu.vector_store %arg7[%c0_111, %c6_112, %c0_113, %c0_114], %398 {strides = array<i32>} : memref<1x9x16x16xf32, #tpu.memory_space<vmem>>, vector<1x1x16x16xf32>,
    %399 = arith.mulf %328, %20 : vector<16x16xf32>
    %400 = arith.mulf %331, %19 : vector<16x16xf32>
    %401 = arith.addf %399, %400 : vector<16x16xf32>
    %402 = arith.mulf %331, %20 : vector<16x16xf32>
    %403 = arith.mulf %328, %19 : vector<16x16xf32>
    %404 = arith.subf %402, %403 : vector<16x16xf32>
    %c7 = arith.constant 7 : index
    %405 = memref.load %arg4[%c7] : memref<9xf32, #tpu.memory_space<smem>>
    %406 = vector.broadcast %405 : f32 to vector<16x16xf32>
    %407 = arith.mulf %401, %406 : vector<16x16xf32>
    %c7_115 = arith.constant 7 : index
    %408 = memref.load %arg5[%c7_115] : memref<9xf32, #tpu.memory_space<smem>>
    %409 = vector.broadcast %408 : f32 to vector<16x16xf32>
    %410 = arith.mulf %404, %409 : vector<16x16xf32>
    %411 = arith.addf %407, %410 : vector<16x16xf32>
    %412 = vector.broadcast %33 : vector<16x1xf32> to vector<16x16xf32>
    %413 = arith.mulf %412, %411 : vector<16x16xf32>
    %414 = vector.broadcast %31 : vector<16x1xf32> to vector<16x16xf32>
    %415 = arith.mulf %414, %390 : vector<16x16xf32>
    %416 = arith.addf %413, %415 : vector<16x16xf32>
    %c0_116 = arith.constant 0 : index
    %c7_117 = arith.constant 7 : index
    %c0_118 = arith.constant 0 : index
    %c0_119 = arith.constant 0 : index
    %417 = vector.load %arg7[%c0_116, %c7_117, %c0_118, %c0_119] : memref<1x9x16x16xf32, #tpu.memory_space<vmem>>, vector<1x1x16x16xf32>
    %418 = vector.shape_cast %417 : vector<1x1x16x16xf32> to vector<16x16xf32>
    %419 = vector.shape_cast %416 : vector<16x16xf32> to vector<1x1x16x16xf32>
    tpu.vector_store %arg7[%c0_116, %c7_117, %c0_118, %c0_119], %419 {strides = array<i32>} : memref<1x9x16x16xf32, #tpu.memory_space<vmem>>, vector<1x1x16x16xf32>,
    %420 = arith.mulf %401, %20 : vector<16x16xf32>
    %421 = arith.mulf %404, %19 : vector<16x16xf32>
    %422 = arith.addf %420, %421 : vector<16x16xf32>
    %423 = arith.mulf %404, %20 : vector<16x16xf32>
    %424 = arith.mulf %401, %19 : vector<16x16xf32>
    %425 = arith.subf %423, %424 : vector<16x16xf32>
    %c8 = arith.constant 8 : index
    %426 = memref.load %arg4[%c8] : memref<9xf32, #tpu.memory_space<smem>>
    %427 = vector.broadcast %426 : f32 to vector<16x16xf32>
    %428 = arith.mulf %422, %427 : vector<16x16xf32>
    %c8_120 = arith.constant 8 : index
    %429 = memref.load %arg5[%c8_120] : memref<9xf32, #tpu.memory_space<smem>>
    %430 = vector.broadcast %429 : f32 to vector<16x16xf32>
    %431 = arith.mulf %425, %430 : vector<16x16xf32>
    %432 = arith.addf %428, %431 : vector<16x16xf32>
    %c8_i32 = arith.constant 8 : i32
    %433 = vector.broadcast %c8_i32 : i32 to vector<16x16xi32>
    %434 = arith.addi %49, %433 : vector<16x16xi32>
    %c9_i32 = arith.constant 9 : i32
    %435 = vector.broadcast %c9_i32 : i32 to vector<16x16xi32>
    %436 = arith.addi %49, %435 : vector<16x16xi32>
    %c16_i32_121 = arith.constant 16 : i32
    %437 = vector.broadcast %c16_i32_121 : i32 to vector<16x16xi32>
    %438 = arith.shrui %434, %437 : vector<16x16xi32>
    %439 = arith.xori %434, %438 : vector<16x16xi32>
    %c2146121005_i32_122 = arith.constant 2146121005 : i32
    %440 = vector.broadcast %c2146121005_i32_122 : i32 to vector<16x16xi32>
    %441 = arith.muli %439, %440 : vector<16x16xi32>
    %c15_i32_123 = arith.constant 15 : i32
    %442 = vector.broadcast %c15_i32_123 : i32 to vector<16x16xi32>
    %443 = arith.shrui %441, %442 : vector<16x16xi32>
    %444 = arith.xori %441, %443 : vector<16x16xi32>
    %c-2073254261_i32_124 = arith.constant -2073254261 : i32
    %445 = vector.broadcast %c-2073254261_i32_124 : i32 to vector<16x16xi32>
    %446 = arith.muli %444, %445 : vector<16x16xi32>
    %c16_i32_125 = arith.constant 16 : i32
    %447 = vector.broadcast %c16_i32_125 : i32 to vector<16x16xi32>
    %448 = arith.shrui %446, %447 : vector<16x16xi32>
    %449 = arith.xori %446, %448 : vector<16x16xi32>
    %c8388607_i32_126 = arith.constant 8388607 : i32
    %450 = vector.broadcast %c8388607_i32_126 : i32 to vector<16x16xi32>
    %451 = arith.andi %449, %450 : vector<16x16xi32>
    %452 = arith.sitofp %451 : vector<16x16xi32> to vector<16x16xf32>
    %cst_127 = arith.constant 1.000000e+00 : f32
    %453 = vector.broadcast %cst_127 : f32 to vector<16x16xf32>
    %454 = arith.addf %452, %453 : vector<16x16xf32>
    %cst_128 = arith.constant 1.1920929E-7 : f32
    %455 = vector.broadcast %cst_128 : f32 to vector<16x16xf32>
    %456 = arith.mulf %454, %455 : vector<16x16xf32>
    %c16_i32_129 = arith.constant 16 : i32
    %457 = vector.broadcast %c16_i32_129 : i32 to vector<16x16xi32>
    %458 = arith.shrui %436, %457 : vector<16x16xi32>
    %459 = arith.xori %436, %458 : vector<16x16xi32>
    %c2146121005_i32_130 = arith.constant 2146121005 : i32
    %460 = vector.broadcast %c2146121005_i32_130 : i32 to vector<16x16xi32>
    %461 = arith.muli %459, %460 : vector<16x16xi32>
    %c15_i32_131 = arith.constant 15 : i32
    %462 = vector.broadcast %c15_i32_131 : i32 to vector<16x16xi32>
    %463 = arith.shrui %461, %462 : vector<16x16xi32>
    %464 = arith.xori %461, %463 : vector<16x16xi32>
    %c-2073254261_i32_132 = arith.constant -2073254261 : i32
    %465 = vector.broadcast %c-2073254261_i32_132 : i32 to vector<16x16xi32>
    %466 = arith.muli %464, %465 : vector<16x16xi32>
    %c16_i32_133 = arith.constant 16 : i32
    %467 = vector.broadcast %c16_i32_133 : i32 to vector<16x16xi32>
    %468 = arith.shrui %466, %467 : vector<16x16xi32>
    %469 = arith.xori %466, %468 : vector<16x16xi32>
    %c8388607_i32_134 = arith.constant 8388607 : i32
    %470 = vector.broadcast %c8388607_i32_134 : i32 to vector<16x16xi32>
    %471 = arith.andi %469, %470 : vector<16x16xi32>
    %472 = arith.sitofp %471 : vector<16x16xi32> to vector<16x16xf32>
    %cst_135 = arith.constant 1.1920929E-7 : f32
    %473 = vector.broadcast %cst_135 : f32 to vector<16x16xf32>
    %474 = arith.mulf %472, %473 : vector<16x16xf32>
    %475 = math.log %456 : vector<16x16xf32>
    %cst_136 = arith.constant -2.000000e+00 : f32
    %476 = vector.broadcast %cst_136 : f32 to vector<16x16xf32>
    %477 = arith.mulf %476, %475 : vector<16x16xf32>
    %478 = math.sqrt %477 : vector<16x16xf32>
    %cst_137 = arith.constant 6.28318548 : f32
    %479 = vector.broadcast %cst_137 : f32 to vector<16x16xf32>
    %480 = arith.mulf %479, %474 : vector<16x16xf32>
    %481 = math.cos %480 : vector<16x16xf32>
    %482 = arith.mulf %478, %481 : vector<16x16xf32>
    %483 = vector.broadcast %33 : vector<16x1xf32> to vector<16x16xf32>
    %484 = arith.mulf %483, %432 : vector<16x16xf32>
    %485 = vector.broadcast %31 : vector<16x1xf32> to vector<16x16xf32>
    %486 = arith.mulf %485, %482 : vector<16x16xf32>
    %487 = arith.addf %484, %486 : vector<16x16xf32>
    %c0_138 = arith.constant 0 : index
    %c8_139 = arith.constant 8 : index
    %c0_140 = arith.constant 0 : index
    %c0_141 = arith.constant 0 : index
    %488 = vector.load %arg7[%c0_138, %c8_139, %c0_140, %c0_141] : memref<1x9x16x16xf32, #tpu.memory_space<vmem>>, vector<1x1x16x16xf32>
    %489 = vector.shape_cast %488 : vector<1x1x16x16xf32> to vector<16x16xf32>
    %490 = vector.shape_cast %487 : vector<16x16xf32> to vector<1x1x16x16xf32>
    tpu.vector_store %arg7[%c0_138, %c8_139, %c0_140, %c0_141], %490 {strides = array<i32>} : memref<1x9x16x16xf32, #tpu.memory_space<vmem>>, vector<1x1x16x16xf32>,
    return
  }
  func.func @transform_0(%arg0: i32, %arg1: i32) -> (i32, i32, i32) {
    %c0_i32 = arith.constant 0 : i32
    %c0_i32_0 = arith.constant 0 : i32
    return %arg0, %arg1, %c0_i32 : i32, i32, i32
  }
  func.func @transform_1(%arg0: i32, %arg1: i32) -> (i32, i32, i32) {
    %c0_i32 = arith.constant 0 : i32
    %c0_i32_0 = arith.constant 0 : i32
    return %arg0, %arg1, %c0_i32 : i32, i32, i32
  }
  func.func @transform_2(%arg0: i32, %arg1: i32) -> i32 {
    %c0_i32 = arith.constant 0 : i32
    %c0_i32_0 = arith.constant 0 : i32
    return %c0_i32 : i32
  }
  func.func @transform_3(%arg0: i32, %arg1: i32) -> i32 {
    %c0_i32 = arith.constant 0 : i32
    %c0_i32_0 = arith.constant 0 : i32
    return %c0_i32 : i32
  }
  func.func @transform_4(%arg0: i32, %arg1: i32) -> i32 {
    %c0_i32 = arith.constant 0 : i32
    %c0_i32_0 = arith.constant 0 : i32
    return %c0_i32 : i32
  }
  func.func @transform_5(%arg0: i32, %arg1: i32) -> (i32, i32, i32, i32) {
    %c0_i32 = arith.constant 0 : i32
    %c0_i32_0 = arith.constant 0 : i32
    %c0_i32_1 = arith.constant 0 : i32
    return %arg0, %c0_i32, %arg1, %c0_i32_0 : i32, i32, i32, i32
  }
}

</mosaic_0001>

<llo_original>
// kernel: tpu_custom_call.1
$region0: #{tpu_custom_call.1}
  #allocation0 [shape = 'u32[]', space=smem, size = 0x4, offset = 0x4, fixed_abs, tag = 'smem constant byte address 0x4 - core index']
  #allocation1 [shape = 'u32[144,128]{1,0:T(1,128)}', space=vmem, size = 0x12000, scoped, tag = 'internal scratch']
  #allocation2 [shape = 's32[1]{0:T(128)S(6)}', space=smem, size = 0x200, scoped, tag = 'scoped memory for tpu_custom_call.1']
  %s0 = inlined_call_operand.vmem [shape: f32[2,16,1], index: 0, kind: input, shape index: {}]
  %s1 = inlined_call_operand.vmem [shape: f32[2,16,1], index: 1, kind: input, shape index: {}]
  %s2 = inlined_call_operand.vmem [shape: f32[9], index: 2, kind: input, shape index: {}]
  %s3 = inlined_call_operand.vmem [shape: f32[9], index: 3, kind: input, shape index: {}]
  %s4 = inlined_call_operand.<no memory space> [shape: s32[1], index: 4, kind: input, shape index: {}]
  %s5 = inlined_call_operand.hbm [shape: f32[2,9,16,16], index: 5, kind: output, shape index: {}]
  %s6 = sld [smem:[#allocation0]]
  $region61: #{tpu_custom_call.1} parent=0
    _
  %s8 = ssub.s32 1, %s6
  %s9 = scalar_select 0, %s8, %s6
  %10 = sst [smem:[#allocation2]] %s4
  $region1: #{tpu_custom_call.1} parent=0
    #allocation3 [shape = 'u8[512]{0}', space=smem, size = 0x200, scoped, tag = 'input window, operand 2, single buffered']
    #allocation4 [shape = 's32[2]{0}', space=sflag, size = 0x8, scoped, tag = 'scoped memory for tpu_custom_call.1']
    #allocation5 [shape = 's32[2]{0}', space=sflag, size = 0x8, scoped, tag = 'scoped memory for tpu_custom_call.1']
    #allocation6 [shape = 'u8[512]{0}', space=smem, size = 0x200, scoped, tag = 'input window, operand 3, single buffered']
    #allocation7 [shape = 's32[1]{0}', space=sflag, size = 0x4, scoped, tag = 'scoped memory for tpu_custom_call.1']
    #allocation8 [shape = 'u8[147456]{0}', space=vmem, size = 0x24000, scoped, tag = 'output window, operand 0']
    %11 = vsyncpa [#allocation5], 0
    %12 = vsyncpa [#allocation7], 0
    %13 = vsyncpa [#allocation4], 0
    %s14 = scalar_lea.sflag [#allocation4], 1
    %15 = vsyncpa %s14, 0
    loop: start=0, step=1, limit=4
    $region2: #{tpu_custom_call.1} parent=1 // loop_pre_header
      _
    $region3: #{tpu_custom_call.1} parent=1 // loop_header
      %s17 = sphi 0, %s21
      %p18 = scmp.ge.s32.totalorder %s17, 4
      %s24 = sphi 0, %s36
      %s25 = sphi 0, %s32
      %s26 = sphi 0, %s24
      %s27 = sphi 0, %s25
      %s28 = sphi 0, %s26
      %s29 = sphi 0, %s27
      %s41 = sphi 0, %s43
      %s44 = sphi 0, %s41
      %s45 = sphi 0, %s44
      %s61 = sphi 0, %s45
      %s69 = sphi 0, %s71
      %s72 = sphi 0, %s69
      %s73 = sphi 0, %s72
      %s89 = sphi 0, %s73
      %s93 = sphi 0, %s93
      %s95 = sphi 0, %s93
      %s96 = sphi 0, %s95
      %s110 = sphi 0, %s96
      %s114 = sphi 0, %s114
      %s116 = sphi 0, %s114
      %s117 = sphi 0, %s116
      %s131 = sphi 0, %s117
      %s135 = sphi 0, %s135
      %s137 = sphi 0, %s135
      %s138 = sphi 0, %s137
      %s152 = sphi 0, %s138
      %s160 = sphi 0, %s162
      %s163 = sphi 0, %s160
      %s164 = sphi 0, %s163
      %s180 = sphi 0, %s164
    $region4: #{tpu_custom_call.1} parent=1 // loop_header_branch
      %20 = sbr.rel (%p18) target = $region8
    $region5: #{tpu_custom_call.1} parent=1 // loop_body
      %s22 = ssub.s32 %s17, 1
      %s23 = ssub.s32 %s17, 2
      %s30 = sadd.s32 1, %s25
      %p31 = scmp.ge.s32.totalorder %s30, 1
      %s32 = scalar_select %p31, 0, %s30
      %s33 = sadd.s32 1, %s24
      %s34 = scalar_select %p31, %s33, %s24
      %p35 = scmp.ge.s32.totalorder %s34, 2
      %s36 = scalar_select %p35, 0, %s34
      %s37 = ssub.s32 %s24, %s36
      %s38 = ssub.s32 %s25, %s32
      %s39 = sor.u32 %s37, %s38
      %p40 = scmp.eq.s32.totalorder %s39, 0
      %s42 = sadd.s32 %s41, 1
      %s43 = scalar_select %p40, %s41, %s42
      %p46 = pneg %p40
      %p47 = scmp.eq.s32.totalorder %s17, 1
      %p48 = por %p46, %p47
      %p49 = scmp.ne.s32.totalorder %s41, %s44
      %p50 = scmp.eq.s32.totalorder %s17, 0
      %p51 = por %p49, %p50
      %p52 = scmp.ne.s32.totalorder %s41, %s44
      %p53 = scmp.eq.s32.totalorder %s22, 1
      %p54 = por %p52, %p53
      %p55 = scmp.ne.s32.totalorder %s44, %s45
      %p56 = scmp.eq.s32.totalorder %s22, 0
      %p57 = por %p55, %p56
      %p58 = scmp.ne.s32.totalorder %s44, %s45
      %p59 = scmp.eq.s32.totalorder %s23, 1
      %p60 = por %p58, %p59
      %p62 = scmp.ne.s32.totalorder %s45, %s61
      %p63 = scmp.eq.s32.totalorder %s23, 0
      %p64 = por %p62, %p63
      %s65 = ssub.s32 %s24, %s36
      %s66 = ssub.s32 %s25, %s32
      %s67 = sor.u32 %s65, %s66
      %p68 = scmp.eq.s32.totalorder %s67, 0
      %s70 = sadd.s32 %s69, 1
      %s71 = scalar_select %p68, %s69, %s70
      %p74 = pneg %p68
      %p75 = scmp.eq.s32.totalorder %s17, 1
      %p76 = por %p74, %p75
      %p77 = scmp.ne.s32.totalorder %s69, %s72
      %p78 = scmp.eq.s32.totalorder %s17, 0
      %p79 = por %p77, %p78
      %p80 = scmp.ne.s32.totalorder %s69, %s72
      %p81 = scmp.eq.s32.totalorder %s22, 1
      %p82 = por %p80, %p81
      %p83 = scmp.ne.s32.totalorder %s72, %s73
      %p84 = scmp.eq.s32.totalorder %s22, 0
      %p85 = por %p83, %p84
      %p86 = scmp.ne.s32.totalorder %s72, %s73
      %p87 = scmp.eq.s32.totalorder %s23, 1
      %p88 = por %p86, %p87
      %p90 = scmp.ne.s32.totalorder %s73, %s89
      %p91 = scmp.eq.s32.totalorder %s23, 0
      %p92 = por %p90, %p91
      %s94 = sadd.s32 %s93, 1
      %p97 = scmp.eq.s32.totalorder %s17, 1
      %p98 = scmp.ne.s32.totalorder %s93, %s95
      %p99 = scmp.eq.s32.totalorder %s17, 0
      %p100 = por %p98, %p99
      %p101 = scmp.ne.s32.totalorder %s93, %s95
      %p102 = scmp.eq.s32.totalorder %s22, 1
      %p103 = por %p101, %p102
      %p104 = scmp.ne.s32.totalorder %s95, %s96
      %p105 = scmp.eq.s32.totalorder %s22, 0
      %p106 = por %p104, %p105
      %p107 = scmp.ne.s32.totalorder %s95, %s96
      %p108 = scmp.eq.s32.totalorder %s23, 1
      %p109 = por %p107, %p108
      %p111 = scmp.ne.s32.totalorder %s96, %s110
      %p112 = scmp.eq.s32.totalorder %s23, 0
      %p113 = por %p111, %p112
      %s115 = sadd.s32 %s114, 1
      %p118 = scmp.eq.s32.totalorder %s17, 1
      %p119 = scmp.ne.s32.totalorder %s114, %s116
      %p120 = scmp.eq.s32.totalorder %s17, 0
      %p121 = por %p119, %p120
      %p122 = scmp.ne.s32.totalorder %s114, %s116
      %p123 = scmp.eq.s32.totalorder %s22, 1
      %p124 = por %p122, %p123
      %p125 = scmp.ne.s32.totalorder %s116, %s117
      %p126 = scmp.eq.s32.totalorder %s22, 0
      %p127 = por %p125, %p126
      %p128 = scmp.ne.s32.totalorder %s116, %s117
      %p129 = scmp.eq.s32.totalorder %s23, 1
      %p130 = por %p128, %p129
      %p132 = scmp.ne.s32.totalorder %s117, %s131
      %p133 = scmp.eq.s32.totalorder %s23, 0
      %p134 = por %p132, %p133
      %s136 = sadd.s32 %s135, 1
      %p139 = scmp.eq.s32.totalorder %s17, 1
      %p140 = scmp.ne.s32.totalorder %s135, %s137
      %p141 = scmp.eq.s32.totalorder %s17, 0
      %p142 = por %p140, %p141
      %p143 = scmp.ne.s32.totalorder %s135, %s137
      %p144 = scmp.eq.s32.totalorder %s22, 1
      %p145 = por %p143, %p144
      %p146 = scmp.ne.s32.totalorder %s137, %s138
      %p147 = scmp.eq.s32.totalorder %s22, 0
      %p148 = por %p146, %p147
      %p149 = scmp.ne.s32.totalorder %s137, %s138
      %p150 = scmp.eq.s32.totalorder %s23, 1
      %p151 = por %p149, %p150
      %p153 = scmp.ne.s32.totalorder %s138, %s152
      %p154 = scmp.eq.s32.totalorder %s23, 0
      %p155 = por %p153, %p154
      %s156 = ssub.s32 %s24, %s36
      %s157 = ssub.s32 %s25, %s32
      %s158 = sor.u32 %s156, %s157
      %p159 = scmp.eq.s32.totalorder %s158, 0
      %s161 = sadd.s32 %s160, 1
      %s162 = scalar_select %p159, %s160, %s161
      %p165 = pneg %p159
      %p166 = scmp.eq.s32.totalorder %s17, 1
      %p167 = por %p165, %p166
      %p168 = scmp.ne.s32.totalorder %s160, %s163
      %p169 = scmp.eq.s32.totalorder %s17, 0
      %p170 = por %p168, %p169
      %p171 = scmp.ne.s32.totalorder %s160, %s163
      %p172 = scmp.eq.s32.totalorder %s22, 1
      %p173 = por %p171, %p172
      %p174 = scmp.ne.s32.totalorder %s163, %s164
      %p175 = scmp.eq.s32.totalorder %s22, 0
      %p176 = por %p174, %p175
      %p177 = scmp.ne.s32.totalorder %s163, %s164
      %p178 = scmp.eq.s32.totalorder %s23, 1
      %p179 = por %p177, %p178
      %p181 = scmp.ne.s32.totalorder %s164, %s180
      %p182 = scmp.eq.s32.totalorder %s23, 0
      %p183 = por %p181, %p182
      %p184 = scmp.le.s32.totalorder 1, %s17
      %p185 = scmp.lt.s32.totalorder %s17, 3
      %p186 = pnand %p184, %p185
      %p187 = pneg %p186
      // Predicated region
      $region9: #{tpu_custom_call.1} parent=5 // pred_check
        _
      $region10: #{tpu_custom_call.1} parent=5 // pred_check_branch
        %189 = sbr.rel (%p186) target = $region12
      $region11: #{tpu_custom_call.1} parent=5 // pred_region
        %s190 = ssub.s32 %s17, 1
        // Predicated region
        $region13: #{tpu_custom_call.1} parent=11 // pred_check
          %p191 = pneg %p106
        $region14: #{tpu_custom_call.1} parent=11 // pred_check_branch
          %193 = sbr.rel (%p191) target = $region16
        $region15: #{tpu_custom_call.1} parent=11 // pred_region
          %s195 = ssub.s32 16, 16
          %196 = vsyncadd [#allocation5], %s195
          %s198 = sshll.u32 %s2, 4
          %s199 = int_to_ptr.vmem [resolvable:$true] %s198
          %201 = dma.vmem_to_smem %s199, 16, [#allocation3], [#allocation5]
        $region16: #{tpu_custom_call.1} parent=11 // pred_fallthru
          _
        // Predicated region
        $region17: #{tpu_custom_call.1} parent=11 // pred_check
          %p202 = pneg %p127
        $region18: #{tpu_custom_call.1} parent=11 // pred_check_branch
          %204 = sbr.rel (%p202) target = $region20
        $region19: #{tpu_custom_call.1} parent=11 // pred_region
          %s206 = ssub.s32 16, 16
          %207 = vsyncadd [#allocation7], %s206
          %s209 = sshll.u32 %s3, 4
          %s210 = int_to_ptr.vmem [resolvable:$true] %s209
          %212 = dma.vmem_to_smem %s210, 16, [#allocation6], [#allocation7]
        $region20: #{tpu_custom_call.1} parent=11 // pred_fallthru
          _
        // Predicated region
        $region21: #{tpu_custom_call.1} parent=11 // pred_check
          %p213 = pneg %p148
        $region22: #{tpu_custom_call.1} parent=11 // pred_check_branch
          %215 = sbr.rel (%p213) target = $region24
        $region23: #{tpu_custom_call.1} parent=11 // pred_region
          _
        $region24: #{tpu_custom_call.1} parent=11 // pred_fallthru
          _
      $region12: #{tpu_custom_call.1} parent=5 // pred_fallthru
        _
      %p216 = scmp.lt.s32.totalorder %s17, 2
      // Predicated region
      $region25: #{tpu_custom_call.1} parent=5 // pred_check
        %p217 = pneg %p216
      $region26: #{tpu_custom_call.1} parent=5 // pred_check_branch
        %219 = sbr.rel (%p217) target = $region28
      $region27: #{tpu_custom_call.1} parent=5 // pred_region
        // Predicated region
        $region29: #{tpu_custom_call.1} parent=27 // pred_check
          %p220 = pneg %p51
        $region30: #{tpu_custom_call.1} parent=27 // pred_check_branch
          %222 = sbr.rel (%p220) target = $region32
        $region31: #{tpu_custom_call.1} parent=27 // pred_region
          %s223 = smul.u32 2, %s25
          %p224 = scmp.lt.s32.totalorder %s24, 1
          %s225 = scalar_select %p224, %s24, 1
          %p226 = scmp.lt.s32.totalorder %s223, 1
          %s227 = scalar_select %p226, %s223, 1
          %s228 = smul.addr %s225, 2
          %s229 = sadd.s32 %s227, %s228
          %s230 = smul.addr %s229, 8
          %s231 = scalar_lea.vmem %s0, %s230
          %s232 = smul.u32 2, %s25
        $region32: #{tpu_custom_call.1} parent=27 // pred_fallthru
          _
        // Predicated region
        $region33: #{tpu_custom_call.1} parent=27 // pred_check
          %p233 = pneg %p79
        $region34: #{tpu_custom_call.1} parent=27 // pred_check_branch
          %235 = sbr.rel (%p233) target = $region36
        $region35: #{tpu_custom_call.1} parent=27 // pred_region
          %s236 = smul.u32 2, %s25
          %p237 = scmp.lt.s32.totalorder %s24, 1
          %s238 = scalar_select %p237, %s24, 1
          %p239 = scmp.lt.s32.totalorder %s236, 1
          %s240 = scalar_select %p239, %s236, 1
          %s241 = smul.addr %s238, 2
          %s242 = sadd.s32 %s240, %s241
          %s243 = smul.addr %s242, 8
          %s244 = scalar_lea.vmem %s1, %s243
          %s245 = smul.u32 2, %s25
        $region36: #{tpu_custom_call.1} parent=27 // pred_fallthru
          _
      $region28: #{tpu_custom_call.1} parent=5 // pred_fallthru
        _
      %p246 = scmp.le.s32.totalorder 1, %s17
      %p247 = scmp.lt.s32.totalorder %s17, 3
      %p248 = pnand %p246, %p247
      %p249 = pneg %p248
      // Predicated region
      $region37: #{tpu_custom_call.1} parent=5 // pred_check
        _
      $region38: #{tpu_custom_call.1} parent=5 // pred_check_branch
        %251 = sbr.rel (%p248) target = $region40
      $region39: #{tpu_custom_call.1} parent=5 // pred_region
        %s252 = ssub.s32 %s17, 1
        // Predicated region
        $region41: #{tpu_custom_call.1} parent=39 // pred_check
          %p253 = pneg %p106
        $region42: #{tpu_custom_call.1} parent=39 // pred_check_branch
          %255 = sbr.rel (%p253) target = $region44
        $region43: #{tpu_custom_call.1} parent=39 // pred_region
          %256 = dma.done [#allocation5], 16
        $region44: #{tpu_custom_call.1} parent=39 // pred_fallthru
          _
        // Predicated region
        $region45: #{tpu_custom_call.1} parent=39 // pred_check
          %p257 = pneg %p127
        $region46: #{tpu_custom_call.1} parent=39 // pred_check_branch
          %259 = sbr.rel (%p257) target = $region48
        $region47: #{tpu_custom_call.1} parent=39 // pred_region
          %260 = dma.done [#allocation7], 16
        $region48: #{tpu_custom_call.1} parent=39 // pred_fallthru
          _
        %261 = sfence
        %s262 = smul.u32 2, %s27
        %p263 = scmp.lt.s32.totalorder %s26, 1
        %s264 = scalar_select %p263, %s26, 1
        %p265 = scmp.lt.s32.totalorder %s262, 1
        %s266 = scalar_select %p265, %s262, 1
        %s267 = smul.addr %s264, 2
        %s268 = sadd.s32 %s266, %s267
        %s269 = smul.addr %s268, 8
        %s270 = scalar_lea.vmem %s0, %s269
        %p271 = pneg %p57
        %p272 = pneg %p54
        %s273 = smul.u32 2, %s27
        %p274 = scmp.lt.s32.totalorder %s26, 1
        %s275 = scalar_select %p274, %s26, 1
        %p276 = scmp.lt.s32.totalorder %s273, 1
        %s277 = scalar_select %p276, %s273, 1
        %s278 = smul.addr %s275, 2
        %s279 = sadd.s32 %s277, %s278
        %s280 = smul.addr %s279, 8
        %s281 = scalar_lea.vmem %s1, %s280
        %p282 = pneg %p85
        %p283 = pneg %p82
        %p284 = pneg %p106
        %p285 = pneg %p103
        %p286 = pneg %p127
        %p287 = pneg %p124
        %p288 = pneg %p148
        %p289 = pneg %p145
        %p290 = pneg %p176
        %p291 = pneg %p173
        %s292 = sand.u32 %s163, 1
        %s293 = scalar_lea.sflag [#allocation4], %s292
        %s294 = sand.u32 %s163, 1
        %s295 = smul.addr %s294, 144
        %s296 = scalar_lea.vmem [#allocation8], %s295
        %s297 = smul.u32 2, %s27
        %p298 = scmp.lt.s32.totalorder %s26, 1
        %s299 = scalar_select %p298, %s26, 1
        %p300 = scmp.lt.s32.totalorder %s297, 1
        %s301 = scalar_select %p300, %s297, 1
        %s302 = smul.addr %s299, 2
        %s303 = sadd.s32 %s301, %s302
        %s304 = smul.addr %s303, 8
        %s305 = scalar_lea.vmem %s0, %s304
        %s306 = smul.u32 2, %s27
        %s307 = smul.u32 2, %s27
        %p308 = scmp.lt.s32.totalorder %s26, 1
        %s309 = scalar_select %p308, %s26, 1
        %p310 = scmp.lt.s32.totalorder %s307, 1
        %s311 = scalar_select %p310, %s307, 1
        %s312 = smul.addr %s309, 2
        %s313 = sadd.s32 %s311, %s312
        %s314 = smul.addr %s313, 8
        %s315 = scalar_lea.vmem %s1, %s314
        %s316 = smul.u32 2, %s27
        %s317 = smul.u32 2, %s27
        %v318 = vld [vmem:[%s305] sm:$0xff]
        %v319 = vld [vmem:[%s305 + $0x8] sm:$0xff]
        %v320 = vld [vmem:[%s315] sm:$0xff]
        %v321 = vld [vmem:[%s315 + $0x8] sm:$0xff]
        %v322 = vlaneseq
        %v323 = vand.u32 %v322, 127
        %v324 = vadd.s32 %v323, 1
        %v325 = vcvt.s32.f32 %v324
        %v326 = vmul.f32 %v318, 6.25e-05
        %v327 = vmul.f32 %v319, 6.25e-05
        %329 = vset.pattern.permute.xlu0 0
        %330 = vperm.xlu0 %329, %v326
        %v331 = vpop.permute.xlu0 %330
        %334 = vset.pattern.permute.xlu0 0
        %335 = vperm.xlu0 %334, %v327
        %v336 = vpop.permute.xlu0 %335
        %v338 = vmul.f32 %v331, %v325
        %v339 = vmul.f32 %v336, %v325
        %341 = vset.pattern.permute.xlu0 0
        %342 = vperm.xlu0 %341, %v320
        %v343 = vpop.permute.xlu0 %342
        %346 = vset.pattern.permute.xlu0 0
        %347 = vperm.xlu0 %346, %v321
        %v348 = vpop.permute.xlu0 %347
        %v350 = vadd.f32 %v338, %v343
        %v351 = vadd.f32 %v339, %v348
        %v352 = vfloor.f32 %v350
        %v353 = vfloor.f32 %v351
        %v354 = vsub.f32 %v350, %v352
        %v355 = vsub.f32 %v351, %v353
        %v356 = vmul.f32 %v354, 6.2831855
        %v357 = vmul.f32 %v355, 6.2831855
        %v358 = vand.u32 2147483647, %v356
        %vm359 = vcmp.le.f32.partialorder %v358, 0.7853982
        %vm360 = vcmp.lt.s32.totalorder %v356, 0
        %v361 = vand.u32 %v356, 2139095040
        %v362 = vshrl.u32 %v361, 23
        %v363 = vsub.s32 %v362, 127
        %v364 = vand.u32 2147483647, %v356
        %v365 = vand.u32 %v364, 8388607
        %v366 = vor.u32 %v365, 8388608
        %v367 = vsub.s32 0, %v366
        %v368 = vadd.s32 %v363, 1
        %vm369 = vcmp.gt.s32.totalorder %v368, 0
        %v370 = vsel %vm369, %v368, 0
        %v371 = vshrl.u32 %v370, 5
        %v372 = vand.u32 %v370, 31
        %v373 = vsub.s32 32, %v372
        %v374 = vshrl.u32 683565275, %v373
        %v375 = vshll.u32 683565275, %v372
        %v376 = vshrl.u32 2475754826, %v373
        %v377 = vor.u32 %v375, %v376
        %v378 = vshll.u32 2475754826, %v372
        %v379 = vshrl.u32 2131351028, %v373
        %v380 = vor.u32 %v378, %v379
        %v381 = vshll.u32 2131351028, %v372
        %v382 = vshrl.u32 2102212464, %v373
        %v383 = vor.u32 %v381, %v382
        %v384 = vshll.u32 2102212464, %v372
        %v385 = vshrl.u32 920167782, %v373
        %v386 = vor.u32 %v384, %v385
        %v387 = vshll.u32 920167782, %v372
        %v388 = vshrl.u32 1326507024, %v373
        %v389 = vor.u32 %v387, %v388
        %vm390 = vcmp.lt.s32.totalorder %v371, 1
        %vm391 = vcmp.lt.s32.totalorder %v371, 2
        %vm392 = vcmp.lt.s32.totalorder %v371, 3
        %vm393 = vcmp.lt.s32.totalorder %v371, 4
        %v394 = vsel %vm390, %v374, %v377
        %v395 = vsel %vm393, %v383, 2102212464
        %v396 = vsel %vm392, %v380, %v395
        %v397 = vsel %vm391, %v394, %v396
        %v398 = vsel %vm390, %v377, %v380
        %v399 = vsel %vm393, %v386, 920167782
        %v400 = vsel %vm392, %v383, %v399
        %v401 = vsel %vm391, %v398, %v400
        %v402 = vsel %vm390, %v380, %v383
        %v403 = vsel %vm393, %v389, 1326507024
        %v404 = vsel %vm392, %v386, %v403
        %v405 = vsel %vm391, %v402, %v404
        %v406 = vshll.u32 %v366, 8
        %v407 = vmul.u32.u64.compose %v406, %v405
        %v408 = vextract.low.u32 %v407
        %v409 = vextract.high.u32 %v407
        %v410 = vmul.u32.u64.compose %v406, %v401
        %v411 = vextract.low.u32 %v410
        %v412 = vextract.high.u32 %v410
        %v413 = vmul.u32 %v406, %v397
        %v414 = vadd.s32 %v409, %v411
        %vm415 = vc.u32 %v409, %v411
        %v416 = vadd.s32 %v412, 1
        %v417 = vsel %vm415, %v416, %v412
        %v418 = vadd.s32 %v413, %v417
        %v419 = vadd.s32 %v418, 536870912
        %v420 = vshrl.u32 %v419, 30
        %v421 = vshll.u32 %v420, 30
        %v422 = vsub.s32 %v418, %v421
        %vm423 = vcmp.lt.s32.totalorder %v422, 0
        %v424 = vsub.s32 0, %v422
        %v425 = vsel %vm423, %v424, %v422
        %v426 = vclz %v425
        %v427 = vsub.s32 %v426, 2
        %vm428 = vcmp.gt.s32.totalorder 0, %v427
        %v429 = vsel %vm428, 0, %v427
        %v430 = vsub.s32 32, %v429
        %v431 = vshll.u32 %v422, %v429
        %v432 = vshrl.u32 %v414, %v430
        %v433 = vor.u32 %v431, %v432
        %v434 = vsub.s32 4294967266, %v429
        %v435 = vadd.s32 %v434, 127
        %v436 = vshll.u32 %v435, 23
        %v437 = vor.u32 4788187, %v436
        %v438 = vand.u32 2147483647, %v437
        %v440 = vcvt.s32.f32 %v433
        %v441 = vmul.f32 %v440, %v438
        %v442 = vxor.u32 %v441, 2147483648
        %v443 = vsel %vm360, %v442, %v441
        %v444 = vsub.s32 4, %v420
        %v445 = vsel %vm360, %v444, %v420
        %v446 = vsel %vm359, %v356, %v443
        %v447 = vsel %vm359, 0, %v445
        %v448 = vcosq.f32.pop %v446
        %v449 = vsinq.f32.pop %v446
        %vm450 = vweird.f32 %v356
        %v451 = vadd.s32 %v447, 3
        %v452 = vand.u32 %v451, 3
        %vm453 = vcmp.lt.s32.totalorder %v452, 2
        %vm454 = vcmp.eq.s32.totalorder %v452, 0
        %v455 = vxor.u32 %v449, 2147483648
        %v456 = vsel %vm454, %v448, %v455
        %vm457 = vcmp.eq.s32.totalorder %v452, 2
        %v458 = vxor.u32 %v448, 2147483648
        %v459 = vsel %vm457, %v458, %v449
        %v460 = vsel %vm453, %v456, %v459
        %v461 = vsel %vm450, nan, %v460
        %v462 = vand.u32 2147483647, %v357
        %vm463 = vcmp.le.f32.partialorder %v462, 0.7853982
        %vm464 = vcmp.lt.s32.totalorder %v357, 0
        %v465 = vand.u32 %v357, 2139095040
        %v466 = vshrl.u32 %v465, 23
        %v467 = vsub.s32 %v466, 127
        %v468 = vand.u32 2147483647, %v357
        %v469 = vand.u32 %v468, 8388607
        %v470 = vor.u32 %v469, 8388608
        %v471 = vsub.s32 0, %v470
        %v472 = vadd.s32 %v467, 1
        %vm473 = vcmp.gt.s32.totalorder %v472, 0
        %v474 = vsel %vm473, %v472, 0
        %v475 = vshrl.u32 %v474, 5
        %v476 = vand.u32 %v474, 31
        %v477 = vsub.s32 32, %v476
        %v478 = vshrl.u32 683565275, %v477
        %v479 = vshll.u32 683565275, %v476
        %v480 = vshrl.u32 2475754826, %v477
        %v481 = vor.u32 %v479, %v480
        %v482 = vshll.u32 2475754826, %v476
        %v483 = vshrl.u32 2131351028, %v477
        %v484 = vor.u32 %v482, %v483
        %v485 = vshll.u32 2131351028, %v476
        %v486 = vshrl.u32 2102212464, %v477
        %v487 = vor.u32 %v485, %v486
        %v488 = vshll.u32 2102212464, %v476
        %v489 = vshrl.u32 920167782, %v477
        %v490 = vor.u32 %v488, %v489
        %v491 = vshll.u32 920167782, %v476
        %v492 = vshrl.u32 1326507024, %v477
        %v493 = vor.u32 %v491, %v492
        %vm494 = vcmp.lt.s32.totalorder %v475, 1
        %vm495 = vcmp.lt.s32.totalorder %v475, 2
        %vm496 = vcmp.lt.s32.totalorder %v475, 3
        %vm497 = vcmp.lt.s32.totalorder %v475, 4
        %v498 = vsel %vm494, %v478, %v481
        %v499 = vsel %vm497, %v487, 2102212464
        %v500 = vsel %vm496, %v484, %v499
        %v501 = vsel %vm495, %v498, %v500
        %v502 = vsel %vm494, %v481, %v484
        %v503 = vsel %vm497, %v490, 920167782
        %v504 = vsel %vm496, %v487, %v503
        %v505 = vsel %vm495, %v502, %v504
        %v506 = vsel %vm494, %v484, %v487
        %v507 = vsel %vm497, %v493, 1326507024
        %v508 = vsel %vm496, %v490, %v507
        %v509 = vsel %vm495, %v506, %v508
        %v510 = vshll.u32 %v470, 8
        %v511 = vmul.u32.u64.compose %v510, %v509
        %v512 = vextract.low.u32 %v511
        %v513 = vextract.high.u32 %v511
        %v514 = vmul.u32.u64.compose %v510, %v505
        %v515 = vextract.low.u32 %v514
        %v516 = vextract.high.u32 %v514
        %v517 = vmul.u32 %v510, %v501
        %v518 = vadd.s32 %v513, %v515
        %vm519 = vc.u32 %v513, %v515
        %v520 = vadd.s32 %v516, 1
        %v521 = vsel %vm519, %v520, %v516
        %v522 = vadd.s32 %v517, %v521
        %v523 = vadd.s32 %v522, 536870912
        %v524 = vshrl.u32 %v523, 30
        %v525 = vshll.u32 %v524, 30
        %v526 = vsub.s32 %v522, %v525
        %vm527 = vcmp.lt.s32.totalorder %v526, 0
        %v528 = vsub.s32 0, %v526
        %v529 = vsel %vm527, %v528, %v526
        %v530 = vclz %v529
        %v531 = vsub.s32 %v530, 2
        %vm532 = vcmp.gt.s32.totalorder 0, %v531
        %v533 = vsel %vm532, 0, %v531
        %v534 = vsub.s32 32, %v533
        %v535 = vshll.u32 %v526, %v533
        %v536 = vshrl.u32 %v518, %v534
        %v537 = vor.u32 %v535, %v536
        %v538 = vsub.s32 4294967266, %v533
        %v539 = vadd.s32 %v538, 127
        %v540 = vshll.u32 %v539, 23
        %v541 = vor.u32 4788187, %v540
        %v542 = vand.u32 2147483647, %v541
        %v544 = vcvt.s32.f32 %v537
        %v545 = vmul.f32 %v544, %v542
        %v546 = vxor.u32 %v545, 2147483648
        %v547 = vsel %vm464, %v546, %v545
        %v548 = vsub.s32 4, %v524
        %v549 = vsel %vm464, %v548, %v524
        %v550 = vsel %vm463, %v357, %v547
        %v551 = vsel %vm463, 0, %v549
        %v552 = vcosq.f32.pop %v550
        %v553 = vsinq.f32.pop %v550
        %vm554 = vweird.f32 %v357
        %v555 = vadd.s32 %v551, 3
        %v556 = vand.u32 %v555, 3
        %vm557 = vcmp.lt.s32.totalorder %v556, 2
        %vm558 = vcmp.eq.s32.totalorder %v556, 0
        %v559 = vxor.u32 %v553, 2147483648
        %v560 = vsel %vm558, %v552, %v559
        %vm561 = vcmp.eq.s32.totalorder %v556, 2
        %v562 = vxor.u32 %v552, 2147483648
        %v563 = vsel %vm561, %v562, %v553
        %v564 = vsel %vm557, %v560, %v563
        %v565 = vsel %vm554, nan, %v564
        %v566 = vand.u32 2147483647, %v356
        %vm567 = vcmp.le.f32.partialorder %v566, 0.7853982
        %vm568 = vcmp.lt.s32.totalorder %v356, 0
        %v569 = vand.u32 %v356, 2139095040
        %v570 = vshrl.u32 %v569, 23
        %v571 = vsub.s32 %v570, 127
        %v572 = vand.u32 2147483647, %v356
        %v573 = vand.u32 %v572, 8388607
        %v574 = vor.u32 %v573, 8388608
        %v575 = vsub.s32 0, %v574
        %v576 = vadd.s32 %v571, 1
        %vm577 = vcmp.gt.s32.totalorder %v576, 0
        %v578 = vsel %vm577, %v576, 0
        %v579 = vshrl.u32 %v578, 5
        %v580 = vand.u32 %v578, 31
        %v581 = vsub.s32 32, %v580
        %v582 = vshrl.u32 683565275, %v581
        %v583 = vshll.u32 683565275, %v580
        %v584 = vshrl.u32 2475754826, %v581
        %v585 = vor.u32 %v583, %v584
        %v586 = vshll.u32 2475754826, %v580
        %v587 = vshrl.u32 2131351028, %v581
        %v588 = vor.u32 %v586, %v587
        %v589 = vshll.u32 2131351028, %v580
        %v590 = vshrl.u32 2102212464, %v581
        %v591 = vor.u32 %v589, %v590
        %v592 = vshll.u32 2102212464, %v580
        %v593 = vshrl.u32 920167782, %v581
        %v594 = vor.u32 %v592, %v593
        %v595 = vshll.u32 920167782, %v580
        %v596 = vshrl.u32 1326507024, %v581
        %v597 = vor.u32 %v595, %v596
        %vm598 = vcmp.lt.s32.totalorder %v579, 1
        %vm599 = vcmp.lt.s32.totalorder %v579, 2
        %vm600 = vcmp.lt.s32.totalorder %v579, 3
        %vm601 = vcmp.lt.s32.totalorder %v579, 4
        %v602 = vsel %vm598, %v582, %v585
        %v603 = vsel %vm601, %v591, 2102212464
        %v604 = vsel %vm600, %v588, %v603
        %v605 = vsel %vm599, %v602, %v604
        %v606 = vsel %vm598, %v585, %v588
        %v607 = vsel %vm601, %v594, 920167782
        %v608 = vsel %vm600, %v591, %v607
        %v609 = vsel %vm599, %v606, %v608
        %v610 = vsel %vm598, %v588, %v591
        %v611 = vsel %vm601, %v597, 1326507024
        %v612 = vsel %vm600, %v594, %v611
        %v613 = vsel %vm599, %v610, %v612
        %v614 = vshll.u32 %v574, 8
        %v615 = vmul.u32.u64.compose %v614, %v613
        %v616 = vextract.low.u32 %v615
        %v617 = vextract.high.u32 %v615
        %v618 = vmul.u32.u64.compose %v614, %v609
        %v619 = vextract.low.u32 %v618
        %v620 = vextract.high.u32 %v618
        %v621 = vmul.u32 %v614, %v605
        %v622 = vadd.s32 %v617, %v619
        %vm623 = vc.u32 %v617, %v619
        %v624 = vadd.s32 %v620, 1
        %v625 = vsel %vm623, %v624, %v620
        %v626 = vadd.s32 %v621, %v625
        %v627 = vadd.s32 %v626, 536870912
        %v628 = vshrl.u32 %v627, 30
        %v629 = vshll.u32 %v628, 30
        %v630 = vsub.s32 %v626, %v629
        %vm631 = vcmp.lt.s32.totalorder %v630, 0
        %v632 = vsub.s32 0, %v630
        %v633 = vsel %vm631, %v632, %v630
        %v634 = vclz %v633
        %v635 = vsub.s32 %v634, 2
        %vm636 = vcmp.gt.s32.totalorder 0, %v635
        %v637 = vsel %vm636, 0, %v635
        %v638 = vsub.s32 32, %v637
        %v639 = vshll.u32 %v630, %v637
        %v640 = vshrl.u32 %v622, %v638
        %v641 = vor.u32 %v639, %v640
        %v642 = vsub.s32 4294967266, %v637
        %v643 = vadd.s32 %v642, 127
        %v644 = vshll.u32 %v643, 23
        %v645 = vor.u32 4788187, %v644
        %v646 = vand.u32 2147483647, %v645
        %v648 = vcvt.s32.f32 %v641
        %v649 = vmul.f32 %v648, %v646
        %v650 = vxor.u32 %v649, 2147483648
        %v651 = vsel %vm568, %v650, %v649
        %v652 = vsub.s32 4, %v628
        %v653 = vsel %vm568, %v652, %v628
        %v654 = vsel %vm567, %v356, %v651
        %v655 = vsel %vm567, 0, %v653
        %v656 = vcosq.f32.pop %v654
        %v657 = vsinq.f32.pop %v654
        %vm658 = vweird.f32 %v356
        %v659 = vand.u32 %v655, 3
        %vm660 = vcmp.lt.s32.totalorder %v659, 2
        %vm661 = vcmp.eq.s32.totalorder %v659, 0
        %v662 = vxor.u32 %v657, 2147483648
        %v663 = vsel %vm661, %v656, %v662
        %vm664 = vcmp.eq.s32.totalorder %v659, 2
        %v665 = vxor.u32 %v656, 2147483648
        %v666 = vsel %vm664, %v665, %v657
        %v667 = vsel %vm660, %v663, %v666
        %v668 = vsel %vm658, nan, %v667
        %v669 = vand.u32 2147483647, %v357
        %vm670 = vcmp.le.f32.partialorder %v669, 0.7853982
        %vm671 = vcmp.lt.s32.totalorder %v357, 0
        %v672 = vand.u32 %v357, 2139095040
        %v673 = vshrl.u32 %v672, 23
        %v674 = vsub.s32 %v673, 127
        %v675 = vand.u32 2147483647, %v357
        %v676 = vand.u32 %v675, 8388607
        %v677 = vor.u32 %v676, 8388608
        %v678 = vsub.s32 0, %v677
        %v679 = vadd.s32 %v674, 1
        %vm680 = vcmp.gt.s32.totalorder %v679, 0
        %v681 = vsel %vm680, %v679, 0
        %v682 = vshrl.u32 %v681, 5
        %v683 = vand.u32 %v681, 31
        %v684 = vsub.s32 32, %v683
        %v685 = vshrl.u32 683565275, %v684
        %v686 = vshll.u32 683565275, %v683
        %v687 = vshrl.u32 2475754826, %v684
        %v688 = vor.u32 %v686, %v687
        %v689 = vshll.u32 2475754826, %v683
        %v690 = vshrl.u32 2131351028, %v684
        %v691 = vor.u32 %v689, %v690
        %v692 = vshll.u32 2131351028, %v683
        %v693 = vshrl.u32 2102212464, %v684
        %v694 = vor.u32 %v692, %v693
        %v695 = vshll.u32 2102212464, %v683
        %v696 = vshrl.u32 920167782, %v684
        %v697 = vor.u32 %v695, %v696
        %v698 = vshll.u32 920167782, %v683
        %v699 = vshrl.u32 1326507024, %v684
        %v700 = vor.u32 %v698, %v699
        %vm701 = vcmp.lt.s32.totalorder %v682, 1
        %vm702 = vcmp.lt.s32.totalorder %v682, 2
        %vm703 = vcmp.lt.s32.totalorder %v682, 3
        %vm704 = vcmp.lt.s32.totalorder %v682, 4
        %v705 = vsel %vm701, %v685, %v688
        %v706 = vsel %vm704, %v694, 2102212464
        %v707 = vsel %vm703, %v691, %v706
        %v708 = vsel %vm702, %v705, %v707
        %v709 = vsel %vm701, %v688, %v691
        %v710 = vsel %vm704, %v697, 920167782
        %v711 = vsel %vm703, %v694, %v710
        %v712 = vsel %vm702, %v709, %v711
        %v713 = vsel %vm701, %v691, %v694
        %v714 = vsel %vm704, %v700, 1326507024
        %v715 = vsel %vm703, %v697, %v714
        %v716 = vsel %vm702, %v713, %v715
        %v717 = vshll.u32 %v677, 8
        %v718 = vmul.u32.u64.compose %v717, %v716
        %v719 = vextract.low.u32 %v718
        %v720 = vextract.high.u32 %v718
        %v721 = vmul.u32.u64.compose %v717, %v712
        %v722 = vextract.low.u32 %v721
        %v723 = vextract.high.u32 %v721
        %v724 = vmul.u32 %v717, %v708
        %v725 = vadd.s32 %v720, %v722
        %vm726 = vc.u32 %v720, %v722
        %v727 = vadd.s32 %v723, 1
        %v728 = vsel %vm726, %v727, %v723
        %v729 = vadd.s32 %v724, %v728
        %v730 = vadd.s32 %v729, 536870912
        %v731 = vshrl.u32 %v730, 30
        %v732 = vshll.u32 %v731, 30
        %v733 = vsub.s32 %v729, %v732
        %vm734 = vcmp.lt.s32.totalorder %v733, 0
        %v735 = vsub.s32 0, %v733
        %v736 = vsel %vm734, %v735, %v733
        %v737 = vclz %v736
        %v738 = vsub.s32 %v737, 2
        %vm739 = vcmp.gt.s32.totalorder 0, %v738
        %v740 = vsel %vm739, 0, %v738
        %v741 = vsub.s32 32, %v740
        %v742 = vshll.u32 %v733, %v740
        %v743 = vshrl.u32 %v725, %v741
        %v744 = vor.u32 %v742, %v743
        %v745 = vsub.s32 4294967266, %v740
        %v746 = vadd.s32 %v745, 127
        %v747 = vshll.u32 %v746, 23
        %v748 = vor.u32 4788187, %v747
        %v749 = vand.u32 2147483647, %v748
        %v751 = vcvt.s32.f32 %v744
        %v752 = vmul.f32 %v751, %v749
        %v753 = vxor.u32 %v752, 2147483648
        %v754 = vsel %vm671, %v753, %v752
        %v755 = vsub.s32 4, %v731
        %v756 = vsel %vm671, %v755, %v731
        %v757 = vsel %vm670, %v357, %v754
        %v758 = vsel %vm670, 0, %v756
        %v759 = vcosq.f32.pop %v757
        %v760 = vsinq.f32.pop %v757
        %vm761 = vweird.f32 %v357
        %v762 = vand.u32 %v758, 3
        %vm763 = vcmp.lt.s32.totalorder %v762, 2
        %vm764 = vcmp.eq.s32.totalorder %v762, 0
        %v765 = vxor.u32 %v760, 2147483648
        %v766 = vsel %vm764, %v759, %v765
        %vm767 = vcmp.eq.s32.totalorder %v762, 2
        %v768 = vxor.u32 %v759, 2147483648
        %v769 = vsel %vm767, %v768, %v760
        %v770 = vsel %vm763, %v766, %v769
        %v771 = vsel %vm761, nan, %v770
        %vm772 = vcmp.gt.f32.partialorder %v318, 0.0
        %vm773 = vcmp.gt.f32.partialorder %v319, 0.0
        %v774 = vsel %vm772, 1, 0
        %v775 = vsel %vm773, 1, 0
        %v776 = vcvt.s32.f32 %v774
        %v777 = vcvt.s32.f32 %v775
        %v778 = vmul.f32 %v776, 0.003
        %v779 = vmul.f32 %v777, 0.003
        %v780 = vsub.f32 1.0, %v776
        %v781 = vsub.f32 1.0, %v777
        %v782 = vmul.f32 %v780, 0.033333335
        %v783 = vmul.f32 %v781, 0.033333335
        %v784 = vadd.f32 %v778, %v782
        %v785 = vadd.f32 %v779, %v783
        %v786 = vmul.f32 %v776, 0.1
        %v787 = vmul.f32 %v777, 0.1
        %v788 = vlaneseq
        %v789 = vshrl.u32 %v788, 7
        %v790 = vadd.s32 %v789, 8
        %s791 = smul.u32 %s27, 16
        %v792 = vstv %s791
        %v793 = vadd.s32 %v792, %v789
        %v794 = vadd.s32 %v792, %v790
        %s795 = smul.u32 %s26, 16
        %v796 = vstv %s795
        %v797 = vadd.s32 %v796, %v793
        %v798 = vadd.s32 %v796, %v794
        %v799 = vmul.u32 %v797, 16
        %v800 = vmul.u32 %v798, 16
        %v801 = vadd.s32 %v799, %v323
        %v802 = vadd.s32 %v800, %v323
        %v803 = vmul.u32 %v801, 10
        %v804 = vmul.u32 %v802, 10
        %s805 = sld [smem:[#allocation2]]
        %v806 = vstv %s805
        %v807 = vadd.s32 %v803, %v806
        %v808 = vadd.s32 %v804, %v806
        %s809 = sld [smem:[#allocation3]]
        %v810 = vstv %s809
        %v811 = vmul.f32 %v461, %v810
        %v812 = vmul.f32 %v565, %v810
        %s813 = sld [smem:[#allocation6]]
        %v814 = vstv %s813
        %v815 = vmul.f32 %v668, %v814
        %v816 = vmul.f32 %v771, %v814
        %v817 = vadd.f32 %v811, %v815
        %v818 = vadd.f32 %v812, %v816
        %v819 = vadd.s32 %v807, 1
        %v820 = vadd.s32 %v808, 1
        %v821 = vshrl.u32 %v807, 16
        %v822 = vshrl.u32 %v808, 16
        %v823 = vxor.u32 %v807, %v821
        %v824 = vxor.u32 %v808, %v822
        %v825 = vmul.u32 %v823, 2146121005
        %v826 = vmul.u32 %v824, 2146121005
        %v827 = vshrl.u32 %v825, 15
        %v828 = vshrl.u32 %v826, 15
        %v829 = vxor.u32 %v825, %v827
        %v830 = vxor.u32 %v826, %v828
        %v831 = vmul.u32 %v829, 2221713035
        %v832 = vmul.u32 %v830, 2221713035
        %v833 = vshrl.u32 %v831, 16
        %v834 = vshrl.u32 %v832, 16
        %v835 = vxor.u32 %v831, %v833
        %v836 = vxor.u32 %v832, %v834
        %v837 = vand.u32 %v835, 8388607
        %v838 = vand.u32 %v836, 8388607
        %v839 = vcvt.s32.f32 %v837
        %v840 = vcvt.s32.f32 %v838
        %v841 = vadd.f32 %v839, 1.0
        %v842 = vadd.f32 %v840, 1.0
        %v843 = vmul.f32 %v841, 1.1920929e-07
        %v844 = vmul.f32 %v842, 1.1920929e-07
        %v845 = vshrl.u32 %v819, 16
        %v846 = vshrl.u32 %v820, 16
        %v847 = vxor.u32 %v819, %v845
        %v848 = vxor.u32 %v820, %v846
        %v849 = vmul.u32 %v847, 2146121005
        %v850 = vmul.u32 %v848, 2146121005
        %v851 = vshrl.u32 %v849, 15
        %v852 = vshrl.u32 %v850, 15
        %v853 = vxor.u32 %v849, %v851
        %v854 = vxor.u32 %v850, %v852
        %v855 = vmul.u32 %v853, 2221713035
        %v856 = vmul.u32 %v854, 2221713035
        %v857 = vshrl.u32 %v855, 16
        %v858 = vshrl.u32 %v856, 16
        %v859 = vxor.u32 %v855, %v857
        %v860 = vxor.u32 %v856, %v858
        %v861 = vand.u32 %v859, 8388607
        %v862 = vand.u32 %v860, 8388607
        %v863 = vcvt.s32.f32 %v861
        %v864 = vcvt.s32.f32 %v862
        %v865 = vmul.f32 %v863, 1.1920929e-07
        %v866 = vmul.f32 %v864, 1.1920929e-07
        %v867 = vlog2.pop %v843
        %v868 = vmul.f32 %v867, 0.6931472
        %v869 = vlog2.pop %v844
        %v870 = vmul.f32 %v869, 0.6931472
        %v871 = vmul.f32 %v868, -2.0
        %v872 = vmul.f32 %v870, -2.0
        %v873 = vrsqrt.pop %v871
        %v874 = vmul.f32 %v871, %v873
        %vm875 = vcmp.eq.f32.partialorder %v871, inf
        %v876 = vsel %vm875, %v871, %v874
        %vm877 = vcmp.eq.f32.partialorder %v871, 0.0
        %v878 = vand.u32 %v871, 2147483648
        %v879 = vsel %vm877, %v878, %v876
        %v880 = vrsqrt.pop %v872
        %v881 = vmul.f32 %v872, %v880
        %vm882 = vcmp.eq.f32.partialorder %v872, inf
        %v883 = vsel %vm882, %v872, %v881
        %vm884 = vcmp.eq.f32.partialorder %v872, 0.0
        %v885 = vand.u32 %v872, 2147483648
        %v886 = vsel %vm884, %v885, %v883
        %v887 = vmul.f32 %v865, 6.2831855
        %v888 = vmul.f32 %v866, 6.2831855
        %v889 = vand.u32 2147483647, %v887
        %vm890 = vcmp.le.f32.partialorder %v889, 0.7853982
        %vm891 = vcmp.lt.s32.totalorder %v887, 0
        %v892 = vand.u32 %v887, 2139095040
        %v893 = vshrl.u32 %v892, 23
        %v894 = vsub.s32 %v893, 127
        %v895 = vand.u32 2147483647, %v887
        %v896 = vand.u32 %v895, 8388607
        %v897 = vor.u32 %v896, 8388608
        %v898 = vsub.s32 0, %v897
        %v899 = vadd.s32 %v894, 1
        %vm900 = vcmp.gt.s32.totalorder %v899, 0
        %v901 = vsel %vm900, %v899, 0
        %v902 = vshrl.u32 %v901, 5
        %v903 = vand.u32 %v901, 31
        %v904 = vsub.s32 32, %v903
        %v905 = vshrl.u32 683565275, %v904
        %v906 = vshll.u32 683565275, %v903
        %v907 = vshrl.u32 2475754826, %v904
        %v908 = vor.u32 %v906, %v907
        %v909 = vshll.u32 2475754826, %v903
        %v910 = vshrl.u32 2131351028, %v904
        %v911 = vor.u32 %v909, %v910
        %v912 = vshll.u32 2131351028, %v903
        %v913 = vshrl.u32 2102212464, %v904
        %v914 = vor.u32 %v912, %v913
        %v915 = vshll.u32 2102212464, %v903
        %v916 = vshrl.u32 920167782, %v904
        %v917 = vor.u32 %v915, %v916
        %v918 = vshll.u32 920167782, %v903
        %v919 = vshrl.u32 1326507024, %v904
        %v920 = vor.u32 %v918, %v919
        %vm921 = vcmp.lt.s32.totalorder %v902, 1
        %vm922 = vcmp.lt.s32.totalorder %v902, 2
        %vm923 = vcmp.lt.s32.totalorder %v902, 3
        %vm924 = vcmp.lt.s32.totalorder %v902, 4
        %v925 = vsel %vm921, %v905, %v908
        %v926 = vsel %vm924, %v914, 2102212464
        %v927 = vsel %vm923, %v911, %v926
        %v928 = vsel %vm922, %v925, %v927
        %v929 = vsel %vm921, %v908, %v911
        %v930 = vsel %vm924, %v917, 920167782
        %v931 = vsel %vm923, %v914, %v930
        %v932 = vsel %vm922, %v929, %v931
        %v933 = vsel %vm921, %v911, %v914
        %v934 = vsel %vm924, %v920, 1326507024
        %v935 = vsel %vm923, %v917, %v934
        %v936 = vsel %vm922, %v933, %v935
        %v937 = vshll.u32 %v897, 8
        %v938 = vmul.u32.u64.compose %v937, %v936
        %v939 = vextract.low.u32 %v938
        %v940 = vextract.high.u32 %v938
        %v941 = vmul.u32.u64.compose %v937, %v932
        %v942 = vextract.low.u32 %v941
        %v943 = vextract.high.u32 %v941
        %v944 = vmul.u32 %v937, %v928
        %v945 = vadd.s32 %v940, %v942
        %vm946 = vc.u32 %v940, %v942
        %v947 = vadd.s32 %v943, 1
        %v948 = vsel %vm946, %v947, %v943
        %v949 = vadd.s32 %v944, %v948
        %v950 = vadd.s32 %v949, 536870912
        %v951 = vshrl.u32 %v950, 30
        %v952 = vshll.u32 %v951, 30
        %v953 = vsub.s32 %v949, %v952
        %vm954 = vcmp.lt.s32.totalorder %v953, 0
        %v955 = vsub.s32 0, %v953
        %v956 = vsel %vm954, %v955, %v953
        %v957 = vclz %v956
        %v958 = vsub.s32 %v957, 2
        %vm959 = vcmp.gt.s32.totalorder 0, %v958
        %v960 = vsel %vm959, 0, %v958
        %v961 = vsub.s32 32, %v960
        %v962 = vshll.u32 %v953, %v960
        %v963 = vshrl.u32 %v945, %v961
        %v964 = vor.u32 %v962, %v963
        %v965 = vsub.s32 4294967266, %v960
        %v966 = vadd.s32 %v965, 127
        %v967 = vshll.u32 %v966, 23
        %v968 = vor.u32 4788187, %v967
        %v969 = vand.u32 2147483647, %v968
        %v971 = vcvt.s32.f32 %v964
        %v972 = vmul.f32 %v971, %v969
        %v973 = vxor.u32 %v972, 2147483648
        %v974 = vsel %vm891, %v973, %v972
        %v975 = vsub.s32 4, %v951
        %v976 = vsel %vm891, %v975, %v951
        %v977 = vsel %vm890, %v887, %v974
        %v978 = vsel %vm890, 0, %v976
        %v979 = vcosq.f32.pop %v977
        %v980 = vsinq.f32.pop %v977
        %vm981 = vweird.f32 %v887
        %v982 = vand.u32 %v978, 3
        %vm983 = vcmp.lt.s32.totalorder %v982, 2
        %vm984 = vcmp.eq.s32.totalorder %v982, 0
        %v985 = vxor.u32 %v980, 2147483648
        %v986 = vsel %vm984, %v979, %v985
        %vm987 = vcmp.eq.s32.totalorder %v982, 2
        %v988 = vxor.u32 %v979, 2147483648
        %v989 = vsel %vm987, %v988, %v980
        %v990 = vsel %vm983, %v986, %v989
        %v991 = vsel %vm981, nan, %v990
        %v992 = vand.u32 2147483647, %v888
        %vm993 = vcmp.le.f32.partialorder %v992, 0.7853982
        %vm994 = vcmp.lt.s32.totalorder %v888, 0
        %v995 = vand.u32 %v888, 2139095040
        %v996 = vshrl.u32 %v995, 23
        %v997 = vsub.s32 %v996, 127
        %v998 = vand.u32 2147483647, %v888
        %v999 = vand.u32 %v998, 8388607
        %v1000 = vor.u32 %v999, 8388608
        %v1001 = vsub.s32 0, %v1000
        %v1002 = vadd.s32 %v997, 1
        %vm1003 = vcmp.gt.s32.totalorder %v1002, 0
        %v1004 = vsel %vm1003, %v1002, 0
        %v1005 = vshrl.u32 %v1004, 5
        %v1006 = vand.u32 %v1004, 31
        %v1007 = vsub.s32 32, %v1006
        %v1008 = vshrl.u32 683565275, %v1007
        %v1009 = vshll.u32 683565275, %v1006
        %v1010 = vshrl.u32 2475754826, %v1007
        %v1011 = vor.u32 %v1009, %v1010
        %v1012 = vshll.u32 2475754826, %v1006
        %v1013 = vshrl.u32 2131351028, %v1007
        %v1014 = vor.u32 %v1012, %v1013
        %v1015 = vshll.u32 2131351028, %v1006
        %v1016 = vshrl.u32 2102212464, %v1007
        %v1017 = vor.u32 %v1015, %v1016
        %v1018 = vshll.u32 2102212464, %v1006
        %v1019 = vshrl.u32 920167782, %v1007
        %v1020 = vor.u32 %v1018, %v1019
        %v1021 = vshll.u32 920167782, %v1006
        %v1022 = vshrl.u32 1326507024, %v1007
        %v1023 = vor.u32 %v1021, %v1022
        %vm1024 = vcmp.lt.s32.totalorder %v1005, 1
        %vm1025 = vcmp.lt.s32.totalorder %v1005, 2
        %vm1026 = vcmp.lt.s32.totalorder %v1005, 3
        %vm1027 = vcmp.lt.s32.totalorder %v1005, 4
        %v1028 = vsel %vm1024, %v1008, %v1011
        %v1029 = vsel %vm1027, %v1017, 2102212464
        %v1030 = vsel %vm1026, %v1014, %v1029
        %v1031 = vsel %vm1025, %v1028, %v1030
        %v1032 = vsel %vm1024, %v1011, %v1014
        %v1033 = vsel %vm1027, %v1020, 920167782
        %v1034 = vsel %vm1026, %v1017, %v1033
        %v1035 = vsel %vm1025, %v1032, %v1034
        %v1036 = vsel %vm1024, %v1014, %v1017
        %v1037 = vsel %vm1027, %v1023, 1326507024
        %v1038 = vsel %vm1026, %v1020, %v1037
        %v1039 = vsel %vm1025, %v1036, %v1038
        %v1040 = vshll.u32 %v1000, 8
        %v1041 = vmul.u32.u64.compose %v1040, %v1039
        %v1042 = vextract.low.u32 %v1041
        %v1043 = vextract.high.u32 %v1041
        %v1044 = vmul.u32.u64.compose %v1040, %v1035
        %v1045 = vextract.low.u32 %v1044
        %v1046 = vextract.high.u32 %v1044
        %v1047 = vmul.u32 %v1040, %v1031
        %v1048 = vadd.s32 %v1043, %v1045
        %vm1049 = vc.u32 %v1043, %v1045
        %v1050 = vadd.s32 %v1046, 1
        %v1051 = vsel %vm1049, %v1050, %v1046
        %v1052 = vadd.s32 %v1047, %v1051
        %v1053 = vadd.s32 %v1052, 536870912
        %v1054 = vshrl.u32 %v1053, 30
        %v1055 = vshll.u32 %v1054, 30
        %v1056 = vsub.s32 %v1052, %v1055
        %vm1057 = vcmp.lt.s32.totalorder %v1056, 0
        %v1058 = vsub.s32 0, %v1056
        %v1059 = vsel %vm1057, %v1058, %v1056
        %v1060 = vclz %v1059
        %v1061 = vsub.s32 %v1060, 2
        %vm1062 = vcmp.gt.s32.totalorder 0, %v1061
        %v1063 = vsel %vm1062, 0, %v1061
        %v1064 = vsub.s32 32, %v1063
        %v1065 = vshll.u32 %v1056, %v1063
        %v1066 = vshrl.u32 %v1048, %v1064
        %v1067 = vor.u32 %v1065, %v1066
        %v1068 = vsub.s32 4294967266, %v1063
        %v1069 = vadd.s32 %v1068, 127
        %v1070 = vshll.u32 %v1069, 23
        %v1071 = vor.u32 4788187, %v1070
        %v1072 = vand.u32 2147483647, %v1071
        %v1074 = vcvt.s32.f32 %v1067
        %v1075 = vmul.f32 %v1074, %v1072
        %v1076 = vxor.u32 %v1075, 2147483648
        %v1077 = vsel %vm994, %v1076, %v1075
        %v1078 = vsub.s32 4, %v1054
        %v1079 = vsel %vm994, %v1078, %v1054
        %v1080 = vsel %vm993, %v888, %v1077
        %v1081 = vsel %vm993, 0, %v1079
        %v1082 = vcosq.f32.pop %v1080
        %v1083 = vsinq.f32.pop %v1080
        %vm1084 = vweird.f32 %v888
        %v1085 = vand.u32 %v1081, 3
        %vm1086 = vcmp.lt.s32.totalorder %v1085, 2
        %vm1087 = vcmp.eq.s32.totalorder %v1085, 0
        %v1088 = vxor.u32 %v1083, 2147483648
        %v1089 = vsel %vm1087, %v1082, %v1088
        %vm1090 = vcmp.eq.s32.totalorder %v1085, 2
        %v1091 = vxor.u32 %v1082, 2147483648
        %v1092 = vsel %vm1090, %v1091, %v1083
        %v1093 = vsel %vm1086, %v1089, %v1092
        %v1094 = vsel %vm1084, nan, %v1093
        %v1095 = vmul.f32 %v879, %v991
        %v1096 = vmul.f32 %v886, %v1094
        %v1097 = vand.u32 2147483647, %v887
        %vm1098 = vcmp.le.f32.partialorder %v1097, 0.7853982
        %vm1099 = vcmp.lt.s32.totalorder %v887, 0
        %v1100 = vand.u32 %v887, 2139095040
        %v1101 = vshrl.u32 %v1100, 23
        %v1102 = vsub.s32 %v1101, 127
        %v1103 = vand.u32 2147483647, %v887
        %v1104 = vand.u32 %v1103, 8388607
        %v1105 = vor.u32 %v1104, 8388608
        %v1106 = vsub.s32 0, %v1105
        %v1107 = vadd.s32 %v1102, 1
        %vm1108 = vcmp.gt.s32.totalorder %v1107, 0
        %v1109 = vsel %vm1108, %v1107, 0
        %v1110 = vshrl.u32 %v1109, 5
        %v1111 = vand.u32 %v1109, 31
        %v1112 = vsub.s32 32, %v1111
        %v1113 = vshrl.u32 683565275, %v1112
        %v1114 = vshll.u32 683565275, %v1111
        %v1115 = vshrl.u32 2475754826, %v1112
        %v1116 = vor.u32 %v1114, %v1115
        %v1117 = vshll.u32 2475754826, %v1111
        %v1118 = vshrl.u32 2131351028, %v1112
        %v1119 = vor.u32 %v1117, %v1118
        %v1120 = vshll.u32 2131351028, %v1111
        %v1121 = vshrl.u32 2102212464, %v1112
        %v1122 = vor.u32 %v1120, %v1121
        %v1123 = vshll.u32 2102212464, %v1111
        %v1124 = vshrl.u32 920167782, %v1112
        %v1125 = vor.u32 %v1123, %v1124
        %v1126 = vshll.u32 920167782, %v1111
        %v1127 = vshrl.u32 1326507024, %v1112
        %v1128 = vor.u32 %v1126, %v1127
        %vm1129 = vcmp.lt.s32.totalorder %v1110, 1
        %vm1130 = vcmp.lt.s32.totalorder %v1110, 2
        %vm1131 = vcmp.lt.s32.totalorder %v1110, 3
        %vm1132 = vcmp.lt.s32.totalorder %v1110, 4
        %v1133 = vsel %vm1129, %v1113, %v1116
        %v1134 = vsel %vm1132, %v1122, 2102212464
        %v1135 = vsel %vm1131, %v1119, %v1134
        %v1136 = vsel %vm1130, %v1133, %v1135
        %v1137 = vsel %vm1129, %v1116, %v1119
        %v1138 = vsel %vm1132, %v1125, 920167782
        %v1139 = vsel %vm1131, %v1122, %v1138
        %v1140 = vsel %vm1130, %v1137, %v1139
        %v1141 = vsel %vm1129, %v1119, %v1122
        %v1142 = vsel %vm1132, %v1128, 1326507024
        %v1143 = vsel %vm1131, %v1125, %v1142
        %v1144 = vsel %vm1130, %v1141, %v1143
        %v1145 = vshll.u32 %v1105, 8
        %v1146 = vmul.u32.u64.compose %v1145, %v1144
        %v1147 = vextract.low.u32 %v1146
        %v1148 = vextract.high.u32 %v1146
        %v1149 = vmul.u32.u64.compose %v1145, %v1140
        %v1150 = vextract.low.u32 %v1149
        %v1151 = vextract.high.u32 %v1149
        %v1152 = vmul.u32 %v1145, %v1136
        %v1153 = vadd.s32 %v1148, %v1150
        %vm1154 = vc.u32 %v1148, %v1150
        %v1155 = vadd.s32 %v1151, 1
        %v1156 = vsel %vm1154, %v1155, %v1151
        %v1157 = vadd.s32 %v1152, %v1156
        %v1158 = vadd.s32 %v1157, 536870912
        %v1159 = vshrl.u32 %v1158, 30
        %v1160 = vshll.u32 %v1159, 30
        %v1161 = vsub.s32 %v1157, %v1160
        %vm1162 = vcmp.lt.s32.totalorder %v1161, 0
        %v1163 = vsub.s32 0, %v1161
        %v1164 = vsel %vm1162, %v1163, %v1161
        %v1165 = vclz %v1164
        %v1166 = vsub.s32 %v1165, 2
        %vm1167 = vcmp.gt.s32.totalorder 0, %v1166
        %v1168 = vsel %vm1167, 0, %v1166
        %v1169 = vsub.s32 32, %v1168
        %v1170 = vshll.u32 %v1161, %v1168
        %v1171 = vshrl.u32 %v1153, %v1169
        %v1172 = vor.u32 %v1170, %v1171
        %v1173 = vsub.s32 4294967266, %v1168
        %v1174 = vadd.s32 %v1173, 127
        %v1175 = vshll.u32 %v1174, 23
        %v1176 = vor.u32 4788187, %v1175
        %v1177 = vand.u32 2147483647, %v1176
        %v1179 = vcvt.s32.f32 %v1172
        %v1180 = vmul.f32 %v1179, %v1177
        %v1181 = vxor.u32 %v1180, 2147483648
        %v1182 = vsel %vm1099, %v1181, %v1180
        %v1183 = vsub.s32 4, %v1159
        %v1184 = vsel %vm1099, %v1183, %v1159
        %v1185 = vsel %vm1098, %v887, %v1182
        %v1186 = vsel %vm1098, 0, %v1184
        %v1187 = vcosq.f32.pop %v1185
        %v1188 = vsinq.f32.pop %v1185
        %vm1189 = vweird.f32 %v887
        %v1190 = vadd.s32 %v1186, 3
        %v1191 = vand.u32 %v1190, 3
        %vm1192 = vcmp.lt.s32.totalorder %v1191, 2
        %vm1193 = vcmp.eq.s32.totalorder %v1191, 0
        %v1194 = vxor.u32 %v1188, 2147483648
        %v1195 = vsel %vm1193, %v1187, %v1194
        %vm1196 = vcmp.eq.s32.totalorder %v1191, 2
        %v1197 = vxor.u32 %v1187, 2147483648
        %v1198 = vsel %vm1196, %v1197, %v1188
        %v1199 = vsel %vm1192, %v1195, %v1198
        %v1200 = vsel %vm1189, nan, %v1199
        %v1201 = vand.u32 2147483647, %v888
        %vm1202 = vcmp.le.f32.partialorder %v1201, 0.7853982
        %vm1203 = vcmp.lt.s32.totalorder %v888, 0
        %v1204 = vand.u32 %v888, 2139095040
        %v1205 = vshrl.u32 %v1204, 23
        %v1206 = vsub.s32 %v1205, 127
        %v1207 = vand.u32 2147483647, %v888
        %v1208 = vand.u32 %v1207, 8388607
        %v1209 = vor.u32 %v1208, 8388608
        %v1210 = vsub.s32 0, %v1209
        %v1211 = vadd.s32 %v1206, 1
        %vm1212 = vcmp.gt.s32.totalorder %v1211, 0
        %v1213 = vsel %vm1212, %v1211, 0
        %v1214 = vshrl.u32 %v1213, 5
        %v1215 = vand.u32 %v1213, 31
        %v1216 = vsub.s32 32, %v1215
        %v1217 = vshrl.u32 683565275, %v1216
        %v1218 = vshll.u32 683565275, %v1215
        %v1219 = vshrl.u32 2475754826, %v1216
        %v1220 = vor.u32 %v1218, %v1219
        %v1221 = vshll.u32 2475754826, %v1215
        %v1222 = vshrl.u32 2131351028, %v1216
        %v1223 = vor.u32 %v1221, %v1222
        %v1224 = vshll.u32 2131351028, %v1215
        %v1225 = vshrl.u32 2102212464, %v1216
        %v1226 = vor.u32 %v1224, %v1225
        %v1227 = vshll.u32 2102212464, %v1215
        %v1228 = vshrl.u32 920167782, %v1216
        %v1229 = vor.u32 %v1227, %v1228
        %v1230 = vshll.u32 920167782, %v1215
        %v1231 = vshrl.u32 1326507024, %v1216
        %v1232 = vor.u32 %v1230, %v1231
        %vm1233 = vcmp.lt.s32.totalorder %v1214, 1
        %vm1234 = vcmp.lt.s32.totalorder %v1214, 2
        %vm1235 = vcmp.lt.s32.totalorder %v1214, 3
        %vm1236 = vcmp.lt.s32.totalorder %v1214, 4
        %v1237 = vsel %vm1233, %v1217, %v1220
        %v1238 = vsel %vm1236, %v1226, 2102212464
        %v1239 = vsel %vm1235, %v1223, %v1238
        %v1240 = vsel %vm1234, %v1237, %v1239
        %v1241 = vsel %vm1233, %v1220, %v1223
        %v1242 = vsel %vm1236, %v1229, 920167782
        %v1243 = vsel %vm1235, %v1226, %v1242
        %v1244 = vsel %vm1234, %v1241, %v1243
        %v1245 = vsel %vm1233, %v1223, %v1226
        %v1246 = vsel %vm1236, %v1232, 1326507024
        %v1247 = vsel %vm1235, %v1229, %v1246
        %v1248 = vsel %vm1234, %v1245, %v1247
        %v1249 = vshll.u32 %v1209, 8
        %v1250 = vmul.u32.u64.compose %v1249, %v1248
        %v1251 = vextract.low.u32 %v1250
        %v1252 = vextract.high.u32 %v1250
        %v1253 = vmul.u32.u64.compose %v1249, %v1244
        %v1254 = vextract.low.u32 %v1253
        %v1255 = vextract.high.u32 %v1253
        %v1256 = vmul.u32 %v1249, %v1240
        %v1257 = vadd.s32 %v1252, %v1254
        %vm1258 = vc.u32 %v1252, %v1254
        %v1259 = vadd.s32 %v1255, 1
        %v1260 = vsel %vm1258, %v1259, %v1255
        %v1261 = vadd.s32 %v1256, %v1260
        %v1262 = vadd.s32 %v1261, 536870912
        %v1263 = vshrl.u32 %v1262, 30
        %v1264 = vshll.u32 %v1263, 30
        %v1265 = vsub.s32 %v1261, %v1264
        %vm1266 = vcmp.lt.s32.totalorder %v1265, 0
        %v1267 = vsub.s32 0, %v1265
        %v1268 = vsel %vm1266, %v1267, %v1265
        %v1269 = vclz %v1268
        %v1270 = vsub.s32 %v1269, 2
        %vm1271 = vcmp.gt.s32.totalorder 0, %v1270
        %v1272 = vsel %vm1271, 0, %v1270
        %v1273 = vsub.s32 32, %v1272
        %v1274 = vshll.u32 %v1265, %v1272
        %v1275 = vshrl.u32 %v1257, %v1273
        %v1276 = vor.u32 %v1274, %v1275
        %v1277 = vsub.s32 4294967266, %v1272
        %v1278 = vadd.s32 %v1277, 127
        %v1279 = vshll.u32 %v1278, 23
        %v1280 = vor.u32 4788187, %v1279
        %v1281 = vand.u32 2147483647, %v1280
        %v1283 = vcvt.s32.f32 %v1276
        %v1284 = vmul.f32 %v1283, %v1281
        %v1285 = vxor.u32 %v1284, 2147483648
        %v1286 = vsel %vm1203, %v1285, %v1284
        %v1287 = vsub.s32 4, %v1263
        %v1288 = vsel %vm1203, %v1287, %v1263
        %v1289 = vsel %vm1202, %v888, %v1286
        %v1290 = vsel %vm1202, 0, %v1288
        %v1291 = vcosq.f32.pop %v1289
        %v1292 = vsinq.f32.pop %v1289
        %vm1293 = vweird.f32 %v888
        %v1294 = vadd.s32 %v1290, 3
        %v1295 = vand.u32 %v1294, 3
        %vm1296 = vcmp.lt.s32.totalorder %v1295, 2
        %vm1297 = vcmp.eq.s32.totalorder %v1295, 0
        %v1298 = vxor.u32 %v1292, 2147483648
        %v1299 = vsel %vm1297, %v1291, %v1298
        %vm1300 = vcmp.eq.s32.totalorder %v1295, 2
        %v1301 = vxor.u32 %v1291, 2147483648
        %v1302 = vsel %vm1300, %v1301, %v1292
        %v1303 = vsel %vm1296, %v1299, %v1302
        %v1304 = vsel %vm1293, nan, %v1303
        %v1305 = vmul.f32 %v879, %v1200
        %v1306 = vmul.f32 %v886, %v1304
        %1308 = vset.pattern.permute.xlu0 0
        %1309 = vperm.xlu0 %1308, %v786
        %v1310 = vpop.permute.xlu0 %1309
        %1313 = vset.pattern.permute.xlu0 0
        %1314 = vperm.xlu0 %1313, %v787
        %v1315 = vpop.permute.xlu0 %1314
        %v1317 = vmul.f32 %v1310, %v817
        %v1318 = vmul.f32 %v1315, %v818
        %1320 = vset.pattern.permute.xlu0 0
        %1321 = vperm.xlu0 %1320, %v784
        %v1322 = vpop.permute.xlu0 %1321
        %1325 = vset.pattern.permute.xlu0 0
        %1326 = vperm.xlu0 %1325, %v785
        %v1327 = vpop.permute.xlu0 %1326
        %v1329 = vmul.f32 %v1322, %v1095
        %v1330 = vmul.f32 %v1327, %v1096
        %v1331 = vadd.f32 %v1317, %v1329
        %v1332 = vadd.f32 %v1318, %v1330
        %vm1333 = vcmask 130048
        %1334 = vst.msk [vmem:[%s296] sm:$0xff] %vm1333, %v1331
        %1335 = vst.msk [vmem:[%s296 + $0x8] sm:$0xff] %vm1333, %v1332
        %v1336 = vmul.f32 %v461, %v668
        %v1337 = vmul.f32 %v565, %v771
        %v1338 = vadd.f32 %v1336, %v1336
        %v1339 = vadd.f32 %v1337, %v1337
        %v1340 = vmul.f32 %v668, %v668
        %v1341 = vmul.f32 %v771, %v771
        %v1342 = vmul.f32 %v461, %v461
        %v1343 = vmul.f32 %v565, %v565
        %v1344 = vsub.f32 %v1340, %v1342
        %v1345 = vsub.f32 %v1341, %v1343
        %s1346 = sld [smem:[#allocation3 + $0x1]]
        %v1347 = vstv %s1346
        %v1348 = vmul.f32 %v1338, %v1347
        %v1349 = vmul.f32 %v1339, %v1347
        %s1350 = sld [smem:[#allocation6 + $0x1]]
        %v1351 = vstv %s1350
        %v1352 = vmul.f32 %v1344, %v1351
        %v1353 = vmul.f32 %v1345, %v1351
        %v1354 = vadd.f32 %v1348, %v1352
        %v1355 = vadd.f32 %v1349, %v1353
        %v1356 = vmul.f32 %v1310, %v1354
        %v1357 = vmul.f32 %v1315, %v1355
        %v1358 = vmul.f32 %v1322, %v1305
        %v1359 = vmul.f32 %v1327, %v1306
        %v1360 = vadd.f32 %v1356, %v1358
        %v1361 = vadd.f32 %v1357, %v1359
        %s1362 = scalar_lea.vmem %s296, 16 [#allocation8]
        %1363 = vst.msk [vmem:[%s1362] sm:$0xff] %vm1333, %v1360
        %1364 = vst.msk [vmem:[%s1362 + $0x8] sm:$0xff] %vm1333, %v1361
        %v1365 = vmul.f32 %v1338, %v668
        %v1366 = vmul.f32 %v1339, %v771
        %v1367 = vmul.f32 %v1344, %v461
        %v1368 = vmul.f32 %v1345, %v565
        %v1369 = vadd.f32 %v1365, %v1367
        %v1370 = vadd.f32 %v1366, %v1368
        %v1371 = vmul.f32 %v1344, %v668
        %v1372 = vmul.f32 %v1345, %v771
        %v1373 = vmul.f32 %v1338, %v461
        %v1374 = vmul.f32 %v1339, %v565
        %v1375 = vsub.f32 %v1371, %v1373
        %v1376 = vsub.f32 %v1372, %v1374
        %s1377 = sld [smem:[#allocation3 + $0x2]]
        %v1378 = vstv %s1377
        %v1379 = vmul.f32 %v1369, %v1378
        %v1380 = vmul.f32 %v1370, %v1378
        %s1381 = sld [smem:[#allocation6 + $0x2]]
        %v1382 = vstv %s1381
        %v1383 = vmul.f32 %v1375, %v1382
        %v1384 = vmul.f32 %v1376, %v1382
        %v1385 = vadd.f32 %v1379, %v1383
        %v1386 = vadd.f32 %v1380, %v1384
        %v1387 = vadd.s32 %v807, 2
        %v1388 = vadd.s32 %v808, 2
        %v1389 = vadd.s32 %v807, 3
        %v1390 = vadd.s32 %v808, 3
        %v1391 = vshrl.u32 %v1387, 16
        %v1392 = vshrl.u32 %v1388, 16
        %v1393 = vxor.u32 %v1387, %v1391
        %v1394 = vxor.u32 %v1388, %v1392
        %v1395 = vmul.u32 %v1393, 2146121005
        %v1396 = vmul.u32 %v1394, 2146121005
        %v1397 = vshrl.u32 %v1395, 15
        %v1398 = vshrl.u32 %v1396, 15
        %v1399 = vxor.u32 %v1395, %v1397
        %v1400 = vxor.u32 %v1396, %v1398
        %v1401 = vmul.u32 %v1399, 2221713035
        %v1402 = vmul.u32 %v1400, 2221713035
        %v1403 = vshrl.u32 %v1401, 16
        %v1404 = vshrl.u32 %v1402, 16
        %v1405 = vxor.u32 %v1401, %v1403
        %v1406 = vxor.u32 %v1402, %v1404
        %v1407 = vand.u32 %v1405, 8388607
        %v1408 = vand.u32 %v1406, 8388607
        %v1409 = vcvt.s32.f32 %v1407
        %v1410 = vcvt.s32.f32 %v1408
        %v1411 = vadd.f32 %v1409, 1.0
        %v1412 = vadd.f32 %v1410, 1.0
        %v1413 = vmul.f32 %v1411, 1.1920929e-07
        %v1414 = vmul.f32 %v1412, 1.1920929e-07
        %v1415 = vshrl.u32 %v1389, 16
        %v1416 = vshrl.u32 %v1390, 16
        %v1417 = vxor.u32 %v1389, %v1415
        %v1418 = vxor.u32 %v1390, %v1416
        %v1419 = vmul.u32 %v1417, 2146121005
        %v1420 = vmul.u32 %v1418, 2146121005
        %v1421 = vshrl.u32 %v1419, 15
        %v1422 = vshrl.u32 %v1420, 15
        %v1423 = vxor.u32 %v1419, %v1421
        %v1424 = vxor.u32 %v1420, %v1422
        %v1425 = vmul.u32 %v1423, 2221713035
        %v1426 = vmul.u32 %v1424, 2221713035
        %v1427 = vshrl.u32 %v1425, 16
        %v1428 = vshrl.u32 %v1426, 16
        %v1429 = vxor.u32 %v1425, %v1427
        %v1430 = vxor.u32 %v1426, %v1428
        %v1431 = vand.u32 %v1429, 8388607
        %v1432 = vand.u32 %v1430, 8388607
        %v1433 = vcvt.s32.f32 %v1431
        %v1434 = vcvt.s32.f32 %v1432
        %v1435 = vmul.f32 %v1433, 1.1920929e-07
        %v1436 = vmul.f32 %v1434, 1.1920929e-07
        %v1437 = vlog2.pop %v1413
        %v1438 = vmul.f32 %v1437, 0.6931472
        %v1439 = vlog2.pop %v1414
        %v1440 = vmul.f32 %v1439, 0.6931472
        %v1441 = vmul.f32 %v1438, -2.0
        %v1442 = vmul.f32 %v1440, -2.0
        %v1443 = vrsqrt.pop %v1441
        %v1444 = vmul.f32 %v1441, %v1443
        %vm1445 = vcmp.eq.f32.partialorder %v1441, inf
        %v1446 = vsel %vm1445, %v1441, %v1444
        %vm1447 = vcmp.eq.f32.partialorder %v1441, 0.0
        %v1448 = vand.u32 %v1441, 2147483648
        %v1449 = vsel %vm1447, %v1448, %v1446
        %v1450 = vrsqrt.pop %v1442
        %v1451 = vmul.f32 %v1442, %v1450
        %vm1452 = vcmp.eq.f32.partialorder %v1442, inf
        %v1453 = vsel %vm1452, %v1442, %v1451
        %vm1454 = vcmp.eq.f32.partialorder %v1442, 0.0
        %v1455 = vand.u32 %v1442, 2147483648
        %v1456 = vsel %vm1454, %v1455, %v1453
        %v1457 = vmul.f32 %v1435, 6.2831855
        %v1458 = vmul.f32 %v1436, 6.2831855
        %v1459 = vand.u32 2147483647, %v1457
        %vm1460 = vcmp.le.f32.partialorder %v1459, 0.7853982
        %vm1461 = vcmp.lt.s32.totalorder %v1457, 0
        %v1462 = vand.u32 %v1457, 2139095040
        %v1463 = vshrl.u32 %v1462, 23
        %v1464 = vsub.s32 %v1463, 127
        %v1465 = vand.u32 2147483647, %v1457
        %v1466 = vand.u32 %v1465, 8388607
        %v1467 = vor.u32 %v1466, 8388608
        %v1468 = vsub.s32 0, %v1467
        %v1469 = vadd.s32 %v1464, 1
        %vm1470 = vcmp.gt.s32.totalorder %v1469, 0
        %v1471 = vsel %vm1470, %v1469, 0
        %v1472 = vshrl.u32 %v1471, 5
        %v1473 = vand.u32 %v1471, 31
        %v1474 = vsub.s32 32, %v1473
        %v1475 = vshrl.u32 683565275, %v1474
        %v1476 = vshll.u32 683565275, %v1473
        %v1477 = vshrl.u32 2475754826, %v1474
        %v1478 = vor.u32 %v1476, %v1477
        %v1479 = vshll.u32 2475754826, %v1473
        %v1480 = vshrl.u32 2131351028, %v1474
        %v1481 = vor.u32 %v1479, %v1480
        %v1482 = vshll.u32 2131351028, %v1473
        %v1483 = vshrl.u32 2102212464, %v1474
        %v1484 = vor.u32 %v1482, %v1483
        %v1485 = vshll.u32 2102212464, %v1473
        %v1486 = vshrl.u32 920167782, %v1474
        %v1487 = vor.u32 %v1485, %v1486
        %v1488 = vshll.u32 920167782, %v1473
        %v1489 = vshrl.u32 1326507024, %v1474
        %v1490 = vor.u32 %v1488, %v1489
        %vm1491 = vcmp.lt.s32.totalorder %v1472, 1
        %vm1492 = vcmp.lt.s32.totalorder %v1472, 2
        %vm1493 = vcmp.lt.s32.totalorder %v1472, 3
        %vm1494 = vcmp.lt.s32.totalorder %v1472, 4
        %v1495 = vsel %vm1491, %v1475, %v1478
        %v1496 = vsel %vm1494, %v1484, 2102212464
        %v1497 = vsel %vm1493, %v1481, %v1496
        %v1498 = vsel %vm1492, %v1495, %v1497
        %v1499 = vsel %vm1491, %v1478, %v1481
        %v1500 = vsel %vm1494, %v1487, 920167782
        %v1501 = vsel %vm1493, %v1484, %v1500
        %v1502 = vsel %vm1492, %v1499, %v1501
        %v1503 = vsel %vm1491, %v1481, %v1484
        %v1504 = vsel %vm1494, %v1490, 1326507024
        %v1505 = vsel %vm1493, %v1487, %v1504
        %v1506 = vsel %vm1492, %v1503, %v1505
        %v1507 = vshll.u32 %v1467, 8
        %v1508 = vmul.u32.u64.compose %v1507, %v1506
        %v1509 = vextract.low.u32 %v1508
        %v1510 = vextract.high.u32 %v1508
        %v1511 = vmul.u32.u64.compose %v1507, %v1502
        %v1512 = vextract.low.u32 %v1511
        %v1513 = vextract.high.u32 %v1511
        %v1514 = vmul.u32 %v1507, %v1498
        %v1515 = vadd.s32 %v1510, %v1512
        %vm1516 = vc.u32 %v1510, %v1512
        %v1517 = vadd.s32 %v1513, 1
        %v1518 = vsel %vm1516, %v1517, %v1513
        %v1519 = vadd.s32 %v1514, %v1518
        %v1520 = vadd.s32 %v1519, 536870912
        %v1521 = vshrl.u32 %v1520, 30
        %v1522 = vshll.u32 %v1521, 30
        %v1523 = vsub.s32 %v1519, %v1522
        %vm1524 = vcmp.lt.s32.totalorder %v1523, 0
        %v1525 = vsub.s32 0, %v1523
        %v1526 = vsel %vm1524, %v1525, %v1523
        %v1527 = vclz %v1526
        %v1528 = vsub.s32 %v1527, 2
        %vm1529 = vcmp.gt.s32.totalorder 0, %v1528
        %v1530 = vsel %vm1529, 0, %v1528
        %v1531 = vsub.s32 32, %v1530
        %v1532 = vshll.u32 %v1523, %v1530
        %v1533 = vshrl.u32 %v1515, %v1531
        %v1534 = vor.u32 %v1532, %v1533
        %v1535 = vsub.s32 4294967266, %v1530
        %v1536 = vadd.s32 %v1535, 127
        %v1537 = vshll.u32 %v1536, 23
        %v1538 = vor.u32 4788187, %v1537
        %v1539 = vand.u32 2147483647, %v1538
        %v1541 = vcvt.s32.f32 %v1534
        %v1542 = vmul.f32 %v1541, %v1539
        %v1543 = vxor.u32 %v1542, 2147483648
        %v1544 = vsel %vm1461, %v1543, %v1542
        %v1545 = vsub.s32 4, %v1521
        %v1546 = vsel %vm1461, %v1545, %v1521
        %v1547 = vsel %vm1460, %v1457, %v1544
        %v1548 = vsel %vm1460, 0, %v1546
        %v1549 = vcosq.f32.pop %v1547
        %v1550 = vsinq.f32.pop %v1547
        %vm1551 = vweird.f32 %v1457
        %v1552 = vand.u32 %v1548, 3
        %vm1553 = vcmp.lt.s32.totalorder %v1552, 2
        %vm1554 = vcmp.eq.s32.totalorder %v1552, 0
        %v1555 = vxor.u32 %v1550, 2147483648
        %v1556 = vsel %vm1554, %v1549, %v1555
        %vm1557 = vcmp.eq.s32.totalorder %v1552, 2
        %v1558 = vxor.u32 %v1549, 2147483648
        %v1559 = vsel %vm1557, %v1558, %v1550
        %v1560 = vsel %vm1553, %v1556, %v1559
        %v1561 = vsel %vm1551, nan, %v1560
        %v1562 = vand.u32 2147483647, %v1458
        %vm1563 = vcmp.le.f32.partialorder %v1562, 0.7853982
        %vm1564 = vcmp.lt.s32.totalorder %v1458, 0
        %v1565 = vand.u32 %v1458, 2139095040
        %v1566 = vshrl.u32 %v1565, 23
        %v1567 = vsub.s32 %v1566, 127
        %v1568 = vand.u32 2147483647, %v1458
        %v1569 = vand.u32 %v1568, 8388607
        %v1570 = vor.u32 %v1569, 8388608
        %v1571 = vsub.s32 0, %v1570
        %v1572 = vadd.s32 %v1567, 1
        %vm1573 = vcmp.gt.s32.totalorder %v1572, 0
        %v1574 = vsel %vm1573, %v1572, 0
        %v1575 = vshrl.u32 %v1574, 5
        %v1576 = vand.u32 %v1574, 31
        %v1577 = vsub.s32 32, %v1576
        %v1578 = vshrl.u32 683565275, %v1577
        %v1579 = vshll.u32 683565275, %v1576
        %v1580 = vshrl.u32 2475754826, %v1577
        %v1581 = vor.u32 %v1579, %v1580
        %v1582 = vshll.u32 2475754826, %v1576
        %v1583 = vshrl.u32 2131351028, %v1577
        %v1584 = vor.u32 %v1582, %v1583
        %v1585 = vshll.u32 2131351028, %v1576
        %v1586 = vshrl.u32 2102212464, %v1577
        %v1587 = vor.u32 %v1585, %v1586
        %v1588 = vshll.u32 2102212464, %v1576
        %v1589 = vshrl.u32 920167782, %v1577
        %v1590 = vor.u32 %v1588, %v1589
        %v1591 = vshll.u32 920167782, %v1576
        %v1592 = vshrl.u32 1326507024, %v1577
        %v1593 = vor.u32 %v1591, %v1592
        %vm1594 = vcmp.lt.s32.totalorder %v1575, 1
        %vm1595 = vcmp.lt.s32.totalorder %v1575, 2
        %vm1596 = vcmp.lt.s32.totalorder %v1575, 3
        %vm1597 = vcmp.lt.s32.totalorder %v1575, 4
        %v1598 = vsel %vm1594, %v1578, %v1581
        %v1599 = vsel %vm1597, %v1587, 2102212464
        %v1600 = vsel %vm1596, %v1584, %v1599
        %v1601 = vsel %vm1595, %v1598, %v1600
        %v1602 = vsel %vm1594, %v1581, %v1584
        %v1603 = vsel %vm1597, %v1590, 920167782
        %v1604 = vsel %vm1596, %v1587, %v1603
        %v1605 = vsel %vm1595, %v1602, %v1604
        %v1606 = vsel %vm1594, %v1584, %v1587
        %v1607 = vsel %vm1597, %v1593, 1326507024
        %v1608 = vsel %vm1596, %v1590, %v1607
        %v1609 = vsel %vm1595, %v1606, %v1608
        %v1610 = vshll.u32 %v1570, 8
        %v1611 = vmul.u32.u64.compose %v1610, %v1609
        %v1612 = vextract.low.u32 %v1611
        %v1613 = vextract.high.u32 %v1611
        %v1614 = vmul.u32.u64.compose %v1610, %v1605
        %v1615 = vextract.low.u32 %v1614
        %v1616 = vextract.high.u32 %v1614
        %v1617 = vmul.u32 %v1610, %v1601
        %v1618 = vadd.s32 %v1613, %v1615
        %vm1619 = vc.u32 %v1613, %v1615
        %v1620 = vadd.s32 %v1616, 1
        %v1621 = vsel %vm1619, %v1620, %v1616
        %v1622 = vadd.s32 %v1617, %v1621
        %v1623 = vadd.s32 %v1622, 536870912
        %v1624 = vshrl.u32 %v1623, 30
        %v1625 = vshll.u32 %v1624, 30
        %v1626 = vsub.s32 %v1622, %v1625
        %vm1627 = vcmp.lt.s32.totalorder %v1626, 0
        %v1628 = vsub.s32 0, %v1626
        %v1629 = vsel %vm1627, %v1628, %v1626
        %v1630 = vclz %v1629
        %v1631 = vsub.s32 %v1630, 2
        %vm1632 = vcmp.gt.s32.totalorder 0, %v1631
        %v1633 = vsel %vm1632, 0, %v1631
        %v1634 = vsub.s32 32, %v1633
        %v1635 = vshll.u32 %v1626, %v1633
        %v1636 = vshrl.u32 %v1618, %v1634
        %v1637 = vor.u32 %v1635, %v1636
        %v1638 = vsub.s32 4294967266, %v1633
        %v1639 = vadd.s32 %v1638, 127
        %v1640 = vshll.u32 %v1639, 23
        %v1641 = vor.u32 4788187, %v1640
        %v1642 = vand.u32 2147483647, %v1641
        %v1644 = vcvt.s32.f32 %v1637
        %v1645 = vmul.f32 %v1644, %v1642
        %v1646 = vxor.u32 %v1645, 2147483648
        %v1647 = vsel %vm1564, %v1646, %v1645
        %v1648 = vsub.s32 4, %v1624
        %v1649 = vsel %vm1564, %v1648, %v1624
        %v1650 = vsel %vm1563, %v1458, %v1647
        %v1651 = vsel %vm1563, 0, %v1649
        %v1652 = vcosq.f32.pop %v1650
        %v1653 = vsinq.f32.pop %v1650
        %vm1654 = vweird.f32 %v1458
        %v1655 = vand.u32 %v1651, 3
        %vm1656 = vcmp.lt.s32.totalorder %v1655, 2
        %vm1657 = vcmp.eq.s32.totalorder %v1655, 0
        %v1658 = vxor.u32 %v1653, 2147483648
        %v1659 = vsel %vm1657, %v1652, %v1658
        %vm1660 = vcmp.eq.s32.totalorder %v1655, 2
        %v1661 = vxor.u32 %v1652, 2147483648
        %v1662 = vsel %vm1660, %v1661, %v1653
        %v1663 = vsel %vm1656, %v1659, %v1662
        %v1664 = vsel %vm1654, nan, %v1663
        %v1665 = vmul.f32 %v1449, %v1561
        %v1666 = vmul.f32 %v1456, %v1664
        %v1667 = vand.u32 2147483647, %v1457
        %vm1668 = vcmp.le.f32.partialorder %v1667, 0.7853982
        %vm1669 = vcmp.lt.s32.totalorder %v1457, 0
        %v1670 = vand.u32 %v1457, 2139095040
        %v1671 = vshrl.u32 %v1670, 23
        %v1672 = vsub.s32 %v1671, 127
        %v1673 = vand.u32 2147483647, %v1457
        %v1674 = vand.u32 %v1673, 8388607
        %v1675 = vor.u32 %v1674, 8388608
        %v1676 = vsub.s32 0, %v1675
        %v1677 = vadd.s32 %v1672, 1
        %vm1678 = vcmp.gt.s32.totalorder %v1677, 0
        %v1679 = vsel %vm1678, %v1677, 0
        %v1680 = vshrl.u32 %v1679, 5
        %v1681 = vand.u32 %v1679, 31
        %v1682 = vsub.s32 32, %v1681
        %v1683 = vshrl.u32 683565275, %v1682
        %v1684 = vshll.u32 683565275, %v1681
        %v1685 = vshrl.u32 2475754826, %v1682
        %v1686 = vor.u32 %v1684, %v1685
        %v1687 = vshll.u32 2475754826, %v1681
        %v1688 = vshrl.u32 2131351028, %v1682
        %v1689 = vor.u32 %v1687, %v1688
        %v1690 = vshll.u32 2131351028, %v1681
        %v1691 = vshrl.u32 2102212464, %v1682
        %v1692 = vor.u32 %v1690, %v1691
        %v1693 = vshll.u32 2102212464, %v1681
        %v1694 = vshrl.u32 920167782, %v1682
        %v1695 = vor.u32 %v1693, %v1694
        %v1696 = vshll.u32 920167782, %v1681
        %v1697 = vshrl.u32 1326507024, %v1682
        %v1698 = vor.u32 %v1696, %v1697
        %vm1699 = vcmp.lt.s32.totalorder %v1680, 1
        %vm1700 = vcmp.lt.s32.totalorder %v1680, 2
        %vm1701 = vcmp.lt.s32.totalorder %v1680, 3
        %vm1702 = vcmp.lt.s32.totalorder %v1680, 4
        %v1703 = vsel %vm1699, %v1683, %v1686
        %v1704 = vsel %vm1702, %v1692, 2102212464
        %v1705 = vsel %vm1701, %v1689, %v1704
        %v1706 = vsel %vm1700, %v1703, %v1705
        %v1707 = vsel %vm1699, %v1686, %v1689
        %v1708 = vsel %vm1702, %v1695, 920167782
        %v1709 = vsel %vm1701, %v1692, %v1708
        %v1710 = vsel %vm1700, %v1707, %v1709
        %v1711 = vsel %vm1699, %v1689, %v1692
        %v1712 = vsel %vm1702, %v1698, 1326507024
        %v1713 = vsel %vm1701, %v1695, %v1712
        %v1714 = vsel %vm1700, %v1711, %v1713
        %v1715 = vshll.u32 %v1675, 8
        %v1716 = vmul.u32.u64.compose %v1715, %v1714
        %v1717 = vextract.low.u32 %v1716
        %v1718 = vextract.high.u32 %v1716
        %v1719 = vmul.u32.u64.compose %v1715, %v1710
        %v1720 = vextract.low.u32 %v1719
        %v1721 = vextract.high.u32 %v1719
        %v1722 = vmul.u32 %v1715, %v1706
        %v1723 = vadd.s32 %v1718, %v1720
        %vm1724 = vc.u32 %v1718, %v1720
        %v1725 = vadd.s32 %v1721, 1
        %v1726 = vsel %vm1724, %v1725, %v1721
        %v1727 = vadd.s32 %v1722, %v1726
        %v1728 = vadd.s32 %v1727, 536870912
        %v1729 = vshrl.u32 %v1728, 30
        %v1730 = vshll.u32 %v1729, 30
        %v1731 = vsub.s32 %v1727, %v1730
        %vm1732 = vcmp.lt.s32.totalorder %v1731, 0
        %v1733 = vsub.s32 0, %v1731
        %v1734 = vsel %vm1732, %v1733, %v1731
        %v1735 = vclz %v1734
        %v1736 = vsub.s32 %v1735, 2
        %vm1737 = vcmp.gt.s32.totalorder 0, %v1736
        %v1738 = vsel %vm1737, 0, %v1736
        %v1739 = vsub.s32 32, %v1738
        %v1740 = vshll.u32 %v1731, %v1738
        %v1741 = vshrl.u32 %v1723, %v1739
        %v1742 = vor.u32 %v1740, %v1741
        %v1743 = vsub.s32 4294967266, %v1738
        %v1744 = vadd.s32 %v1743, 127
        %v1745 = vshll.u32 %v1744, 23
        %v1746 = vor.u32 4788187, %v1745
        %v1747 = vand.u32 2147483647, %v1746
        %v1749 = vcvt.s32.f32 %v1742
        %v1750 = vmul.f32 %v1749, %v1747
        %v1751 = vxor.u32 %v1750, 2147483648
        %v1752 = vsel %vm1669, %v1751, %v1750
        %v1753 = vsub.s32 4, %v1729
        %v1754 = vsel %vm1669, %v1753, %v1729
        %v1755 = vsel %vm1668, %v1457, %v1752
        %v1756 = vsel %vm1668, 0, %v1754
        %v1757 = vcosq.f32.pop %v1755
        %v1758 = vsinq.f32.pop %v1755
        %vm1759 = vweird.f32 %v1457
        %v1760 = vadd.s32 %v1756, 3
        %v1761 = vand.u32 %v1760, 3
        %vm1762 = vcmp.lt.s32.totalorder %v1761, 2
        %vm1763 = vcmp.eq.s32.totalorder %v1761, 0
        %v1764 = vxor.u32 %v1758, 2147483648
        %v1765 = vsel %vm1763, %v1757, %v1764
        %vm1766 = vcmp.eq.s32.totalorder %v1761, 2
        %v1767 = vxor.u32 %v1757, 2147483648
        %v1768 = vsel %vm1766, %v1767, %v1758
        %v1769 = vsel %vm1762, %v1765, %v1768
        %v1770 = vsel %vm1759, nan, %v1769
        %v1771 = vand.u32 2147483647, %v1458
        %vm1772 = vcmp.le.f32.partialorder %v1771, 0.7853982
        %vm1773 = vcmp.lt.s32.totalorder %v1458, 0
        %v1774 = vand.u32 %v1458, 2139095040
        %v1775 = vshrl.u32 %v1774, 23
        %v1776 = vsub.s32 %v1775, 127
        %v1777 = vand.u32 2147483647, %v1458
        %v1778 = vand.u32 %v1777, 8388607
        %v1779 = vor.u32 %v1778, 8388608
        %v1780 = vsub.s32 0, %v1779
        %v1781 = vadd.s32 %v1776, 1
        %vm1782 = vcmp.gt.s32.totalorder %v1781, 0
        %v1783 = vsel %vm1782, %v1781, 0
        %v1784 = vshrl.u32 %v1783, 5
        %v1785 = vand.u32 %v1783, 31
        %v1786 = vsub.s32 32, %v1785
        %v1787 = vshrl.u32 683565275, %v1786
        %v1788 = vshll.u32 683565275, %v1785
        %v1789 = vshrl.u32 2475754826, %v1786
        %v1790 = vor.u32 %v1788, %v1789
        %v1791 = vshll.u32 2475754826, %v1785
        %v1792 = vshrl.u32 2131351028, %v1786
        %v1793 = vor.u32 %v1791, %v1792
        %v1794 = vshll.u32 2131351028, %v1785
        %v1795 = vshrl.u32 2102212464, %v1786
        %v1796 = vor.u32 %v1794, %v1795
        %v1797 = vshll.u32 2102212464, %v1785
        %v1798 = vshrl.u32 920167782, %v1786
        %v1799 = vor.u32 %v1797, %v1798
        %v1800 = vshll.u32 920167782, %v1785
        %v1801 = vshrl.u32 1326507024, %v1786
        %v1802 = vor.u32 %v1800, %v1801
        %vm1803 = vcmp.lt.s32.totalorder %v1784, 1
        %vm1804 = vcmp.lt.s32.totalorder %v1784, 2
        %vm1805 = vcmp.lt.s32.totalorder %v1784, 3
        %vm1806 = vcmp.lt.s32.totalorder %v1784, 4
        %v1807 = vsel %vm1803, %v1787, %v1790
        %v1808 = vsel %vm1806, %v1796, 2102212464
        %v1809 = vsel %vm1805, %v1793, %v1808
        %v1810 = vsel %vm1804, %v1807, %v1809
        %v1811 = vsel %vm1803, %v1790, %v1793
        %v1812 = vsel %vm1806, %v1799, 920167782
        %v1813 = vsel %vm1805, %v1796, %v1812
        %v1814 = vsel %vm1804, %v1811, %v1813
        %v1815 = vsel %vm1803, %v1793, %v1796
        %v1816 = vsel %vm1806, %v1802, 1326507024
        %v1817 = vsel %vm1805, %v1799, %v1816
        %v1818 = vsel %vm1804, %v1815, %v1817
        %v1819 = vshll.u32 %v1779, 8
        %v1820 = vmul.u32.u64.compose %v1819, %v1818
        %v1821 = vextract.low.u32 %v1820
        %v1822 = vextract.high.u32 %v1820
        %v1823 = vmul.u32.u64.compose %v1819, %v1814
        %v1824 = vextract.low.u32 %v1823
        %v1825 = vextract.high.u32 %v1823
        %v1826 = vmul.u32 %v1819, %v1810
        %v1827 = vadd.s32 %v1822, %v1824
        %vm1828 = vc.u32 %v1822, %v1824
        %v1829 = vadd.s32 %v1825, 1
        %v1830 = vsel %vm1828, %v1829, %v1825
        %v1831 = vadd.s32 %v1826, %v1830
        %v1832 = vadd.s32 %v1831, 536870912
        %v1833 = vshrl.u32 %v1832, 30
        %v1834 = vshll.u32 %v1833, 30
        %v1835 = vsub.s32 %v1831, %v1834
        %vm1836 = vcmp.lt.s32.totalorder %v1835, 0
        %v1837 = vsub.s32 0, %v1835
        %v1838 = vsel %vm1836, %v1837, %v1835
        %v1839 = vclz %v1838
        %v1840 = vsub.s32 %v1839, 2
        %vm1841 = vcmp.gt.s32.totalorder 0, %v1840
        %v1842 = vsel %vm1841, 0, %v1840
        %v1843 = vsub.s32 32, %v1842
        %v1844 = vshll.u32 %v1835, %v1842
        %v1845 = vshrl.u32 %v1827, %v1843
        %v1846 = vor.u32 %v1844, %v1845
        %v1847 = vsub.s32 4294967266, %v1842
        %v1848 = vadd.s32 %v1847, 127
        %v1849 = vshll.u32 %v1848, 23
        %v1850 = vor.u32 4788187, %v1849
        %v1851 = vand.u32 2147483647, %v1850
        %v1853 = vcvt.s32.f32 %v1846
        %v1854 = vmul.f32 %v1853, %v1851
        %v1855 = vxor.u32 %v1854, 2147483648
        %v1856 = vsel %vm1773, %v1855, %v1854
        %v1857 = vsub.s32 4, %v1833
        %v1858 = vsel %vm1773, %v1857, %v1833
        %v1859 = vsel %vm1772, %v1458, %v1856
        %v1860 = vsel %vm1772, 0, %v1858
        %v1861 = vcosq.f32.pop %v1859
        %v1862 = vsinq.f32.pop %v1859
        %vm1863 = vweird.f32 %v1458
        %v1864 = vadd.s32 %v1860, 3
        %v1865 = vand.u32 %v1864, 3
        %vm1866 = vcmp.lt.s32.totalorder %v1865, 2
        %vm1867 = vcmp.eq.s32.totalorder %v1865, 0
        %v1868 = vxor.u32 %v1862, 2147483648
        %v1869 = vsel %vm1867, %v1861, %v1868
        %vm1870 = vcmp.eq.s32.totalorder %v1865, 2
        %v1871 = vxor.u32 %v1861, 2147483648
        %v1872 = vsel %vm1870, %v1871, %v1862
        %v1873 = vsel %vm1866, %v1869, %v1872
        %v1874 = vsel %vm1863, nan, %v1873
        %v1875 = vmul.f32 %v1449, %v1770
        %v1876 = vmul.f32 %v1456, %v1874
        %v1877 = vmul.f32 %v1310, %v1385
        %v1878 = vmul.f32 %v1315, %v1386
        %v1879 = vmul.f32 %v1322, %v1665
        %v1880 = vmul.f32 %v1327, %v1666
        %v1881 = vadd.f32 %v1877, %v1879
        %v1882 = vadd.f32 %v1878, %v1880
        %s1883 = scalar_lea.vmem %s296, 32 [#allocation8]
        %1884 = vst.msk [vmem:[%s1883] sm:$0xff] %vm1333, %v1881
        %1885 = vst.msk [vmem:[%s1883 + $0x8] sm:$0xff] %vm1333, %v1882
        %v1886 = vmul.f32 %v1369, %v668
        %v1887 = vmul.f32 %v1370, %v771
        %v1888 = vmul.f32 %v1375, %v461
        %v1889 = vmul.f32 %v1376, %v565
        %v1890 = vadd.f32 %v1886, %v1888
        %v1891 = vadd.f32 %v1887, %v1889
        %v1892 = vmul.f32 %v1375, %v668
        %v1893 = vmul.f32 %v1376, %v771
        %v1894 = vmul.f32 %v1369, %v461
        %v1895 = vmul.f32 %v1370, %v565
        %v1896 = vsub.f32 %v1892, %v1894
        %v1897 = vsub.f32 %v1893, %v1895
        %s1898 = sld [smem:[#allocation3 + $0x3]]
        %v1899 = vstv %s1898
        %v1900 = vmul.f32 %v1890, %v1899
        %v1901 = vmul.f32 %v1891, %v1899
        %s1902 = sld [smem:[#allocation6 + $0x3]]
        %v1903 = vstv %s1902
        %v1904 = vmul.f32 %v1896, %v1903
        %v1905 = vmul.f32 %v1897, %v1903
        %v1906 = vadd.f32 %v1900, %v1904
        %v1907 = vadd.f32 %v1901, %v1905
        %v1908 = vmul.f32 %v1310, %v1906
        %v1909 = vmul.f32 %v1315, %v1907
        %v1910 = vmul.f32 %v1322, %v1875
        %v1911 = vmul.f32 %v1327, %v1876
        %v1912 = vadd.f32 %v1908, %v1910
        %v1913 = vadd.f32 %v1909, %v1911
        %s1914 = scalar_lea.vmem %s296, 48 [#allocation8]
        %1915 = vst.msk [vmem:[%s1914] sm:$0xff] %vm1333, %v1912
        %1916 = vst.msk [vmem:[%s1914 + $0x8] sm:$0xff] %vm1333, %v1913
        %v1917 = vmul.f32 %v1890, %v668
        %v1918 = vmul.f32 %v1891, %v771
        %v1919 = vmul.f32 %v1896, %v461
        %v1920 = vmul.f32 %v1897, %v565
        %v1921 = vadd.f32 %v1917, %v1919
        %v1922 = vadd.f32 %v1918, %v1920
        %v1923 = vmul.f32 %v1896, %v668
        %v1924 = vmul.f32 %v1897, %v771
        %v1925 = vmul.f32 %v1890, %v461
        %v1926 = vmul.f32 %v1891, %v565
        %v1927 = vsub.f32 %v1923, %v1925
        %v1928 = vsub.f32 %v1924, %v1926
        %s1929 = sld [smem:[#allocation3 + $0x4]]
        %v1930 = vstv %s1929
        %v1931 = vmul.f32 %v1921, %v1930
        %v1932 = vmul.f32 %v1922, %v1930
        %s1933 = sld [smem:[#allocation6 + $0x4]]
        %v1934 = vstv %s1933
        %v1935 = vmul.f32 %v1927, %v1934
        %v1936 = vmul.f32 %v1928, %v1934
        %v1937 = vadd.f32 %v1931, %v1935
        %v1938 = vadd.f32 %v1932, %v1936
        %v1939 = vadd.s32 %v807, 4
        %v1940 = vadd.s32 %v808, 4
        %v1941 = vadd.s32 %v807, 5
        %v1942 = vadd.s32 %v808, 5
        %v1943 = vshrl.u32 %v1939, 16
        %v1944 = vshrl.u32 %v1940, 16
        %v1945 = vxor.u32 %v1939, %v1943
        %v1946 = vxor.u32 %v1940, %v1944
        %v1947 = vmul.u32 %v1945, 2146121005
        %v1948 = vmul.u32 %v1946, 2146121005
        %v1949 = vshrl.u32 %v1947, 15
        %v1950 = vshrl.u32 %v1948, 15
        %v1951 = vxor.u32 %v1947, %v1949
        %v1952 = vxor.u32 %v1948, %v1950
        %v1953 = vmul.u32 %v1951, 2221713035
        %v1954 = vmul.u32 %v1952, 2221713035
        %v1955 = vshrl.u32 %v1953, 16
        %v1956 = vshrl.u32 %v1954, 16
        %v1957 = vxor.u32 %v1953, %v1955
        %v1958 = vxor.u32 %v1954, %v1956
        %v1959 = vand.u32 %v1957, 8388607
        %v1960 = vand.u32 %v1958, 8388607
        %v1961 = vcvt.s32.f32 %v1959
        %v1962 = vcvt.s32.f32 %v1960
        %v1963 = vadd.f32 %v1961, 1.0
        %v1964 = vadd.f32 %v1962, 1.0
        %v1965 = vmul.f32 %v1963, 1.1920929e-07
        %v1966 = vmul.f32 %v1964, 1.1920929e-07
        %v1967 = vshrl.u32 %v1941, 16
        %v1968 = vshrl.u32 %v1942, 16
        %v1969 = vxor.u32 %v1941, %v1967
        %v1970 = vxor.u32 %v1942, %v1968
        %v1971 = vmul.u32 %v1969, 2146121005
        %v1972 = vmul.u32 %v1970, 2146121005
        %v1973 = vshrl.u32 %v1971, 15
        %v1974 = vshrl.u32 %v1972, 15
        %v1975 = vxor.u32 %v1971, %v1973
        %v1976 = vxor.u32 %v1972, %v1974
        %v1977 = vmul.u32 %v1975, 2221713035
        %v1978 = vmul.u32 %v1976, 2221713035
        %v1979 = vshrl.u32 %v1977, 16
        %v1980 = vshrl.u32 %v1978, 16
        %v1981 = vxor.u32 %v1977, %v1979
        %v1982 = vxor.u32 %v1978, %v1980
        %v1983 = vand.u32 %v1981, 8388607
        %v1984 = vand.u32 %v1982, 8388607
        %v1985 = vcvt.s32.f32 %v1983
        %v1986 = vcvt.s32.f32 %v1984
        %v1987 = vmul.f32 %v1985, 1.1920929e-07
        %v1988 = vmul.f32 %v1986, 1.1920929e-07
        %v1989 = vlog2.pop %v1965
        %v1990 = vmul.f32 %v1989, 0.6931472
        %v1991 = vlog2.pop %v1966
        %v1992 = vmul.f32 %v1991, 0.6931472
        %v1993 = vmul.f32 %v1990, -2.0
        %v1994 = vmul.f32 %v1992, -2.0
        %v1995 = vrsqrt.pop %v1993
        %v1996 = vmul.f32 %v1993, %v1995
        %vm1997 = vcmp.eq.f32.partialorder %v1993, inf
        %v1998 = vsel %vm1997, %v1993, %v1996
        %vm1999 = vcmp.eq.f32.partialorder %v1993, 0.0
        %v2000 = vand.u32 %v1993, 2147483648
        %v2001 = vsel %vm1999, %v2000, %v1998
        %v2002 = vrsqrt.pop %v1994
        %v2003 = vmul.f32 %v1994, %v2002
        %vm2004 = vcmp.eq.f32.partialorder %v1994, inf
        %v2005 = vsel %vm2004, %v1994, %v2003
        %vm2006 = vcmp.eq.f32.partialorder %v1994, 0.0
        %v2007 = vand.u32 %v1994, 2147483648
        %v2008 = vsel %vm2006, %v2007, %v2005
        %v2009 = vmul.f32 %v1987, 6.2831855
        %v2010 = vmul.f32 %v1988, 6.2831855
        %v2011 = vand.u32 2147483647, %v2009
        %vm2012 = vcmp.le.f32.partialorder %v2011, 0.7853982
        %vm2013 = vcmp.lt.s32.totalorder %v2009, 0
        %v2014 = vand.u32 %v2009, 2139095040
        %v2015 = vshrl.u32 %v2014, 23
        %v2016 = vsub.s32 %v2015, 127
        %v2017 = vand.u32 2147483647, %v2009
        %v2018 = vand.u32 %v2017, 8388607
        %v2019 = vor.u32 %v2018, 8388608
        %v2020 = vsub.s32 0, %v2019
        %v2021 = vadd.s32 %v2016, 1
        %vm2022 = vcmp.gt.s32.totalorder %v2021, 0
        %v2023 = vsel %vm2022, %v2021, 0
        %v2024 = vshrl.u32 %v2023, 5
        %v2025 = vand.u32 %v2023, 31
        %v2026 = vsub.s32 32, %v2025
        %v2027 = vshrl.u32 683565275, %v2026
        %v2028 = vshll.u32 683565275, %v2025
        %v2029 = vshrl.u32 2475754826, %v2026
        %v2030 = vor.u32 %v2028, %v2029
        %v2031 = vshll.u32 2475754826, %v2025
        %v2032 = vshrl.u32 2131351028, %v2026
        %v2033 = vor.u32 %v2031, %v2032
        %v2034 = vshll.u32 2131351028, %v2025
        %v2035 = vshrl.u32 2102212464, %v2026
        %v2036 = vor.u32 %v2034, %v2035
        %v2037 = vshll.u32 2102212464, %v2025
        %v2038 = vshrl.u32 920167782, %v2026
        %v2039 = vor.u32 %v2037, %v2038
        %v2040 = vshll.u32 920167782, %v2025
        %v2041 = vshrl.u32 1326507024, %v2026
        %v2042 = vor.u32 %v2040, %v2041
        %vm2043 = vcmp.lt.s32.totalorder %v2024, 1
        %vm2044 = vcmp.lt.s32.totalorder %v2024, 2
        %vm2045 = vcmp.lt.s32.totalorder %v2024, 3
        %vm2046 = vcmp.lt.s32.totalorder %v2024, 4
        %v2047 = vsel %vm2043, %v2027, %v2030
        %v2048 = vsel %vm2046, %v2036, 2102212464
        %v2049 = vsel %vm2045, %v2033, %v2048
        %v2050 = vsel %vm2044, %v2047, %v2049
        %v2051 = vsel %vm2043, %v2030, %v2033
        %v2052 = vsel %vm2046, %v2039, 920167782
        %v2053 = vsel %vm2045, %v2036, %v2052
        %v2054 = vsel %vm2044, %v2051, %v2053
        %v2055 = vsel %vm2043, %v2033, %v2036
        %v2056 = vsel %vm2046, %v2042, 1326507024
        %v2057 = vsel %vm2045, %v2039, %v2056
        %v2058 = vsel %vm2044, %v2055, %v2057
        %v2059 = vshll.u32 %v2019, 8
        %v2060 = vmul.u32.u64.compose %v2059, %v2058
        %v2061 = vextract.low.u32 %v2060
        %v2062 = vextract.high.u32 %v2060
        %v2063 = vmul.u32.u64.compose %v2059, %v2054
        %v2064 = vextract.low.u32 %v2063
        %v2065 = vextract.high.u32 %v2063
        %v2066 = vmul.u32 %v2059, %v2050
        %v2067 = vadd.s32 %v2062, %v2064
        %vm2068 = vc.u32 %v2062, %v2064
        %v2069 = vadd.s32 %v2065, 1
        %v2070 = vsel %vm2068, %v2069, %v2065
        %v2071 = vadd.s32 %v2066, %v2070
        %v2072 = vadd.s32 %v2071, 536870912
        %v2073 = vshrl.u32 %v2072, 30
        %v2074 = vshll.u32 %v2073, 30
        %v2075 = vsub.s32 %v2071, %v2074
        %vm2076 = vcmp.lt.s32.totalorder %v2075, 0
        %v2077 = vsub.s32 0, %v2075
        %v2078 = vsel %vm2076, %v2077, %v2075
        %v2079 = vclz %v2078
        %v2080 = vsub.s32 %v2079, 2
        %vm2081 = vcmp.gt.s32.totalorder 0, %v2080
        %v2082 = vsel %vm2081, 0, %v2080
        %v2083 = vsub.s32 32, %v2082
        %v2084 = vshll.u32 %v2075, %v2082
        %v2085 = vshrl.u32 %v2067, %v2083
        %v2086 = vor.u32 %v2084, %v2085
        %v2087 = vsub.s32 4294967266, %v2082
        %v2088 = vadd.s32 %v2087, 127
        %v2089 = vshll.u32 %v2088, 23
        %v2090 = vor.u32 4788187, %v2089
        %v2091 = vand.u32 2147483647, %v2090
        %v2093 = vcvt.s32.f32 %v2086
        %v2094 = vmul.f32 %v2093, %v2091
        %v2095 = vxor.u32 %v2094, 2147483648
        %v2096 = vsel %vm2013, %v2095, %v2094
        %v2097 = vsub.s32 4, %v2073
        %v2098 = vsel %vm2013, %v2097, %v2073
        %v2099 = vsel %vm2012, %v2009, %v2096
        %v2100 = vsel %vm2012, 0, %v2098
        %v2101 = vcosq.f32.pop %v2099
        %v2102 = vsinq.f32.pop %v2099
        %vm2103 = vweird.f32 %v2009
        %v2104 = vand.u32 %v2100, 3
        %vm2105 = vcmp.lt.s32.totalorder %v2104, 2
        %vm2106 = vcmp.eq.s32.totalorder %v2104, 0
        %v2107 = vxor.u32 %v2102, 2147483648
        %v2108 = vsel %vm2106, %v2101, %v2107
        %vm2109 = vcmp.eq.s32.totalorder %v2104, 2
        %v2110 = vxor.u32 %v2101, 2147483648
        %v2111 = vsel %vm2109, %v2110, %v2102
        %v2112 = vsel %vm2105, %v2108, %v2111
        %v2113 = vsel %vm2103, nan, %v2112
        %v2114 = vand.u32 2147483647, %v2010
        %vm2115 = vcmp.le.f32.partialorder %v2114, 0.7853982
        %vm2116 = vcmp.lt.s32.totalorder %v2010, 0
        %v2117 = vand.u32 %v2010, 2139095040
        %v2118 = vshrl.u32 %v2117, 23
        %v2119 = vsub.s32 %v2118, 127
        %v2120 = vand.u32 2147483647, %v2010
        %v2121 = vand.u32 %v2120, 8388607
        %v2122 = vor.u32 %v2121, 8388608
        %v2123 = vsub.s32 0, %v2122
        %v2124 = vadd.s32 %v2119, 1
        %vm2125 = vcmp.gt.s32.totalorder %v2124, 0
        %v2126 = vsel %vm2125, %v2124, 0
        %v2127 = vshrl.u32 %v2126, 5
        %v2128 = vand.u32 %v2126, 31
        %v2129 = vsub.s32 32, %v2128
        %v2130 = vshrl.u32 683565275, %v2129
        %v2131 = vshll.u32 683565275, %v2128
        %v2132 = vshrl.u32 2475754826, %v2129
        %v2133 = vor.u32 %v2131, %v2132
        %v2134 = vshll.u32 2475754826, %v2128
        %v2135 = vshrl.u32 2131351028, %v2129
        %v2136 = vor.u32 %v2134, %v2135
        %v2137 = vshll.u32 2131351028, %v2128
        %v2138 = vshrl.u32 2102212464, %v2129
        %v2139 = vor.u32 %v2137, %v2138
        %v2140 = vshll.u32 2102212464, %v2128
        %v2141 = vshrl.u32 920167782, %v2129
        %v2142 = vor.u32 %v2140, %v2141
        %v2143 = vshll.u32 920167782, %v2128
        %v2144 = vshrl.u32 1326507024, %v2129
        %v2145 = vor.u32 %v2143, %v2144
        %vm2146 = vcmp.lt.s32.totalorder %v2127, 1
        %vm2147 = vcmp.lt.s32.totalorder %v2127, 2
        %vm2148 = vcmp.lt.s32.totalorder %v2127, 3
        %vm2149 = vcmp.lt.s32.totalorder %v2127, 4
        %v2150 = vsel %vm2146, %v2130, %v2133
        %v2151 = vsel %vm2149, %v2139, 2102212464
        %v2152 = vsel %vm2148, %v2136, %v2151
        %v2153 = vsel %vm2147, %v2150, %v2152
        %v2154 = vsel %vm2146, %v2133, %v2136
        %v2155 = vsel %vm2149, %v2142, 920167782
        %v2156 = vsel %vm2148, %v2139, %v2155
        %v2157 = vsel %vm2147, %v2154, %v2156
        %v2158 = vsel %vm2146, %v2136, %v2139
        %v2159 = vsel %vm2149, %v2145, 1326507024
        %v2160 = vsel %vm2148, %v2142, %v2159
        %v2161 = vsel %vm2147, %v2158, %v2160
        %v2162 = vshll.u32 %v2122, 8
        %v2163 = vmul.u32.u64.compose %v2162, %v2161
        %v2164 = vextract.low.u32 %v2163
        %v2165 = vextract.high.u32 %v2163
        %v2166 = vmul.u32.u64.compose %v2162, %v2157
        %v2167 = vextract.low.u32 %v2166
        %v2168 = vextract.high.u32 %v2166
        %v2169 = vmul.u32 %v2162, %v2153
        %v2170 = vadd.s32 %v2165, %v2167
        %vm2171 = vc.u32 %v2165, %v2167
        %v2172 = vadd.s32 %v2168, 1
        %v2173 = vsel %vm2171, %v2172, %v2168
        %v2174 = vadd.s32 %v2169, %v2173
        %v2175 = vadd.s32 %v2174, 536870912
        %v2176 = vshrl.u32 %v2175, 30
        %v2177 = vshll.u32 %v2176, 30
        %v2178 = vsub.s32 %v2174, %v2177
        %vm2179 = vcmp.lt.s32.totalorder %v2178, 0
        %v2180 = vsub.s32 0, %v2178
        %v2181 = vsel %vm2179, %v2180, %v2178
        %v2182 = vclz %v2181
        %v2183 = vsub.s32 %v2182, 2
        %vm2184 = vcmp.gt.s32.totalorder 0, %v2183
        %v2185 = vsel %vm2184, 0, %v2183
        %v2186 = vsub.s32 32, %v2185
        %v2187 = vshll.u32 %v2178, %v2185
        %v2188 = vshrl.u32 %v2170, %v2186
        %v2189 = vor.u32 %v2187, %v2188
        %v2190 = vsub.s32 4294967266, %v2185
        %v2191 = vadd.s32 %v2190, 127
        %v2192 = vshll.u32 %v2191, 23
        %v2193 = vor.u32 4788187, %v2192
        %v2194 = vand.u32 2147483647, %v2193
        %v2196 = vcvt.s32.f32 %v2189
        %v2197 = vmul.f32 %v2196, %v2194
        %v2198 = vxor.u32 %v2197, 2147483648
        %v2199 = vsel %vm2116, %v2198, %v2197
        %v2200 = vsub.s32 4, %v2176
        %v2201 = vsel %vm2116, %v2200, %v2176
        %v2202 = vsel %vm2115, %v2010, %v2199
        %v2203 = vsel %vm2115, 0, %v2201
        %v2204 = vcosq.f32.pop %v2202
        %v2205 = vsinq.f32.pop %v2202
        %vm2206 = vweird.f32 %v2010
        %v2207 = vand.u32 %v2203, 3
        %vm2208 = vcmp.lt.s32.totalorder %v2207, 2
        %vm2209 = vcmp.eq.s32.totalorder %v2207, 0
        %v2210 = vxor.u32 %v2205, 2147483648
        %v2211 = vsel %vm2209, %v2204, %v2210
        %vm2212 = vcmp.eq.s32.totalorder %v2207, 2
        %v2213 = vxor.u32 %v2204, 2147483648
        %v2214 = vsel %vm2212, %v2213, %v2205
        %v2215 = vsel %vm2208, %v2211, %v2214
        %v2216 = vsel %vm2206, nan, %v2215
        %v2217 = vmul.f32 %v2001, %v2113
        %v2218 = vmul.f32 %v2008, %v2216
        %v2219 = vand.u32 2147483647, %v2009
        %vm2220 = vcmp.le.f32.partialorder %v2219, 0.7853982
        %vm2221 = vcmp.lt.s32.totalorder %v2009, 0
        %v2222 = vand.u32 %v2009, 2139095040
        %v2223 = vshrl.u32 %v2222, 23
        %v2224 = vsub.s32 %v2223, 127
        %v2225 = vand.u32 2147483647, %v2009
        %v2226 = vand.u32 %v2225, 8388607
        %v2227 = vor.u32 %v2226, 8388608
        %v2228 = vsub.s32 0, %v2227
        %v2229 = vadd.s32 %v2224, 1
        %vm2230 = vcmp.gt.s32.totalorder %v2229, 0
        %v2231 = vsel %vm2230, %v2229, 0
        %v2232 = vshrl.u32 %v2231, 5
        %v2233 = vand.u32 %v2231, 31
        %v2234 = vsub.s32 32, %v2233
        %v2235 = vshrl.u32 683565275, %v2234
        %v2236 = vshll.u32 683565275, %v2233
        %v2237 = vshrl.u32 2475754826, %v2234
        %v2238 = vor.u32 %v2236, %v2237
        %v2239 = vshll.u32 2475754826, %v2233
        %v2240 = vshrl.u32 2131351028, %v2234
        %v2241 = vor.u32 %v2239, %v2240
        %v2242 = vshll.u32 2131351028, %v2233
        %v2243 = vshrl.u32 2102212464, %v2234
        %v2244 = vor.u32 %v2242, %v2243
        %v2245 = vshll.u32 2102212464, %v2233
        %v2246 = vshrl.u32 920167782, %v2234
        %v2247 = vor.u32 %v2245, %v2246
        %v2248 = vshll.u32 920167782, %v2233
        %v2249 = vshrl.u32 1326507024, %v2234
        %v2250 = vor.u32 %v2248, %v2249
        %vm2251 = vcmp.lt.s32.totalorder %v2232, 1
        %vm2252 = vcmp.lt.s32.totalorder %v2232, 2
        %vm2253 = vcmp.lt.s32.totalorder %v2232, 3
        %vm2254 = vcmp.lt.s32.totalorder %v2232, 4
        %v2255 = vsel %vm2251, %v2235, %v2238
        %v2256 = vsel %vm2254, %v2244, 2102212464
        %v2257 = vsel %vm2253, %v2241, %v2256
        %v2258 = vsel %vm2252, %v2255, %v2257
        %v2259 = vsel %vm2251, %v2238, %v2241
        %v2260 = vsel %vm2254, %v2247, 920167782
        %v2261 = vsel %vm2253, %v2244, %v2260
        %v2262 = vsel %vm2252, %v2259, %v2261
        %v2263 = vsel %vm2251, %v2241, %v2244
        %v2264 = vsel %vm2254, %v2250, 1326507024
        %v2265 = vsel %vm2253, %v2247, %v2264
        %v2266 = vsel %vm2252, %v2263, %v2265
        %v2267 = vshll.u32 %v2227, 8
        %v2268 = vmul.u32.u64.compose %v2267, %v2266
        %v2269 = vextract.low.u32 %v2268
        %v2270 = vextract.high.u32 %v2268
        %v2271 = vmul.u32.u64.compose %v2267, %v2262
        %v2272 = vextract.low.u32 %v2271
        %v2273 = vextract.high.u32 %v2271
        %v2274 = vmul.u32 %v2267, %v2258
        %v2275 = vadd.s32 %v2270, %v2272
        %vm2276 = vc.u32 %v2270, %v2272
        %v2277 = vadd.s32 %v2273, 1
        %v2278 = vsel %vm2276, %v2277, %v2273
        %v2279 = vadd.s32 %v2274, %v2278
        %v2280 = vadd.s32 %v2279, 536870912
        %v2281 = vshrl.u32 %v2280, 30
        %v2282 = vshll.u32 %v2281, 30
        %v2283 = vsub.s32 %v2279, %v2282
        %vm2284 = vcmp.lt.s32.totalorder %v2283, 0
        %v2285 = vsub.s32 0, %v2283
        %v2286 = vsel %vm2284, %v2285, %v2283
        %v2287 = vclz %v2286
        %v2288 = vsub.s32 %v2287, 2
        %vm2289 = vcmp.gt.s32.totalorder 0, %v2288
        %v2290 = vsel %vm2289, 0, %v2288
        %v2291 = vsub.s32 32, %v2290
        %v2292 = vshll.u32 %v2283, %v2290
        %v2293 = vshrl.u32 %v2275, %v2291
        %v2294 = vor.u32 %v2292, %v2293
        %v2295 = vsub.s32 4294967266, %v2290
        %v2296 = vadd.s32 %v2295, 127
        %v2297 = vshll.u32 %v2296, 23
        %v2298 = vor.u32 4788187, %v2297
        %v2299 = vand.u32 2147483647, %v2298
        %v2301 = vcvt.s32.f32 %v2294
        %v2302 = vmul.f32 %v2301, %v2299
        %v2303 = vxor.u32 %v2302, 2147483648
        %v2304 = vsel %vm2221, %v2303, %v2302
        %v2305 = vsub.s32 4, %v2281
        %v2306 = vsel %vm2221, %v2305, %v2281
        %v2307 = vsel %vm2220, %v2009, %v2304
        %v2308 = vsel %vm2220, 0, %v2306
        %v2309 = vcosq.f32.pop %v2307
        %v2310 = vsinq.f32.pop %v2307
        %vm2311 = vweird.f32 %v2009
        %v2312 = vadd.s32 %v2308, 3
        %v2313 = vand.u32 %v2312, 3
        %vm2314 = vcmp.lt.s32.totalorder %v2313, 2
        %vm2315 = vcmp.eq.s32.totalorder %v2313, 0
        %v2316 = vxor.u32 %v2310, 2147483648
        %v2317 = vsel %vm2315, %v2309, %v2316
        %vm2318 = vcmp.eq.s32.totalorder %v2313, 2
        %v2319 = vxor.u32 %v2309, 2147483648
        %v2320 = vsel %vm2318, %v2319, %v2310
        %v2321 = vsel %vm2314, %v2317, %v2320
        %v2322 = vsel %vm2311, nan, %v2321
        %v2323 = vand.u32 2147483647, %v2010
        %vm2324 = vcmp.le.f32.partialorder %v2323, 0.7853982
        %vm2325 = vcmp.lt.s32.totalorder %v2010, 0
        %v2326 = vand.u32 %v2010, 2139095040
        %v2327 = vshrl.u32 %v2326, 23
        %v2328 = vsub.s32 %v2327, 127
        %v2329 = vand.u32 2147483647, %v2010
        %v2330 = vand.u32 %v2329, 8388607
        %v2331 = vor.u32 %v2330, 8388608
        %v2332 = vsub.s32 0, %v2331
        %v2333 = vadd.s32 %v2328, 1
        %vm2334 = vcmp.gt.s32.totalorder %v2333, 0
        %v2335 = vsel %vm2334, %v2333, 0
        %v2336 = vshrl.u32 %v2335, 5
        %v2337 = vand.u32 %v2335, 31
        %v2338 = vsub.s32 32, %v2337
        %v2339 = vshrl.u32 683565275, %v2338
        %v2340 = vshll.u32 683565275, %v2337
        %v2341 = vshrl.u32 2475754826, %v2338
        %v2342 = vor.u32 %v2340, %v2341
        %v2343 = vshll.u32 2475754826, %v2337
        %v2344 = vshrl.u32 2131351028, %v2338
        %v2345 = vor.u32 %v2343, %v2344
        %v2346 = vshll.u32 2131351028, %v2337
        %v2347 = vshrl.u32 2102212464, %v2338
        %v2348 = vor.u32 %v2346, %v2347
        %v2349 = vshll.u32 2102212464, %v2337
        %v2350 = vshrl.u32 920167782, %v2338
        %v2351 = vor.u32 %v2349, %v2350
        %v2352 = vshll.u32 920167782, %v2337
        %v2353 = vshrl.u32 1326507024, %v2338
        %v2354 = vor.u32 %v2352, %v2353
        %vm2355 = vcmp.lt.s32.totalorder %v2336, 1
        %vm2356 = vcmp.lt.s32.totalorder %v2336, 2
        %vm2357 = vcmp.lt.s32.totalorder %v2336, 3
        %vm2358 = vcmp.lt.s32.totalorder %v2336, 4
        %v2359 = vsel %vm2355, %v2339, %v2342
        %v2360 = vsel %vm2358, %v2348, 2102212464
        %v2361 = vsel %vm2357, %v2345, %v2360
        %v2362 = vsel %vm2356, %v2359, %v2361
        %v2363 = vsel %vm2355, %v2342, %v2345
        %v2364 = vsel %vm2358, %v2351, 920167782
        %v2365 = vsel %vm2357, %v2348, %v2364
        %v2366 = vsel %vm2356, %v2363, %v2365
        %v2367 = vsel %vm2355, %v2345, %v2348
        %v2368 = vsel %vm2358, %v2354, 1326507024
        %v2369 = vsel %vm2357, %v2351, %v2368
        %v2370 = vsel %vm2356, %v2367, %v2369
        %v2371 = vshll.u32 %v2331, 8
        %v2372 = vmul.u32.u64.compose %v2371, %v2370
        %v2373 = vextract.low.u32 %v2372
        %v2374 = vextract.high.u32 %v2372
        %v2375 = vmul.u32.u64.compose %v2371, %v2366
        %v2376 = vextract.low.u32 %v2375
        %v2377 = vextract.high.u32 %v2375
        %v2378 = vmul.u32 %v2371, %v2362
        %v2379 = vadd.s32 %v2374, %v2376
        %vm2380 = vc.u32 %v2374, %v2376
        %v2381 = vadd.s32 %v2377, 1
        %v2382 = vsel %vm2380, %v2381, %v2377
        %v2383 = vadd.s32 %v2378, %v2382
        %v2384 = vadd.s32 %v2383, 536870912
        %v2385 = vshrl.u32 %v2384, 30
        %v2386 = vshll.u32 %v2385, 30
        %v2387 = vsub.s32 %v2383, %v2386
        %vm2388 = vcmp.lt.s32.totalorder %v2387, 0
        %v2389 = vsub.s32 0, %v2387
        %v2390 = vsel %vm2388, %v2389, %v2387
        %v2391 = vclz %v2390
        %v2392 = vsub.s32 %v2391, 2
        %vm2393 = vcmp.gt.s32.totalorder 0, %v2392
        %v2394 = vsel %vm2393, 0, %v2392
        %v2395 = vsub.s32 32, %v2394
        %v2396 = vshll.u32 %v2387, %v2394
        %v2397 = vshrl.u32 %v2379, %v2395
        %v2398 = vor.u32 %v2396, %v2397
        %v2399 = vsub.s32 4294967266, %v2394
        %v2400 = vadd.s32 %v2399, 127
        %v2401 = vshll.u32 %v2400, 23
        %v2402 = vor.u32 4788187, %v2401
        %v2403 = vand.u32 2147483647, %v2402
        %v2405 = vcvt.s32.f32 %v2398
        %v2406 = vmul.f32 %v2405, %v2403
        %v2407 = vxor.u32 %v2406, 2147483648
        %v2408 = vsel %vm2325, %v2407, %v2406
        %v2409 = vsub.s32 4, %v2385
        %v2410 = vsel %vm2325, %v2409, %v2385
        %v2411 = vsel %vm2324, %v2010, %v2408
        %v2412 = vsel %vm2324, 0, %v2410
        %v2413 = vcosq.f32.pop %v2411
        %v2414 = vsinq.f32.pop %v2411
        %vm2415 = vweird.f32 %v2010
        %v2416 = vadd.s32 %v2412, 3
        %v2417 = vand.u32 %v2416, 3
        %vm2418 = vcmp.lt.s32.totalorder %v2417, 2
        %vm2419 = vcmp.eq.s32.totalorder %v2417, 0
        %v2420 = vxor.u32 %v2414, 2147483648
        %v2421 = vsel %vm2419, %v2413, %v2420
        %vm2422 = vcmp.eq.s32.totalorder %v2417, 2
        %v2423 = vxor.u32 %v2413, 2147483648
        %v2424 = vsel %vm2422, %v2423, %v2414
        %v2425 = vsel %vm2418, %v2421, %v2424
        %v2426 = vsel %vm2415, nan, %v2425
        %v2427 = vmul.f32 %v2001, %v2322
        %v2428 = vmul.f32 %v2008, %v2426
        %v2429 = vmul.f32 %v1310, %v1937
        %v2430 = vmul.f32 %v1315, %v1938
        %v2431 = vmul.f32 %v1322, %v2217
        %v2432 = vmul.f32 %v1327, %v2218
        %v2433 = vadd.f32 %v2429, %v2431
        %v2434 = vadd.f32 %v2430, %v2432
        %s2435 = scalar_lea.vmem %s296, 64 [#allocation8]
        %2436 = vst.msk [vmem:[%s2435] sm:$0xff] %vm1333, %v2433
        %2437 = vst.msk [vmem:[%s2435 + $0x8] sm:$0xff] %vm1333, %v2434
        %v2438 = vmul.f32 %v1921, %v668
        %v2439 = vmul.f32 %v1922, %v771
        %v2440 = vmul.f32 %v1927, %v461
        %v2441 = vmul.f32 %v1928, %v565
        %v2442 = vadd.f32 %v2438, %v2440
        %v2443 = vadd.f32 %v2439, %v2441
        %v2444 = vmul.f32 %v1927, %v668
        %v2445 = vmul.f32 %v1928, %v771
        %v2446 = vmul.f32 %v1921, %v461
        %v2447 = vmul.f32 %v1922, %v565
        %v2448 = vsub.f32 %v2444, %v2446
        %v2449 = vsub.f32 %v2445, %v2447
        %s2450 = sld [smem:[#allocation3 + $0x5]]
        %v2451 = vstv %s2450
        %v2452 = vmul.f32 %v2442, %v2451
        %v2453 = vmul.f32 %v2443, %v2451
        %s2454 = sld [smem:[#allocation6 + $0x5]]
        %v2455 = vstv %s2454
        %v2456 = vmul.f32 %v2448, %v2455
        %v2457 = vmul.f32 %v2449, %v2455
        %v2458 = vadd.f32 %v2452, %v2456
        %v2459 = vadd.f32 %v2453, %v2457
        %v2460 = vmul.f32 %v1310, %v2458
        %v2461 = vmul.f32 %v1315, %v2459
        %v2462 = vmul.f32 %v1322, %v2427
        %v2463 = vmul.f32 %v1327, %v2428
        %v2464 = vadd.f32 %v2460, %v2462
        %v2465 = vadd.f32 %v2461, %v2463
        %s2466 = scalar_lea.vmem %s296, 80 [#allocation8]
        %2467 = vst.msk [vmem:[%s2466] sm:$0xff] %vm1333, %v2464
        %2468 = vst.msk [vmem:[%s2466 + $0x8] sm:$0xff] %vm1333, %v2465
        %v2469 = vmul.f32 %v2442, %v668
        %v2470 = vmul.f32 %v2443, %v771
        %v2471 = vmul.f32 %v2448, %v461
        %v2472 = vmul.f32 %v2449, %v565
        %v2473 = vadd.f32 %v2469, %v2471
        %v2474 = vadd.f32 %v2470, %v2472
        %v2475 = vmul.f32 %v2448, %v668
        %v2476 = vmul.f32 %v2449, %v771
        %v2477 = vmul.f32 %v2442, %v461
        %v2478 = vmul.f32 %v2443, %v565
        %v2479 = vsub.f32 %v2475, %v2477
        %v2480 = vsub.f32 %v2476, %v2478
        %s2481 = sld [smem:[#allocation3 + $0x6]]
        %v2482 = vstv %s2481
        %v2483 = vmul.f32 %v2473, %v2482
        %v2484 = vmul.f32 %v2474, %v2482
        %s2485 = sld [smem:[#allocation6 + $0x6]]
        %v2486 = vstv %s2485
        %v2487 = vmul.f32 %v2479, %v2486
        %v2488 = vmul.f32 %v2480, %v2486
        %v2489 = vadd.f32 %v2483, %v2487
        %v2490 = vadd.f32 %v2484, %v2488
        %v2491 = vadd.s32 %v807, 6
        %v2492 = vadd.s32 %v808, 6
        %v2493 = vadd.s32 %v807, 7
        %v2494 = vadd.s32 %v808, 7
        %v2495 = vshrl.u32 %v2491, 16
        %v2496 = vshrl.u32 %v2492, 16
        %v2497 = vxor.u32 %v2491, %v2495
        %v2498 = vxor.u32 %v2492, %v2496
        %v2499 = vmul.u32 %v2497, 2146121005
        %v2500 = vmul.u32 %v2498, 2146121005
        %v2501 = vshrl.u32 %v2499, 15
        %v2502 = vshrl.u32 %v2500, 15
        %v2503 = vxor.u32 %v2499, %v2501
        %v2504 = vxor.u32 %v2500, %v2502
        %v2505 = vmul.u32 %v2503, 2221713035
        %v2506 = vmul.u32 %v2504, 2221713035
        %v2507 = vshrl.u32 %v2505, 16
        %v2508 = vshrl.u32 %v2506, 16
        %v2509 = vxor.u32 %v2505, %v2507
        %v2510 = vxor.u32 %v2506, %v2508
        %v2511 = vand.u32 %v2509, 8388607
        %v2512 = vand.u32 %v2510, 8388607
        %v2513 = vcvt.s32.f32 %v2511
        %v2514 = vcvt.s32.f32 %v2512
        %v2515 = vadd.f32 %v2513, 1.0
        %v2516 = vadd.f32 %v2514, 1.0
        %v2517 = vmul.f32 %v2515, 1.1920929e-07
        %v2518 = vmul.f32 %v2516, 1.1920929e-07
        %v2519 = vshrl.u32 %v2493, 16
        %v2520 = vshrl.u32 %v2494, 16
        %v2521 = vxor.u32 %v2493, %v2519
        %v2522 = vxor.u32 %v2494, %v2520
        %v2523 = vmul.u32 %v2521, 2146121005
        %v2524 = vmul.u32 %v2522, 2146121005
        %v2525 = vshrl.u32 %v2523, 15
        %v2526 = vshrl.u32 %v2524, 15
        %v2527 = vxor.u32 %v2523, %v2525
        %v2528 = vxor.u32 %v2524, %v2526
        %v2529 = vmul.u32 %v2527, 2221713035
        %v2530 = vmul.u32 %v2528, 2221713035
        %v2531 = vshrl.u32 %v2529, 16
        %v2532 = vshrl.u32 %v2530, 16
        %v2533 = vxor.u32 %v2529, %v2531
        %v2534 = vxor.u32 %v2530, %v2532
        %v2535 = vand.u32 %v2533, 8388607
        %v2536 = vand.u32 %v2534, 8388607
        %v2537 = vcvt.s32.f32 %v2535
        %v2538 = vcvt.s32.f32 %v2536
        %v2539 = vmul.f32 %v2537, 1.1920929e-07
        %v2540 = vmul.f32 %v2538, 1.1920929e-07
        %v2541 = vlog2.pop %v2517
        %v2542 = vmul.f32 %v2541, 0.6931472
        %v2543 = vlog2.pop %v2518
        %v2544 = vmul.f32 %v2543, 0.6931472
        %v2545 = vmul.f32 %v2542, -2.0
        %v2546 = vmul.f32 %v2544, -2.0
        %v2547 = vrsqrt.pop %v2545
        %v2548 = vmul.f32 %v2545, %v2547
        %vm2549 = vcmp.eq.f32.partialorder %v2545, inf
        %v2550 = vsel %vm2549, %v2545, %v2548
        %vm2551 = vcmp.eq.f32.partialorder %v2545, 0.0
        %v2552 = vand.u32 %v2545, 2147483648
        %v2553 = vsel %vm2551, %v2552, %v2550
        %v2554 = vrsqrt.pop %v2546
        %v2555 = vmul.f32 %v2546, %v2554
        %vm2556 = vcmp.eq.f32.partialorder %v2546, inf
        %v2557 = vsel %vm2556, %v2546, %v2555
        %vm2558 = vcmp.eq.f32.partialorder %v2546, 0.0
        %v2559 = vand.u32 %v2546, 2147483648
        %v2560 = vsel %vm2558, %v2559, %v2557
        %v2561 = vmul.f32 %v2539, 6.2831855
        %v2562 = vmul.f32 %v2540, 6.2831855
        %v2563 = vand.u32 2147483647, %v2561
        %vm2564 = vcmp.le.f32.partialorder %v2563, 0.7853982
        %vm2565 = vcmp.lt.s32.totalorder %v2561, 0
        %v2566 = vand.u32 %v2561, 2139095040
        %v2567 = vshrl.u32 %v2566, 23
        %v2568 = vsub.s32 %v2567, 127
        %v2569 = vand.u32 2147483647, %v2561
        %v2570 = vand.u32 %v2569, 8388607
        %v2571 = vor.u32 %v2570, 8388608
        %v2572 = vsub.s32 0, %v2571
        %v2573 = vadd.s32 %v2568, 1
        %vm2574 = vcmp.gt.s32.totalorder %v2573, 0
        %v2575 = vsel %vm2574, %v2573, 0
        %v2576 = vshrl.u32 %v2575, 5
        %v2577 = vand.u32 %v2575, 31
        %v2578 = vsub.s32 32, %v2577
        %v2579 = vshrl.u32 683565275, %v2578
        %v2580 = vshll.u32 683565275, %v2577
        %v2581 = vshrl.u32 2475754826, %v2578
        %v2582 = vor.u32 %v2580, %v2581
        %v2583 = vshll.u32 2475754826, %v2577
        %v2584 = vshrl.u32 2131351028, %v2578
        %v2585 = vor.u32 %v2583, %v2584
        %v2586 = vshll.u32 2131351028, %v2577
        %v2587 = vshrl.u32 2102212464, %v2578
        %v2588 = vor.u32 %v2586, %v2587
        %v2589 = vshll.u32 2102212464, %v2577
        %v2590 = vshrl.u32 920167782, %v2578
        %v2591 = vor.u32 %v2589, %v2590
        %v2592 = vshll.u32 920167782, %v2577
        %v2593 = vshrl.u32 1326507024, %v2578
        %v2594 = vor.u32 %v2592, %v2593
        %vm2595 = vcmp.lt.s32.totalorder %v2576, 1
        %vm2596 = vcmp.lt.s32.totalorder %v2576, 2
        %vm2597 = vcmp.lt.s32.totalorder %v2576, 3
        %vm2598 = vcmp.lt.s32.totalorder %v2576, 4
        %v2599 = vsel %vm2595, %v2579, %v2582
        %v2600 = vsel %vm2598, %v2588, 2102212464
        %v2601 = vsel %vm2597, %v2585, %v2600
        %v2602 = vsel %vm2596, %v2599, %v2601
        %v2603 = vsel %vm2595, %v2582, %v2585
        %v2604 = vsel %vm2598, %v2591, 920167782
        %v2605 = vsel %vm2597, %v2588, %v2604
        %v2606 = vsel %vm2596, %v2603, %v2605
        %v2607 = vsel %vm2595, %v2585, %v2588
        %v2608 = vsel %vm2598, %v2594, 1326507024
        %v2609 = vsel %vm2597, %v2591, %v2608
        %v2610 = vsel %vm2596, %v2607, %v2609
        %v2611 = vshll.u32 %v2571, 8
        %v2612 = vmul.u32.u64.compose %v2611, %v2610
        %v2613 = vextract.low.u32 %v2612
        %v2614 = vextract.high.u32 %v2612
        %v2615 = vmul.u32.u64.compose %v2611, %v2606
        %v2616 = vextract.low.u32 %v2615
        %v2617 = vextract.high.u32 %v2615
        %v2618 = vmul.u32 %v2611, %v2602
        %v2619 = vadd.s32 %v2614, %v2616
        %vm2620 = vc.u32 %v2614, %v2616
        %v2621 = vadd.s32 %v2617, 1
        %v2622 = vsel %vm2620, %v2621, %v2617
        %v2623 = vadd.s32 %v2618, %v2622
        %v2624 = vadd.s32 %v2623, 536870912
        %v2625 = vshrl.u32 %v2624, 30
        %v2626 = vshll.u32 %v2625, 30
        %v2627 = vsub.s32 %v2623, %v2626
        %vm2628 = vcmp.lt.s32.totalorder %v2627, 0
        %v2629 = vsub.s32 0, %v2627
        %v2630 = vsel %vm2628, %v2629, %v2627
        %v2631 = vclz %v2630
        %v2632 = vsub.s32 %v2631, 2
        %vm2633 = vcmp.gt.s32.totalorder 0, %v2632
        %v2634 = vsel %vm2633, 0, %v2632
        %v2635 = vsub.s32 32, %v2634
        %v2636 = vshll.u32 %v2627, %v2634
        %v2637 = vshrl.u32 %v2619, %v2635
        %v2638 = vor.u32 %v2636, %v2637
        %v2639 = vsub.s32 4294967266, %v2634
        %v2640 = vadd.s32 %v2639, 127
        %v2641 = vshll.u32 %v2640, 23
        %v2642 = vor.u32 4788187, %v2641
        %v2643 = vand.u32 2147483647, %v2642
        %v2645 = vcvt.s32.f32 %v2638
        %v2646 = vmul.f32 %v2645, %v2643
        %v2647 = vxor.u32 %v2646, 2147483648
        %v2648 = vsel %vm2565, %v2647, %v2646
        %v2649 = vsub.s32 4, %v2625
        %v2650 = vsel %vm2565, %v2649, %v2625
        %v2651 = vsel %vm2564, %v2561, %v2648
        %v2652 = vsel %vm2564, 0, %v2650
        %v2653 = vcosq.f32.pop %v2651
        %v2654 = vsinq.f32.pop %v2651
        %vm2655 = vweird.f32 %v2561
        %v2656 = vand.u32 %v2652, 3
        %vm2657 = vcmp.lt.s32.totalorder %v2656, 2
        %vm2658 = vcmp.eq.s32.totalorder %v2656, 0
        %v2659 = vxor.u32 %v2654, 2147483648
        %v2660 = vsel %vm2658, %v2653, %v2659
        %vm2661 = vcmp.eq.s32.totalorder %v2656, 2
        %v2662 = vxor.u32 %v2653, 2147483648
        %v2663 = vsel %vm2661, %v2662, %v2654
        %v2664 = vsel %vm2657, %v2660, %v2663
        %v2665 = vsel %vm2655, nan, %v2664
        %v2666 = vand.u32 2147483647, %v2562
        %vm2667 = vcmp.le.f32.partialorder %v2666, 0.7853982
        %vm2668 = vcmp.lt.s32.totalorder %v2562, 0
        %v2669 = vand.u32 %v2562, 2139095040
        %v2670 = vshrl.u32 %v2669, 23
        %v2671 = vsub.s32 %v2670, 127
        %v2672 = vand.u32 2147483647, %v2562
        %v2673 = vand.u32 %v2672, 8388607
        %v2674 = vor.u32 %v2673, 8388608
        %v2675 = vsub.s32 0, %v2674
        %v2676 = vadd.s32 %v2671, 1
        %vm2677 = vcmp.gt.s32.totalorder %v2676, 0
        %v2678 = vsel %vm2677, %v2676, 0
        %v2679 = vshrl.u32 %v2678, 5
        %v2680 = vand.u32 %v2678, 31
        %v2681 = vsub.s32 32, %v2680
        %v2682 = vshrl.u32 683565275, %v2681
        %v2683 = vshll.u32 683565275, %v2680
        %v2684 = vshrl.u32 2475754826, %v2681
        %v2685 = vor.u32 %v2683, %v2684
        %v2686 = vshll.u32 2475754826, %v2680
        %v2687 = vshrl.u32 2131351028, %v2681
        %v2688 = vor.u32 %v2686, %v2687
        %v2689 = vshll.u32 2131351028, %v2680
        %v2690 = vshrl.u32 2102212464, %v2681
        %v2691 = vor.u32 %v2689, %v2690
        %v2692 = vshll.u32 2102212464, %v2680
        %v2693 = vshrl.u32 920167782, %v2681
        %v2694 = vor.u32 %v2692, %v2693
        %v2695 = vshll.u32 920167782, %v2680
        %v2696 = vshrl.u32 1326507024, %v2681
        %v2697 = vor.u32 %v2695, %v2696
        %vm2698 = vcmp.lt.s32.totalorder %v2679, 1
        %vm2699 = vcmp.lt.s32.totalorder %v2679, 2
        %vm2700 = vcmp.lt.s32.totalorder %v2679, 3
        %vm2701 = vcmp.lt.s32.totalorder %v2679, 4
        %v2702 = vsel %vm2698, %v2682, %v2685
        %v2703 = vsel %vm2701, %v2691, 2102212464
        %v2704 = vsel %vm2700, %v2688, %v2703
        %v2705 = vsel %vm2699, %v2702, %v2704
        %v2706 = vsel %vm2698, %v2685, %v2688
        %v2707 = vsel %vm2701, %v2694, 920167782
        %v2708 = vsel %vm2700, %v2691, %v2707
        %v2709 = vsel %vm2699, %v2706, %v2708
        %v2710 = vsel %vm2698, %v2688, %v2691
        %v2711 = vsel %vm2701, %v2697, 1326507024
        %v2712 = vsel %vm2700, %v2694, %v2711
        %v2713 = vsel %vm2699, %v2710, %v2712
        %v2714 = vshll.u32 %v2674, 8
        %v2715 = vmul.u32.u64.compose %v2714, %v2713
        %v2716 = vextract.low.u32 %v2715
        %v2717 = vextract.high.u32 %v2715
        %v2718 = vmul.u32.u64.compose %v2714, %v2709
        %v2719 = vextract.low.u32 %v2718
        %v2720 = vextract.high.u32 %v2718
        %v2721 = vmul.u32 %v2714, %v2705
        %v2722 = vadd.s32 %v2717, %v2719
        %vm2723 = vc.u32 %v2717, %v2719
        %v2724 = vadd.s32 %v2720, 1
        %v2725 = vsel %vm2723, %v2724, %v2720
        %v2726 = vadd.s32 %v2721, %v2725
        %v2727 = vadd.s32 %v2726, 536870912
        %v2728 = vshrl.u32 %v2727, 30
        %v2729 = vshll.u32 %v2728, 30
        %v2730 = vsub.s32 %v2726, %v2729
        %vm2731 = vcmp.lt.s32.totalorder %v2730, 0
        %v2732 = vsub.s32 0, %v2730
        %v2733 = vsel %vm2731, %v2732, %v2730
        %v2734 = vclz %v2733
        %v2735 = vsub.s32 %v2734, 2
        %vm2736 = vcmp.gt.s32.totalorder 0, %v2735
        %v2737 = vsel %vm2736, 0, %v2735
        %v2738 = vsub.s32 32, %v2737
        %v2739 = vshll.u32 %v2730, %v2737
        %v2740 = vshrl.u32 %v2722, %v2738
        %v2741 = vor.u32 %v2739, %v2740
        %v2742 = vsub.s32 4294967266, %v2737
        %v2743 = vadd.s32 %v2742, 127
        %v2744 = vshll.u32 %v2743, 23
        %v2745 = vor.u32 4788187, %v2744
        %v2746 = vand.u32 2147483647, %v2745
        %v2748 = vcvt.s32.f32 %v2741
        %v2749 = vmul.f32 %v2748, %v2746
        %v2750 = vxor.u32 %v2749, 2147483648
        %v2751 = vsel %vm2668, %v2750, %v2749
        %v2752 = vsub.s32 4, %v2728
        %v2753 = vsel %vm2668, %v2752, %v2728
        %v2754 = vsel %vm2667, %v2562, %v2751
        %v2755 = vsel %vm2667, 0, %v2753
        %v2756 = vcosq.f32.pop %v2754
        %v2757 = vsinq.f32.pop %v2754
        %vm2758 = vweird.f32 %v2562
        %v2759 = vand.u32 %v2755, 3
        %vm2760 = vcmp.lt.s32.totalorder %v2759, 2
        %vm2761 = vcmp.eq.s32.totalorder %v2759, 0
        %v2762 = vxor.u32 %v2757, 2147483648
        %v2763 = vsel %vm2761, %v2756, %v2762
        %vm2764 = vcmp.eq.s32.totalorder %v2759, 2
        %v2765 = vxor.u32 %v2756, 2147483648
        %v2766 = vsel %vm2764, %v2765, %v2757
        %v2767 = vsel %vm2760, %v2763, %v2766
        %v2768 = vsel %vm2758, nan, %v2767
        %v2769 = vmul.f32 %v2553, %v2665
        %v2770 = vmul.f32 %v2560, %v2768
        %v2771 = vand.u32 2147483647, %v2561
        %vm2772 = vcmp.le.f32.partialorder %v2771, 0.7853982
        %vm2773 = vcmp.lt.s32.totalorder %v2561, 0
        %v2774 = vand.u32 %v2561, 2139095040
        %v2775 = vshrl.u32 %v2774, 23
        %v2776 = vsub.s32 %v2775, 127
        %v2777 = vand.u32 2147483647, %v2561
        %v2778 = vand.u32 %v2777, 8388607
        %v2779 = vor.u32 %v2778, 8388608
        %v2780 = vsub.s32 0, %v2779
        %v2781 = vadd.s32 %v2776, 1
        %vm2782 = vcmp.gt.s32.totalorder %v2781, 0
        %v2783 = vsel %vm2782, %v2781, 0
        %v2784 = vshrl.u32 %v2783, 5
        %v2785 = vand.u32 %v2783, 31
        %v2786 = vsub.s32 32, %v2785
        %v2787 = vshrl.u32 683565275, %v2786
        %v2788 = vshll.u32 683565275, %v2785
        %v2789 = vshrl.u32 2475754826, %v2786
        %v2790 = vor.u32 %v2788, %v2789
        %v2791 = vshll.u32 2475754826, %v2785
        %v2792 = vshrl.u32 2131351028, %v2786
        %v2793 = vor.u32 %v2791, %v2792
        %v2794 = vshll.u32 2131351028, %v2785
        %v2795 = vshrl.u32 2102212464, %v2786
        %v2796 = vor.u32 %v2794, %v2795
        %v2797 = vshll.u32 2102212464, %v2785
        %v2798 = vshrl.u32 920167782, %v2786
        %v2799 = vor.u32 %v2797, %v2798
        %v2800 = vshll.u32 920167782, %v2785
        %v2801 = vshrl.u32 1326507024, %v2786
        %v2802 = vor.u32 %v2800, %v2801
        %vm2803 = vcmp.lt.s32.totalorder %v2784, 1
        %vm2804 = vcmp.lt.s32.totalorder %v2784, 2
        %vm2805 = vcmp.lt.s32.totalorder %v2784, 3
        %vm2806 = vcmp.lt.s32.totalorder %v2784, 4
        %v2807 = vsel %vm2803, %v2787, %v2790
        %v2808 = vsel %vm2806, %v2796, 2102212464
        %v2809 = vsel %vm2805, %v2793, %v2808
        %v2810 = vsel %vm2804, %v2807, %v2809
        %v2811 = vsel %vm2803, %v2790, %v2793
        %v2812 = vsel %vm2806, %v2799, 920167782
        %v2813 = vsel %vm2805, %v2796, %v2812
        %v2814 = vsel %vm2804, %v2811, %v2813
        %v2815 = vsel %vm2803, %v2793, %v2796
        %v2816 = vsel %vm2806, %v2802, 1326507024
        %v2817 = vsel %vm2805, %v2799, %v2816
        %v2818 = vsel %vm2804, %v2815, %v2817
        %v2819 = vshll.u32 %v2779, 8
        %v2820 = vmul.u32.u64.compose %v2819, %v2818
        %v2821 = vextract.low.u32 %v2820
        %v2822 = vextract.high.u32 %v2820
        %v2823 = vmul.u32.u64.compose %v2819, %v2814
        %v2824 = vextract.low.u32 %v2823
        %v2825 = vextract.high.u32 %v2823
        %v2826 = vmul.u32 %v2819, %v2810
        %v2827 = vadd.s32 %v2822, %v2824
        %vm2828 = vc.u32 %v2822, %v2824
        %v2829 = vadd.s32 %v2825, 1
        %v2830 = vsel %vm2828, %v2829, %v2825
        %v2831 = vadd.s32 %v2826, %v2830
        %v2832 = vadd.s32 %v2831, 536870912
        %v2833 = vshrl.u32 %v2832, 30
        %v2834 = vshll.u32 %v2833, 30
        %v2835 = vsub.s32 %v2831, %v2834
        %vm2836 = vcmp.lt.s32.totalorder %v2835, 0
        %v2837 = vsub.s32 0, %v2835
        %v2838 = vsel %vm2836, %v2837, %v2835
        %v2839 = vclz %v2838
        %v2840 = vsub.s32 %v2839, 2
        %vm2841 = vcmp.gt.s32.totalorder 0, %v2840
        %v2842 = vsel %vm2841, 0, %v2840
        %v2843 = vsub.s32 32, %v2842
        %v2844 = vshll.u32 %v2835, %v2842
        %v2845 = vshrl.u32 %v2827, %v2843
        %v2846 = vor.u32 %v2844, %v2845
        %v2847 = vsub.s32 4294967266, %v2842
        %v2848 = vadd.s32 %v2847, 127
        %v2849 = vshll.u32 %v2848, 23
        %v2850 = vor.u32 4788187, %v2849
        %v2851 = vand.u32 2147483647, %v2850
        %v2853 = vcvt.s32.f32 %v2846
        %v2854 = vmul.f32 %v2853, %v2851
        %v2855 = vxor.u32 %v2854, 2147483648
        %v2856 = vsel %vm2773, %v2855, %v2854
        %v2857 = vsub.s32 4, %v2833
        %v2858 = vsel %vm2773, %v2857, %v2833
        %v2859 = vsel %vm2772, %v2561, %v2856
        %v2860 = vsel %vm2772, 0, %v2858
        %v2861 = vcosq.f32.pop %v2859
        %v2862 = vsinq.f32.pop %v2859
        %vm2863 = vweird.f32 %v2561
        %v2864 = vadd.s32 %v2860, 3
        %v2865 = vand.u32 %v2864, 3
        %vm2866 = vcmp.lt.s32.totalorder %v2865, 2
        %vm2867 = vcmp.eq.s32.totalorder %v2865, 0
        %v2868 = vxor.u32 %v2862, 2147483648
        %v2869 = vsel %vm2867, %v2861, %v2868
        %vm2870 = vcmp.eq.s32.totalorder %v2865, 2
        %v2871 = vxor.u32 %v2861, 2147483648
        %v2872 = vsel %vm2870, %v2871, %v2862
        %v2873 = vsel %vm2866, %v2869, %v2872
        %v2874 = vsel %vm2863, nan, %v2873
        %v2875 = vand.u32 2147483647, %v2562
        %vm2876 = vcmp.le.f32.partialorder %v2875, 0.7853982
        %vm2877 = vcmp.lt.s32.totalorder %v2562, 0
        %v2878 = vand.u32 %v2562, 2139095040
        %v2879 = vshrl.u32 %v2878, 23
        %v2880 = vsub.s32 %v2879, 127
        %v2881 = vand.u32 2147483647, %v2562
        %v2882 = vand.u32 %v2881, 8388607
        %v2883 = vor.u32 %v2882, 8388608
        %v2884 = vsub.s32 0, %v2883
        %v2885 = vadd.s32 %v2880, 1
        %vm2886 = vcmp.gt.s32.totalorder %v2885, 0
        %v2887 = vsel %vm2886, %v2885, 0
        %v2888 = vshrl.u32 %v2887, 5
        %v2889 = vand.u32 %v2887, 31
        %v2890 = vsub.s32 32, %v2889
        %v2891 = vshrl.u32 683565275, %v2890
        %v2892 = vshll.u32 683565275, %v2889
        %v2893 = vshrl.u32 2475754826, %v2890
        %v2894 = vor.u32 %v2892, %v2893
        %v2895 = vshll.u32 2475754826, %v2889
        %v2896 = vshrl.u32 2131351028, %v2890
        %v2897 = vor.u32 %v2895, %v2896
        %v2898 = vshll.u32 2131351028, %v2889
        %v2899 = vshrl.u32 2102212464, %v2890
        %v2900 = vor.u32 %v2898, %v2899
        %v2901 = vshll.u32 2102212464, %v2889
        %v2902 = vshrl.u32 920167782, %v2890
        %v2903 = vor.u32 %v2901, %v2902
        %v2904 = vshll.u32 920167782, %v2889
        %v2905 = vshrl.u32 1326507024, %v2890
        %v2906 = vor.u32 %v2904, %v2905
        %vm2907 = vcmp.lt.s32.totalorder %v2888, 1
        %vm2908 = vcmp.lt.s32.totalorder %v2888, 2
        %vm2909 = vcmp.lt.s32.totalorder %v2888, 3
        %vm2910 = vcmp.lt.s32.totalorder %v2888, 4
        %v2911 = vsel %vm2907, %v2891, %v2894
        %v2912 = vsel %vm2910, %v2900, 2102212464
        %v2913 = vsel %vm2909, %v2897, %v2912
        %v2914 = vsel %vm2908, %v2911, %v2913
        %v2915 = vsel %vm2907, %v2894, %v2897
        %v2916 = vsel %vm2910, %v2903, 920167782
        %v2917 = vsel %vm2909, %v2900, %v2916
        %v2918 = vsel %vm2908, %v2915, %v2917
        %v2919 = vsel %vm2907, %v2897, %v2900
        %v2920 = vsel %vm2910, %v2906, 1326507024
        %v2921 = vsel %vm2909, %v2903, %v2920
        %v2922 = vsel %vm2908, %v2919, %v2921
        %v2923 = vshll.u32 %v2883, 8
        %v2924 = vmul.u32.u64.compose %v2923, %v2922
        %v2925 = vextract.low.u32 %v2924
        %v2926 = vextract.high.u32 %v2924
        %v2927 = vmul.u32.u64.compose %v2923, %v2918
        %v2928 = vextract.low.u32 %v2927
        %v2929 = vextract.high.u32 %v2927
        %v2930 = vmul.u32 %v2923, %v2914
        %v2931 = vadd.s32 %v2926, %v2928
        %vm2932 = vc.u32 %v2926, %v2928
        %v2933 = vadd.s32 %v2929, 1
        %v2934 = vsel %vm2932, %v2933, %v2929
        %v2935 = vadd.s32 %v2930, %v2934
        %v2936 = vadd.s32 %v2935, 536870912
        %v2937 = vshrl.u32 %v2936, 30
        %v2938 = vshll.u32 %v2937, 30
        %v2939 = vsub.s32 %v2935, %v2938
        %vm2940 = vcmp.lt.s32.totalorder %v2939, 0
        %v2941 = vsub.s32 0, %v2939
        %v2942 = vsel %vm2940, %v2941, %v2939
        %v2943 = vclz %v2942
        %v2944 = vsub.s32 %v2943, 2
        %vm2945 = vcmp.gt.s32.totalorder 0, %v2944
        %v2946 = vsel %vm2945, 0, %v2944
        %v2947 = vsub.s32 32, %v2946
        %v2948 = vshll.u32 %v2939, %v2946
        %v2949 = vshrl.u32 %v2931, %v2947
        %v2950 = vor.u32 %v2948, %v2949
        %v2951 = vsub.s32 4294967266, %v2946
        %v2952 = vadd.s32 %v2951, 127
        %v2953 = vshll.u32 %v2952, 23
        %v2954 = vor.u32 4788187, %v2953
        %v2955 = vand.u32 2147483647, %v2954
        %v2957 = vcvt.s32.f32 %v2950
        %v2958 = vmul.f32 %v2957, %v2955
        %v2959 = vxor.u32 %v2958, 2147483648
        %v2960 = vsel %vm2877, %v2959, %v2958
        %v2961 = vsub.s32 4, %v2937
        %v2962 = vsel %vm2877, %v2961, %v2937
        %v2963 = vsel %vm2876, %v2562, %v2960
        %v2964 = vsel %vm2876, 0, %v2962
        %v2965 = vcosq.f32.pop %v2963
        %v2966 = vsinq.f32.pop %v2963
        %vm2967 = vweird.f32 %v2562
        %v2968 = vadd.s32 %v2964, 3
        %v2969 = vand.u32 %v2968, 3
        %vm2970 = vcmp.lt.s32.totalorder %v2969, 2
        %vm2971 = vcmp.eq.s32.totalorder %v2969, 0
        %v2972 = vxor.u32 %v2966, 2147483648
        %v2973 = vsel %vm2971, %v2965, %v2972
        %vm2974 = vcmp.eq.s32.totalorder %v2969, 2
        %v2975 = vxor.u32 %v2965, 2147483648
        %v2976 = vsel %vm2974, %v2975, %v2966
        %v2977 = vsel %vm2970, %v2973, %v2976
        %v2978 = vsel %vm2967, nan, %v2977
        %v2979 = vmul.f32 %v2553, %v2874
        %v2980 = vmul.f32 %v2560, %v2978
        %v2981 = vmul.f32 %v1310, %v2489
        %v2982 = vmul.f32 %v1315, %v2490
        %v2983 = vmul.f32 %v1322, %v2769
        %v2984 = vmul.f32 %v1327, %v2770
        %v2985 = vadd.f32 %v2981, %v2983
        %v2986 = vadd.f32 %v2982, %v2984
        %s2987 = scalar_lea.vmem %s296, 96 [#allocation8]
        %2988 = vst.msk [vmem:[%s2987] sm:$0xff] %vm1333, %v2985
        %2989 = vst.msk [vmem:[%s2987 + $0x8] sm:$0xff] %vm1333, %v2986
        %v2990 = vmul.f32 %v2473, %v668
        %v2991 = vmul.f32 %v2474, %v771
        %v2992 = vmul.f32 %v2479, %v461
        %v2993 = vmul.f32 %v2480, %v565
        %v2994 = vadd.f32 %v2990, %v2992
        %v2995 = vadd.f32 %v2991, %v2993
        %v2996 = vmul.f32 %v2479, %v668
        %v2997 = vmul.f32 %v2480, %v771
        %v2998 = vmul.f32 %v2473, %v461
        %v2999 = vmul.f32 %v2474, %v565
        %v3000 = vsub.f32 %v2996, %v2998
        %v3001 = vsub.f32 %v2997, %v2999
        %s3002 = sld [smem:[#allocation3 + $0x7]]
        %v3003 = vstv %s3002
        %v3004 = vmul.f32 %v2994, %v3003
        %v3005 = vmul.f32 %v2995, %v3003
        %s3006 = sld [smem:[#allocation6 + $0x7]]
        %v3007 = vstv %s3006
        %v3008 = vmul.f32 %v3000, %v3007
        %v3009 = vmul.f32 %v3001, %v3007
        %v3010 = vadd.f32 %v3004, %v3008
        %v3011 = vadd.f32 %v3005, %v3009
        %v3012 = vmul.f32 %v1310, %v3010
        %v3013 = vmul.f32 %v1315, %v3011
        %v3014 = vmul.f32 %v1322, %v2979
        %v3015 = vmul.f32 %v1327, %v2980
        %v3016 = vadd.f32 %v3012, %v3014
        %v3017 = vadd.f32 %v3013, %v3015
        %s3018 = scalar_lea.vmem %s296, 112 [#allocation8]
        %3019 = vst.msk [vmem:[%s3018] sm:$0xff] %vm1333, %v3016
        %3020 = vst.msk [vmem:[%s3018 + $0x8] sm:$0xff] %vm1333, %v3017
        %v3021 = vmul.f32 %v2994, %v668
        %v3022 = vmul.f32 %v2995, %v771
        %v3023 = vmul.f32 %v3000, %v461
        %v3024 = vmul.f32 %v3001, %v565
        %v3025 = vadd.f32 %v3021, %v3023
        %v3026 = vadd.f32 %v3022, %v3024
        %v3027 = vmul.f32 %v3000, %v668
        %v3028 = vmul.f32 %v3001, %v771
        %v3029 = vmul.f32 %v2994, %v461
        %v3030 = vmul.f32 %v2995, %v565
        %v3031 = vsub.f32 %v3027, %v3029
        %v3032 = vsub.f32 %v3028, %v3030
        %s3033 = sld [smem:[#allocation3 + $0x8]]
        %v3034 = vstv %s3033
        %v3035 = vmul.f32 %v3025, %v3034
        %v3036 = vmul.f32 %v3026, %v3034
        %s3037 = sld [smem:[#allocation6 + $0x8]]
        %v3038 = vstv %s3037
        %v3039 = vmul.f32 %v3031, %v3038
        %v3040 = vmul.f32 %v3032, %v3038
        %v3041 = vadd.f32 %v3035, %v3039
        %v3042 = vadd.f32 %v3036, %v3040
        %v3043 = vadd.s32 %v807, 8
        %v3044 = vadd.s32 %v808, 8
        %v3045 = vadd.s32 %v807, 9
        %v3046 = vadd.s32 %v808, 9
        %v3047 = vshrl.u32 %v3043, 16
        %v3048 = vshrl.u32 %v3044, 16
        %v3049 = vxor.u32 %v3043, %v3047
        %v3050 = vxor.u32 %v3044, %v3048
        %v3051 = vmul.u32 %v3049, 2146121005
        %v3052 = vmul.u32 %v3050, 2146121005
        %v3053 = vshrl.u32 %v3051, 15
        %v3054 = vshrl.u32 %v3052, 15
        %v3055 = vxor.u32 %v3051, %v3053
        %v3056 = vxor.u32 %v3052, %v3054
        %v3057 = vmul.u32 %v3055, 2221713035
        %v3058 = vmul.u32 %v3056, 2221713035
        %v3059 = vshrl.u32 %v3057, 16
        %v3060 = vshrl.u32 %v3058, 16
        %v3061 = vxor.u32 %v3057, %v3059
        %v3062 = vxor.u32 %v3058, %v3060
        %v3063 = vand.u32 %v3061, 8388607
        %v3064 = vand.u32 %v3062, 8388607
        %v3065 = vcvt.s32.f32 %v3063
        %v3066 = vcvt.s32.f32 %v3064
        %v3067 = vadd.f32 %v3065, 1.0
        %v3068 = vadd.f32 %v3066, 1.0
        %v3069 = vmul.f32 %v3067, 1.1920929e-07
        %v3070 = vmul.f32 %v3068, 1.1920929e-07
        %v3071 = vshrl.u32 %v3045, 16
        %v3072 = vshrl.u32 %v3046, 16
        %v3073 = vxor.u32 %v3045, %v3071
        %v3074 = vxor.u32 %v3046, %v3072
        %v3075 = vmul.u32 %v3073, 2146121005
        %v3076 = vmul.u32 %v3074, 2146121005
        %v3077 = vshrl.u32 %v3075, 15
        %v3078 = vshrl.u32 %v3076, 15
        %v3079 = vxor.u32 %v3075, %v3077
        %v3080 = vxor.u32 %v3076, %v3078
        %v3081 = vmul.u32 %v3079, 2221713035
        %v3082 = vmul.u32 %v3080, 2221713035
        %v3083 = vshrl.u32 %v3081, 16
        %v3084 = vshrl.u32 %v3082, 16
        %v3085 = vxor.u32 %v3081, %v3083
        %v3086 = vxor.u32 %v3082, %v3084
        %v3087 = vand.u32 %v3085, 8388607
        %v3088 = vand.u32 %v3086, 8388607
        %v3089 = vcvt.s32.f32 %v3087
        %v3090 = vcvt.s32.f32 %v3088
        %v3091 = vmul.f32 %v3089, 1.1920929e-07
        %v3092 = vmul.f32 %v3090, 1.1920929e-07
        %v3093 = vlog2.pop %v3069
        %v3094 = vmul.f32 %v3093, 0.6931472
        %v3095 = vlog2.pop %v3070
        %v3096 = vmul.f32 %v3095, 0.6931472
        %v3097 = vmul.f32 %v3094, -2.0
        %v3098 = vmul.f32 %v3096, -2.0
        %v3099 = vrsqrt.pop %v3097
        %v3100 = vmul.f32 %v3097, %v3099
        %vm3101 = vcmp.eq.f32.partialorder %v3097, inf
        %v3102 = vsel %vm3101, %v3097, %v3100
        %vm3103 = vcmp.eq.f32.partialorder %v3097, 0.0
        %v3104 = vand.u32 %v3097, 2147483648
        %v3105 = vsel %vm3103, %v3104, %v3102
        %v3106 = vrsqrt.pop %v3098
        %v3107 = vmul.f32 %v3098, %v3106
        %vm3108 = vcmp.eq.f32.partialorder %v3098, inf
        %v3109 = vsel %vm3108, %v3098, %v3107
        %vm3110 = vcmp.eq.f32.partialorder %v3098, 0.0
        %v3111 = vand.u32 %v3098, 2147483648
        %v3112 = vsel %vm3110, %v3111, %v3109
        %v3113 = vmul.f32 %v3091, 6.2831855
        %v3114 = vmul.f32 %v3092, 6.2831855
        %v3115 = vand.u32 2147483647, %v3113
        %vm3116 = vcmp.le.f32.partialorder %v3115, 0.7853982
        %vm3117 = vcmp.lt.s32.totalorder %v3113, 0
        %v3118 = vand.u32 %v3113, 2139095040
        %v3119 = vshrl.u32 %v3118, 23
        %v3120 = vsub.s32 %v3119, 127
        %v3121 = vand.u32 2147483647, %v3113
        %v3122 = vand.u32 %v3121, 8388607
        %v3123 = vor.u32 %v3122, 8388608
        %v3124 = vsub.s32 0, %v3123
        %v3125 = vadd.s32 %v3120, 1
        %vm3126 = vcmp.gt.s32.totalorder %v3125, 0
        %v3127 = vsel %vm3126, %v3125, 0
        %v3128 = vshrl.u32 %v3127, 5
        %v3129 = vand.u32 %v3127, 31
        %v3130 = vsub.s32 32, %v3129
        %v3131 = vshrl.u32 683565275, %v3130
        %v3132 = vshll.u32 683565275, %v3129
        %v3133 = vshrl.u32 2475754826, %v3130
        %v3134 = vor.u32 %v3132, %v3133
        %v3135 = vshll.u32 2475754826, %v3129
        %v3136 = vshrl.u32 2131351028, %v3130
        %v3137 = vor.u32 %v3135, %v3136
        %v3138 = vshll.u32 2131351028, %v3129
        %v3139 = vshrl.u32 2102212464, %v3130
        %v3140 = vor.u32 %v3138, %v3139
        %v3141 = vshll.u32 2102212464, %v3129
        %v3142 = vshrl.u32 920167782, %v3130
        %v3143 = vor.u32 %v3141, %v3142
        %v3144 = vshll.u32 920167782, %v3129
        %v3145 = vshrl.u32 1326507024, %v3130
        %v3146 = vor.u32 %v3144, %v3145
        %vm3147 = vcmp.lt.s32.totalorder %v3128, 1
        %vm3148 = vcmp.lt.s32.totalorder %v3128, 2
        %vm3149 = vcmp.lt.s32.totalorder %v3128, 3
        %vm3150 = vcmp.lt.s32.totalorder %v3128, 4
        %v3151 = vsel %vm3147, %v3131, %v3134
        %v3152 = vsel %vm3150, %v3140, 2102212464
        %v3153 = vsel %vm3149, %v3137, %v3152
        %v3154 = vsel %vm3148, %v3151, %v3153
        %v3155 = vsel %vm3147, %v3134, %v3137
        %v3156 = vsel %vm3150, %v3143, 920167782
        %v3157 = vsel %vm3149, %v3140, %v3156
        %v3158 = vsel %vm3148, %v3155, %v3157
        %v3159 = vsel %vm3147, %v3137, %v3140
        %v3160 = vsel %vm3150, %v3146, 1326507024
        %v3161 = vsel %vm3149, %v3143, %v3160
        %v3162 = vsel %vm3148, %v3159, %v3161
        %v3163 = vshll.u32 %v3123, 8
        %v3164 = vmul.u32.u64.compose %v3163, %v3162
        %v3165 = vextract.low.u32 %v3164
        %v3166 = vextract.high.u32 %v3164
        %v3167 = vmul.u32.u64.compose %v3163, %v3158
        %v3168 = vextract.low.u32 %v3167
        %v3169 = vextract.high.u32 %v3167
        %v3170 = vmul.u32 %v3163, %v3154
        %v3171 = vadd.s32 %v3166, %v3168
        %vm3172 = vc.u32 %v3166, %v3168
        %v3173 = vadd.s32 %v3169, 1
        %v3174 = vsel %vm3172, %v3173, %v3169
        %v3175 = vadd.s32 %v3170, %v3174
        %v3176 = vadd.s32 %v3175, 536870912
        %v3177 = vshrl.u32 %v3176, 30
        %v3178 = vshll.u32 %v3177, 30
        %v3179 = vsub.s32 %v3175, %v3178
        %vm3180 = vcmp.lt.s32.totalorder %v3179, 0
        %v3181 = vsub.s32 0, %v3179
        %v3182 = vsel %vm3180, %v3181, %v3179
        %v3183 = vclz %v3182
        %v3184 = vsub.s32 %v3183, 2
        %vm3185 = vcmp.gt.s32.totalorder 0, %v3184
        %v3186 = vsel %vm3185, 0, %v3184
        %v3187 = vsub.s32 32, %v3186
        %v3188 = vshll.u32 %v3179, %v3186
        %v3189 = vshrl.u32 %v3171, %v3187
        %v3190 = vor.u32 %v3188, %v3189
        %v3191 = vsub.s32 4294967266, %v3186
        %v3192 = vadd.s32 %v3191, 127
        %v3193 = vshll.u32 %v3192, 23
        %v3194 = vor.u32 4788187, %v3193
        %v3195 = vand.u32 2147483647, %v3194
        %v3197 = vcvt.s32.f32 %v3190
        %v3198 = vmul.f32 %v3197, %v3195
        %v3199 = vxor.u32 %v3198, 2147483648
        %v3200 = vsel %vm3117, %v3199, %v3198
        %v3201 = vsub.s32 4, %v3177
        %v3202 = vsel %vm3117, %v3201, %v3177
        %v3203 = vsel %vm3116, %v3113, %v3200
        %v3204 = vsel %vm3116, 0, %v3202
        %v3205 = vcosq.f32.pop %v3203
        %v3206 = vsinq.f32.pop %v3203
        %vm3207 = vweird.f32 %v3113
        %v3208 = vand.u32 %v3204, 3
        %vm3209 = vcmp.lt.s32.totalorder %v3208, 2
        %vm3210 = vcmp.eq.s32.totalorder %v3208, 0
        %v3211 = vxor.u32 %v3206, 2147483648
        %v3212 = vsel %vm3210, %v3205, %v3211
        %vm3213 = vcmp.eq.s32.totalorder %v3208, 2
        %v3214 = vxor.u32 %v3205, 2147483648
        %v3215 = vsel %vm3213, %v3214, %v3206
        %v3216 = vsel %vm3209, %v3212, %v3215
        %v3217 = vsel %vm3207, nan, %v3216
        %v3218 = vand.u32 2147483647, %v3114
        %vm3219 = vcmp.le.f32.partialorder %v3218, 0.7853982
        %vm3220 = vcmp.lt.s32.totalorder %v3114, 0
        %v3221 = vand.u32 %v3114, 2139095040
        %v3222 = vshrl.u32 %v3221, 23
        %v3223 = vsub.s32 %v3222, 127
        %v3224 = vand.u32 2147483647, %v3114
        %v3225 = vand.u32 %v3224, 8388607
        %v3226 = vor.u32 %v3225, 8388608
        %v3227 = vsub.s32 0, %v3226
        %v3228 = vadd.s32 %v3223, 1
        %vm3229 = vcmp.gt.s32.totalorder %v3228, 0
        %v3230 = vsel %vm3229, %v3228, 0
        %v3231 = vshrl.u32 %v3230, 5
        %v3232 = vand.u32 %v3230, 31
        %v3233 = vsub.s32 32, %v3232
        %v3234 = vshrl.u32 683565275, %v3233
        %v3235 = vshll.u32 683565275, %v3232
        %v3236 = vshrl.u32 2475754826, %v3233
        %v3237 = vor.u32 %v3235, %v3236
        %v3238 = vshll.u32 2475754826, %v3232
        %v3239 = vshrl.u32 2131351028, %v3233
        %v3240 = vor.u32 %v3238, %v3239
        %v3241 = vshll.u32 2131351028, %v3232
        %v3242 = vshrl.u32 2102212464, %v3233
        %v3243 = vor.u32 %v3241, %v3242
        %v3244 = vshll.u32 2102212464, %v3232
        %v3245 = vshrl.u32 920167782, %v3233
        %v3246 = vor.u32 %v3244, %v3245
        %v3247 = vshll.u32 920167782, %v3232
        %v3248 = vshrl.u32 1326507024, %v3233
        %v3249 = vor.u32 %v3247, %v3248
        %vm3250 = vcmp.lt.s32.totalorder %v3231, 1
        %vm3251 = vcmp.lt.s32.totalorder %v3231, 2
        %vm3252 = vcmp.lt.s32.totalorder %v3231, 3
        %vm3253 = vcmp.lt.s32.totalorder %v3231, 4
        %v3254 = vsel %vm3250, %v3234, %v3237
        %v3255 = vsel %vm3253, %v3243, 2102212464
        %v3256 = vsel %vm3252, %v3240, %v3255
        %v3257 = vsel %vm3251, %v3254, %v3256
        %v3258 = vsel %vm3250, %v3237, %v3240
        %v3259 = vsel %vm3253, %v3246, 920167782
        %v3260 = vsel %vm3252, %v3243, %v3259
        %v3261 = vsel %vm3251, %v3258, %v3260
        %v3262 = vsel %vm3250, %v3240, %v3243
        %v3263 = vsel %vm3253, %v3249, 1326507024
        %v3264 = vsel %vm3252, %v3246, %v3263
        %v3265 = vsel %vm3251, %v3262, %v3264
        %v3266 = vshll.u32 %v3226, 8
        %v3267 = vmul.u32.u64.compose %v3266, %v3265
        %v3268 = vextract.low.u32 %v3267
        %v3269 = vextract.high.u32 %v3267
        %v3270 = vmul.u32.u64.compose %v3266, %v3261
        %v3271 = vextract.low.u32 %v3270
        %v3272 = vextract.high.u32 %v3270
        %v3273 = vmul.u32 %v3266, %v3257
        %v3274 = vadd.s32 %v3269, %v3271
        %vm3275 = vc.u32 %v3269, %v3271
        %v3276 = vadd.s32 %v3272, 1
        %v3277 = vsel %vm3275, %v3276, %v3272
        %v3278 = vadd.s32 %v3273, %v3277
        %v3279 = vadd.s32 %v3278, 536870912
        %v3280 = vshrl.u32 %v3279, 30
        %v3281 = vshll.u32 %v3280, 30
        %v3282 = vsub.s32 %v3278, %v3281
        %vm3283 = vcmp.lt.s32.totalorder %v3282, 0
        %v3284 = vsub.s32 0, %v3282
        %v3285 = vsel %vm3283, %v3284, %v3282
        %v3286 = vclz %v3285
        %v3287 = vsub.s32 %v3286, 2
        %vm3288 = vcmp.gt.s32.totalorder 0, %v3287
        %v3289 = vsel %vm3288, 0, %v3287
        %v3290 = vsub.s32 32, %v3289
        %v3291 = vshll.u32 %v3282, %v3289
        %v3292 = vshrl.u32 %v3274, %v3290
        %v3293 = vor.u32 %v3291, %v3292
        %v3294 = vsub.s32 4294967266, %v3289
        %v3295 = vadd.s32 %v3294, 127
        %v3296 = vshll.u32 %v3295, 23
        %v3297 = vor.u32 4788187, %v3296
        %v3298 = vand.u32 2147483647, %v3297
        %v3300 = vcvt.s32.f32 %v3293
        %v3301 = vmul.f32 %v3300, %v3298
        %v3302 = vxor.u32 %v3301, 2147483648
        %v3303 = vsel %vm3220, %v3302, %v3301
        %v3304 = vsub.s32 4, %v3280
        %v3305 = vsel %vm3220, %v3304, %v3280
        %v3306 = vsel %vm3219, %v3114, %v3303
        %v3307 = vsel %vm3219, 0, %v3305
        %v3308 = vcosq.f32.pop %v3306
        %v3309 = vsinq.f32.pop %v3306
        %vm3310 = vweird.f32 %v3114
        %v3311 = vand.u32 %v3307, 3
        %vm3312 = vcmp.lt.s32.totalorder %v3311, 2
        %vm3313 = vcmp.eq.s32.totalorder %v3311, 0
        %v3314 = vxor.u32 %v3309, 2147483648
        %v3315 = vsel %vm3313, %v3308, %v3314
        %vm3316 = vcmp.eq.s32.totalorder %v3311, 2
        %v3317 = vxor.u32 %v3308, 2147483648
        %v3318 = vsel %vm3316, %v3317, %v3309
        %v3319 = vsel %vm3312, %v3315, %v3318
        %v3320 = vsel %vm3310, nan, %v3319
        %v3321 = vmul.f32 %v3105, %v3217
        %v3322 = vmul.f32 %v3112, %v3320
        %v3323 = vmul.f32 %v1310, %v3041
        %v3324 = vmul.f32 %v1315, %v3042
        %v3325 = vmul.f32 %v1322, %v3321
        %v3326 = vmul.f32 %v1327, %v3322
        %v3327 = vadd.f32 %v3323, %v3325
        %v3328 = vadd.f32 %v3324, %v3326
        %s3329 = scalar_lea.vmem %s296, 128 [#allocation8]
        %3330 = vst.msk [vmem:[%s3329] sm:$0xff] %vm1333, %v3327
        %3331 = vst.msk [vmem:[%s3329 + $0x8] sm:$0xff] %vm1333, %v3328
        %s3332 = sand.u32 %s163, 1
        %s3333 = scalar_lea.sflag [#allocation4], %s3332
        %s3334 = sand.u32 %s163, 1
        %s3335 = smul.addr %s3334, 144
        %s3336 = scalar_lea.vmem [#allocation8], %s3335
        // Predicated region
        $region49: #{tpu_custom_call.1} parent=39 // pred_check
          %p3337 = pneg %p173
        $region50: #{tpu_custom_call.1} parent=39 // pred_check_branch
          %3339 = sbr.rel (%p3337) target = $region52
        $region51: #{tpu_custom_call.1} parent=39 // pred_region
          %s3340 = smul.u32 2, %s27
          %s3342 = ssub.s32 2304, 2304
          %3343 = vsyncadd %s3333, %s3342
          %s3344 = smul.addr %s26, 18
          %s3345 = sadd.s32 %s3340, %s3344
          %s3346 = smul.addr %s3345, 128
          %s3347 = scalar_lea.hbm %s5, %s3346
          %s3348 = sshll.u32 %s3336, 4
          %s3349 = int_to_ptr.vmem [resolvable:$true] %s3348
          %3354 = dma.vmem_to_hbm [thread:$0]  %s3349, 2304, %s3347, %s3333, 128, 128, 8
        $region52: #{tpu_custom_call.1} parent=39 // pred_fallthru
          _
      $region40: #{tpu_custom_call.1} parent=5 // pred_fallthru
        _
      %p3355 = scmp.le.s32.totalorder 2, %s17
      // Predicated region
      $region53: #{tpu_custom_call.1} parent=5 // pred_check
        %p3356 = pneg %p3355
      $region54: #{tpu_custom_call.1} parent=5 // pred_check_branch
        %3358 = sbr.rel (%p3356) target = $region56
      $region55: #{tpu_custom_call.1} parent=5 // pred_region
        %s3359 = ssub.s32 %s17, 2
        // Predicated region
        $region57: #{tpu_custom_call.1} parent=55 // pred_check
          %p3360 = pneg %p179
        $region58: #{tpu_custom_call.1} parent=55 // pred_check_branch
          %3362 = sbr.rel (%p3360) target = $region60
        $region59: #{tpu_custom_call.1} parent=55 // pred_region
          %s3363 = sand.u32 %s164, 1
          %s3364 = scalar_lea.sflag [#allocation4], %s3363
          %s3365 = sand.u32 %s164, 1
          %s3366 = smul.addr %s3365, 144
          %s3367 = scalar_lea.vmem [#allocation8], %s3366
          %3368 = dma.done %s3364, 2304
        $region60: #{tpu_custom_call.1} parent=55 // pred_fallthru
          _
      $region56: #{tpu_custom_call.1} parent=5 // pred_fallthru
        _
    $region6: #{tpu_custom_call.1} parent=1 // loop_footer
      %s21 = sadd.s32 1, %s17
    $region7: #{tpu_custom_call.1} parent=1 // loop_footer_branch
      %16 = sbr.rel target = $region3
    $region8: #{tpu_custom_call.1} parent=1 // loop_exit
      _
    %3369 = vsyncpa [#allocation4], 1
    %s3370 = scalar_lea.sflag [#allocation4], 1
    %3371 = vsyncpa %s3370, 1
    %3372 = vsyncpa [#allocation5], 1
    %s3373 = scalar_lea.sflag [#allocation5], 1
    %3374 = vsyncpa %s3373, 1
    %3375 = vsyncpa [#allocation7], 1

</llo_original>
